<compile_context>
chip_gen: v7x
topology: tpu7x:2x2x1
jax: 0.10.0
libtpu: 0.0.40
codegen_flags: <defaults>
</compile_context>

<pallas_src>
import jax
import jax.numpy as jnp
from jax import lax
from jax.experimental import pallas as pl
from jax.experimental.pallas import tpu as pltpu

MAX_TM, MAX_TN, MAX_TK = 128, 256, 512
VMEM_LIMIT = 32 * 1024 * 1024   # safe on v5e / v6e / v7x scoped-VMEM budgets


def _round_up(x, m):
    return ((x + m - 1) // m) * m


def _pad2d(x, m0, m1):
    p0 = (-x.shape[0]) % m0
    p1 = (-x.shape[1]) % m1
    if p0 or p1:
        x = jnp.pad(x, ((0, p0), (0, p1)))
    return x


# ------------- fused matmul kernel: maybe_relu((A@B)*scale + shift (+res)) -------------
def _make_matmul_kernel(apply_relu: bool, has_residual: bool):
    def kernel(*refs):
        if has_residual:
            a_ref, b_ref, scale_ref, shift_ref, res_ref, o_ref, acc_ref = refs
        else:
            a_ref, b_ref, scale_ref, shift_ref, o_ref, acc_ref = refs
        k = pl.program_id(2)

        @pl.when(k == 0)
        def _():
            acc_ref[...] = jnp.zeros_like(acc_ref)

        acc_ref[...] += jnp.dot(a_ref[...], b_ref[...],
                                preferred_element_type=jnp.float32)

        @pl.when(k == pl.num_programs(2) - 1)
        def _():
            out = acc_ref[...] * scale_ref[...] + shift_ref[...]   # f32 epilogue
            if has_residual:
                out = out + res_ref[...].astype(jnp.float32)
            if apply_relu:
                out = jnp.maximum(out, 0.0)
            o_ref[...] = out.astype(o_ref.dtype)

    return kernel


def matmul_fused(a, b, scale, shift, *, relu=False, residual=None,
                 out_dtype=jnp.bfloat16):
    """maybe_relu((a[M,K] @ b[K,N]) * scale[N] + shift[N] (+ residual[M,N]))."""
    M, K = a.shape
    K2, N = b.shape
    assert K == K2
    # adaptive tiles: right-size M, enlarge K/N tiles (fewer tiny grid steps)
    tm = min(MAX_TM, _round_up(M, 8))
    tn = min(MAX_TN, _round_up(N, 128))
    tk = min(MAX_TK, _round_up(K, 128))

    a_p = _pad2d(a.astype(jnp.bfloat16), tm, tk)          # bf16 MXU operands
    b_p = _pad2d(b.astype(jnp.bfloat16), tk, tn)
    scale_p = _pad2d(scale.reshape(1, N).astype(jnp.float32), 1, tn)
    shift_p = _pad2d(shift.reshape(1, N).astype(jnp.float32), 1, tn)
    Mp, Kp = a_p.shape
    Np = b_p.shape[1]

    has_res = residual is not None
    inputs = [a_p, b_p, scale_p, shift_p]
    in_specs = [
        pl.BlockSpec((tm, tk), lambda i, j, k: (i, k)),
        pl.BlockSpec((tk, tn), lambda i, j, k: (k, j)),
        pl.BlockSpec((1, tn), lambda i, j, k: (0, j)),
        pl.BlockSpec((1, tn), lambda i, j, k: (0, j)),
    ]
    bytes_accessed = (a_p.size * 2 + b_p.size * 2 + scale_p.size * 8
                      + Mp * Np * jnp.dtype(out_dtype).itemsize)
    if has_res:
        r_p = _pad2d(residual.astype(jnp.bfloat16), tm, tn)
        inputs.append(r_p)
        in_specs.append(pl.BlockSpec((tm, tn), lambda i, j, k: (i, j)))
        bytes_accessed += r_p.size * 2

    out = pl.pallas_call(
        _make_matmul_kernel(relu, has_res),
        out_shape=jax.ShapeDtypeStruct((Mp, Np), out_dtype),
        grid_spec=pltpu.PrefetchScalarGridSpec(
            num_scalar_prefetch=0,
            grid=(Mp // tm, Np // tn, Kp // tk),
            in_specs=in_specs,
            out_specs=pl.BlockSpec((tm, tn), lambda i, j, k: (i, j)),
            scratch_shapes=[pltpu.VMEM((tm, tn), jnp.float32)],
        ),
        compiler_params=pltpu.CompilerParams(
            dimension_semantics=("parallel", "parallel", "arbitrary"),
            vmem_limit_bytes=VMEM_LIMIT),
        cost_estimate=pl.CostEstimate(flops=2 * M * N * K, transcendentals=0,
                                      bytes_accessed=int(bytes_accessed)),
    )(*inputs)
    return out[:M, :N]


# ------------- 3x3 conv + BN (+ReLU): taps gathered in-kernel, no HBM im2col ----------
def _make_conv3x3_kernel(OH, OW, stride, apply_relu):
    def kernel(xp_ref, w_ref, scale_ref, shift_ref, o_ref):
        cin = xp_ref.shape[3]
        cout = o_ref.shape[2]
        x_full = xp_ref[...][0]                 # (Hp, Wp, Cin) bf16, VMEM resident
        w_all = w_ref[...]                      # (9, Cin, Cout) bf16
        rows = (OH - 1) * stride + 1
        cols = (OW - 1) * stride + 1
        acc = jnp.zeros((OH * OW, cout), jnp.float32)
        for kh in range(3):
            for kw in range(3):
                win = x_full[kh:kh + rows, kw:kw + cols, :]
                if stride > 1:
                    win = lax.slice(win, (0, 0, 0), win.shape, (stride, stride, 1))
                a = win.reshape(OH * OW, cin)
                acc = acc + jnp.dot(a, w_all[kh * 3 + kw],
                                    preferred_element_type=jnp.float32)
        out = acc * scale_ref[...] + shift_ref[...]   # f32 epilogue
        if apply_relu:
            out = jnp.maximum(out, 0.0)
        o_ref[...] = out.reshape(o_ref.shape).astype(o_ref.dtype)

    return kernel


def conv3x3_bn(x_nhwc, w, scale, shift, *, stride=1, relu=True):
    """3x3 conv (padding=1, no bias) + folded BN (+ReLU). w: (Cout, Cin, 3, 3)."""
    N, H, W, Cin = x_nhwc.shape
    Cout, Cin_w, KH, KW = w.shape
    assert (KH, KW) == (3, 3) and Cin == Cin_w
    OH = (H + 2 - 3) // stride + 1
    OW = (W + 2 - 3) // stride + 1
    xp = jnp.pad(x_nhwc.astype(jnp.bfloat16), ((0, 0), (1, 1), (1, 1), (0, 0)))
    Hp, Wp = H + 2, W + 2
    wt = jnp.transpose(w, (2, 3, 1, 0)).reshape(9, Cin, Cout).astype(jnp.bfloat16)
    scale2 = scale.reshape(1, Cout).astype(jnp.float32)
    shift2 = shift.reshape(1, Cout).astype(jnp.float32)

    out = pl.pallas_call(
        _make_conv3x3_kernel(OH, OW, stride, relu),
        out_shape=jax.ShapeDtypeStruct((N, OH * OW, Cout), jnp.bfloat16),
        grid_spec=pltpu.PrefetchScalarGridSpec(
            num_scalar_prefetch=0,
            grid=(N,),
            in_specs=[
                pl.BlockSpec((1, Hp, Wp, Cin), lambda n: (n, 0, 0, 0)),
                pl.BlockSpec((9, Cin, Cout), lambda n: (0, 0, 0)),
                pl.BlockSpec((1, Cout), lambda n: (0, 0)),
                pl.BlockSpec((1, Cout), lambda n: (0, 0)),
            ],
            out_specs=pl.BlockSpec((1, OH * OW, Cout), lambda n: (n, 0, 0)),
        ),
        compiler_params=pltpu.CompilerParams(
            dimension_semantics=("parallel",),
            vmem_limit_bytes=VMEM_LIMIT),
        cost_estimate=pl.CostEstimate(
            flops=2 * N * OH * OW * 9 * Cin * Cout, transcendentals=0,
            bytes_accessed=int(xp.size * 2 + wt.size * 2 + N * OH * OW * Cout * 2)),
    )(xp, wt, scale2, shift2)
    return out.reshape(N, OH, OW, Cout)


# --------------------------------- Bottleneck block ------------------------------------
def bn_fold(bn, eps=1e-5):
    gamma, beta, mean, var = bn
    scale = gamma / jnp.sqrt(var + eps)
    shift = beta - mean * scale
    return scale, shift


def bottleneck_block(x_nchw, params, *, stride=1):
    """BottleneckBlock forward (eval semantics). x: NCHW f32 -> NCHW f32."""
    x = jnp.transpose(x_nchw, (0, 2, 3, 1)).astype(jnp.bfloat16)   # NHWC bf16
    N, H, W, Cin = x.shape
    Cmid = params["conv1_w"].shape[0]
    Cext = params["conv3_w"].shape[0]

    # conv1 (1x1) + bn1 + relu : plain channel matmul, no spatial gather needed
    s1, b1 = bn_fold(params["bn1"])
    w1 = jnp.transpose(params["conv1_w"].reshape(Cmid, Cin))        # (Cin, Cmid)
    y1 = matmul_fused(x.reshape(N * H * W, Cin), w1, s1, b1, relu=True)

    # conv2 (3x3, stride, pad=1) + bn2 + relu : taps gathered inside the kernel
    s2, b2 = bn_fold(params["bn2"])
    y2 = conv3x3_bn(y1.reshape(N, H, W, Cmid), params["conv2_w"], s2, b2,
                    stride=stride, relu=True)
    _, OH, OW, _ = y2.shape

    # residual branch
    if params["down_w"] is not None:
        sd, bd = bn_fold(params["down_bn"])
        wd = jnp.transpose(params["down_w"].reshape(Cext, Cin))     # (Cin, Cext)
        xd = x[:, ::stride, ::stride, :].reshape(N * OH * OW, Cin)
        res = matmul_fused(xd, wd, sd, bd, relu=False)              # (N*OH*OW, Cext)
    else:
        assert stride == 1 and Cin == Cext
        res = x.reshape(N * OH * OW, Cext)

    # conv3 (1x1) + bn3, residual add + final relu fused into the matmul epilogue
    s3, b3 = bn_fold(params["bn3"])
    w3 = jnp.transpose(params["conv3_w"].reshape(Cext, Cmid))       # (Cmid, Cext)
    out = matmul_fused(y2.reshape(N * OH * OW, Cmid), w3, s3, b3,
                       relu=True, residual=res, out_dtype=jnp.float32)

    out = out.reshape(N, OH, OW, Cext)
    return jnp.transpose(out, (0, 3, 1, 2))                         # back to NCHW


def init_params(key, in_ch, out_ch, *, stride=1, expansion=4):
    ext = out_ch * expansion
    keys = iter(jax.random.split(key, 32))

    def conv_w(cout, cin, kh, kw):
        fan_in = cin * kh * kw
        return (jax.random.normal(next(keys), (cout, cin, kh, kw), jnp.float32)
                * (1.0 / (fan_in ** 0.5)))

    def bn_p(c):
        return (jax.random.uniform(next(keys), (c,), jnp.float32, 0.5, 1.5),  # gamma
                jax.random.normal(next(keys), (c,), jnp.float32) * 0.1,       # beta
                jax.random.normal(next(keys), (c,), jnp.float32) * 0.1,       # run_mean
                jax.random.uniform(next(keys), (c,), jnp.float32, 0.5, 1.5))  # run_var

    p = {"conv1_w": conv_w(out_ch, in_ch, 1, 1), "bn1": bn_p(out_ch),
         "conv2_w": conv_w(out_ch, out_ch, 3, 3), "bn2": bn_p(out_ch),
         "conv3_w": conv_w(ext, out_ch, 1, 1), "bn3": bn_p(ext),
         "down_w": None, "down_bn": None}
    if stride != 1 or in_ch != ext:          # same rule PyTorch ResNet uses
        p["down_w"] = conv_w(ext, in_ch, 1, 1)
        p["down_bn"] = bn_p(ext)
    return p


if __name__ == "__main__":
    in_ch, out_ch, stride = 16, 8, 1          # external channels = 32 -> downsample path
    x = jax.random.normal(jax.random.PRNGKey(0), (2, in_ch, 16, 16), jnp.float32)
    params = init_params(jax.random.PRNGKey(42), in_ch, out_ch, stride=stride)

    fwd = jax.jit(lambda xx, pp: bottleneck_block(xx, pp, stride=stride))
    out = fwd(x, params)
    jax.block_until_ready(out)

    assert out.shape == (2, out_ch * 4, 16, 16) and out.dtype == jnp.float32
    assert bool(jnp.all(out >= 0.0))          # final ReLU
    print("KERNEL_OK")
</pallas_src>

<mosaic_0001>
module attributes {stable_mosaic.version = 11 : i64} {
  func.func @kernel(%arg0: i32, %arg1: i32, %arg2: i32, %arg3: memref<128x128xbf16, #tpu.memory_space<vmem>>, %arg4: memref<128x128xbf16, #tpu.memory_space<vmem>>, %arg5: memref<1x128xf32, #tpu.memory_space<vmem>>, %arg6: memref<1x128xf32, #tpu.memory_space<vmem>>, %arg7: memref<128x128xbf16, #tpu.memory_space<vmem>>, %arg8: memref<128x128xf32, #tpu.memory_space<vmem>>) attributes {dimension_semantics = [#tpu.dimension_semantics<parallel>, #tpu.dimension_semantics<parallel>, #tpu.dimension_semantics<arbitrary>], iteration_bounds = array<i64: 4, 1, 1>, scalar_prefetch = 0 : i64, scratch_operands = 1 : i64, tpu.core_type = #tpu.core_type<tc>, window_params = [{transform_indices = @transform_0, window_bounds = array<i64: 128, 128>}, {transform_indices = @transform_1, window_bounds = array<i64: 128, 128>}, {transform_indices = @transform_2, window_bounds = array<i64: 1, 128>}, {transform_indices = @transform_3, window_bounds = array<i64: 1, 128>}, {transform_indices = @transform_4, window_bounds = array<i64: 128, 128>}]} {
    %c0_i32 = arith.constant 0 : i32
    %0 = arith.cmpi eq, %arg2, %c0_i32 : i32
    %1 = arith.extui %0 : i1 to i32
    %c0_i32_0 = arith.constant 0 : i32
    %2 = arith.cmpi ne, %1, %c0_i32_0 : i32
    scf.if %2 {
      %cst_10 = arith.constant 0.000000e+00 : f32
      %12 = vector.broadcast %cst_10 : f32 to vector<128x128xf32>
      %c0_11 = arith.constant 0 : index
      %c0_12 = arith.constant 0 : index
      %13 = vector.load %arg8[%c0_11, %c0_12] : memref<128x128xf32, #tpu.memory_space<vmem>>, vector<128x128xf32>
      tpu.vector_store %arg8[%c0_11, %c0_12], %12 {strides = array<i32>} : memref<128x128xf32, #tpu.memory_space<vmem>>, vector<128x128xf32>,
    } else {
    }
    %c0 = arith.constant 0 : index
    %c0_1 = arith.constant 0 : index
    %3 = vector.load %arg8[%c0, %c0_1] : memref<128x128xf32, #tpu.memory_space<vmem>>, vector<128x128xf32>
    %c0_2 = arith.constant 0 : index
    %c0_3 = arith.constant 0 : index
    %4 = vector.load %arg3[%c0_2, %c0_3] : memref<128x128xbf16, #tpu.memory_space<vmem>>, vector<128x128xbf16>
    %c0_4 = arith.constant 0 : index
    %c0_5 = arith.constant 0 : index
    %5 = vector.load %arg4[%c0_4, %c0_5] : memref<128x128xbf16, #tpu.memory_space<vmem>>, vector<128x128xbf16>
    %cst = arith.constant dense<0.000000e+00> : vector<128x128xf32>
    %6 = tpu.matmul %4, %5, %cst {dimension_numbers = #tpu.dot_dimension_numbers<[1], [0], [0], [1], [0, 0, 1, 1], [], []>} : vector<128x128xbf16>, vector<128x128xbf16>, vector<128x128xf32> -> vector<128x128xf32>
    %7 = arith.addf %3, %6 : vector<128x128xf32>
    %c0_6 = arith.constant 0 : index
    %c0_7 = arith.constant 0 : index
    %8 = vector.load %arg8[%c0_6, %c0_7] : memref<128x128xf32, #tpu.memory_space<vmem>>, vector<128x128xf32>
    tpu.vector_store %arg8[%c0_6, %c0_7], %7 {strides = array<i32>} : memref<128x128xf32, #tpu.memory_space<vmem>>, vector<128x128xf32>,
    %c0_i32_8 = arith.constant 0 : i32
    %9 = arith.cmpi eq, %arg2, %c0_i32_8 : i32
    %10 = arith.extui %9 : i1 to i32
    %c0_i32_9 = arith.constant 0 : i32
    %11 = arith.cmpi ne, %10, %c0_i32_9 : i32
    scf.if %11 {
      %c0_10 = arith.constant 0 : index
      %c0_11 = arith.constant 0 : index
      %12 = vector.load %arg8[%c0_10, %c0_11] : memref<128x128xf32, #tpu.memory_space<vmem>>, vector<128x128xf32>
      %c0_12 = arith.constant 0 : index
      %c0_13 = arith.constant 0 : index
      %13 = vector.load %arg5[%c0_12, %c0_13] : memref<1x128xf32, #tpu.memory_space<vmem>>, vector<1x128xf32>
      %14 = vector.broadcast %13 : vector<1x128xf32> to vector<128x128xf32>
      %15 = arith.mulf %12, %14 : vector<128x128xf32>
      %c0_14 = arith.constant 0 : index
      %c0_15 = arith.constant 0 : index
      %16 = vector.load %arg6[%c0_14, %c0_15] : memref<1x128xf32, #tpu.memory_space<vmem>>, vector<1x128xf32>
      %17 = vector.broadcast %16 : vector<1x128xf32> to vector<128x128xf32>
      %18 = arith.addf %15, %17 : vector<128x128xf32>
      %19 = arith.truncf %18 : vector<128x128xf32> to vector<128x128xbf16>
      %c0_16 = arith.constant 0 : index
      %c0_17 = arith.constant 0 : index
      %20 = vector.load %arg7[%c0_16, %c0_17] : memref<128x128xbf16, #tpu.memory_space<vmem>>, vector<128x128xbf16>
      tpu.vector_store %arg7[%c0_16, %c0_17], %19 {strides = array<i32>} : memref<128x128xbf16, #tpu.memory_space<vmem>>, vector<128x128xbf16>,
    } else {
    }
    return
  }
  func.func @transform_0(%arg0: i32, %arg1: i32, %arg2: i32) -> (i32, i32) {
    %c0_i32 = arith.constant 0 : i32
    return %arg0, %arg2 : i32, i32
  }
  func.func @transform_1(%arg0: i32, %arg1: i32, %arg2: i32) -> (i32, i32) {
    %c0_i32 = arith.constant 0 : i32
    return %arg2, %arg1 : i32, i32
  }
  func.func @transform_2(%arg0: i32, %arg1: i32, %arg2: i32) -> (i32, i32) {
    %c0_i32 = arith.constant 0 : i32
    %c0_i32_0 = arith.constant 0 : i32
    return %c0_i32, %arg1 : i32, i32
  }
  func.func @transform_3(%arg0: i32, %arg1: i32, %arg2: i32) -> (i32, i32) {
    %c0_i32 = arith.constant 0 : i32
    %c0_i32_0 = arith.constant 0 : i32
    return %c0_i32, %arg1 : i32, i32
  }
  func.func @transform_4(%arg0: i32, %arg1: i32, %arg2: i32) -> (i32, i32) {
    %c0_i32 = arith.constant 0 : i32
    return %arg0, %arg1 : i32, i32
  }
}

module attributes {stable_mosaic.version = 11 : i64} {
  func.func @kernel(%arg0: i32, %arg1: i32, %arg2: i32, %arg3: memref<128x128xbf16, #tpu.memory_space<vmem>>, %arg4: memref<128x128xbf16, #tpu.memory_space<vmem>>, %arg5: memref<1x128xf32, #tpu.memory_space<vmem>>, %arg6: memref<1x128xf32, #tpu.memory_space<vmem>>, %arg7: memref<128x128xbf16, #tpu.memory_space<vmem>>, %arg8: memref<128x128xf32, #tpu.memory_space<vmem>>) attributes {dimension_semantics = [#tpu.dimension_semantics<parallel>, #tpu.dimension_semantics<parallel>, #tpu.dimension_semantics<arbitrary>], iteration_bounds = array<i64: 4, 1, 1>, scalar_prefetch = 0 : i64, scratch_operands = 1 : i64, tpu.core_type = #tpu.core_type<tc>, window_params = [{transform_indices = @transform_0, window_bounds = array<i64: 128, 128>}, {transform_indices = @transform_1, window_bounds = array<i64: 128, 128>}, {transform_indices = @transform_2, window_bounds = array<i64: 1, 128>}, {transform_indices = @transform_3, window_bounds = array<i64: 1, 128>}, {transform_indices = @transform_4, window_bounds = array<i64: 128, 128>}]} {
    %c0_i32 = arith.constant 0 : i32
    %0 = arith.cmpi eq, %arg2, %c0_i32 : i32
    %1 = arith.extui %0 : i1 to i32
    %c0_i32_0 = arith.constant 0 : i32
    %2 = arith.cmpi ne, %1, %c0_i32_0 : i32
    scf.if %2 {
      %cst_10 = arith.constant 0.000000e+00 : f32
      %12 = vector.broadcast %cst_10 : f32 to vector<128x128xf32>
      %c0_11 = arith.constant 0 : index
      %c0_12 = arith.constant 0 : index
      %13 = vector.load %arg8[%c0_11, %c0_12] : memref<128x128xf32, #tpu.memory_space<vmem>>, vector<128x128xf32>
      tpu.vector_store %arg8[%c0_11, %c0_12], %12 {strides = array<i32>} : memref<128x128xf32, #tpu.memory_space<vmem>>, vector<128x128xf32>,
    } else {
    }
    %c0 = arith.constant 0 : index
    %c0_1 = arith.constant 0 : index
    %3 = vector.load %arg8[%c0, %c0_1] : memref<128x128xf32, #tpu.memory_space<vmem>>, vector<128x128xf32>
    %c0_2 = arith.constant 0 : index
    %c0_3 = arith.constant 0 : index
    %4 = vector.load %arg3[%c0_2, %c0_3] : memref<128x128xbf16, #tpu.memory_space<vmem>>, vector<128x128xbf16>
    %c0_4 = arith.constant 0 : index
    %c0_5 = arith.constant 0 : index
    %5 = vector.load %arg4[%c0_4, %c0_5] : memref<128x128xbf16, #tpu.memory_space<vmem>>, vector<128x128xbf16>
    %cst = arith.constant dense<0.000000e+00> : vector<128x128xf32>
    %6 = tpu.matmul %4, %5, %cst {dimension_numbers = #tpu.dot_dimension_numbers<[1], [0], [0], [1], [0, 0, 1, 1], [], []>} : vector<128x128xbf16>, vector<128x128xbf16>, vector<128x128xf32> -> vector<128x128xf32>
    %7 = arith.addf %3, %6 : vector<128x128xf32>
    %c0_6 = arith.constant 0 : index
    %c0_7 = arith.constant 0 : index
    %8 = vector.load %arg8[%c0_6, %c0_7] : memref<128x128xf32, #tpu.memory_space<vmem>>, vector<128x128xf32>
    tpu.vector_store %arg8[%c0_6, %c0_7], %7 {strides = array<i32>} : memref<128x128xf32, #tpu.memory_space<vmem>>, vector<128x128xf32>,
    %c0_i32_8 = arith.constant 0 : i32
    %9 = arith.cmpi eq, %arg2, %c0_i32_8 : i32
    %10 = arith.extui %9 : i1 to i32
    %c0_i32_9 = arith.constant 0 : i32
    %11 = arith.cmpi ne, %10, %c0_i32_9 : i32
    scf.if %11 {
      %c0_10 = arith.constant 0 : index
      %c0_11 = arith.constant 0 : index
      %12 = vector.load %arg8[%c0_10, %c0_11] : memref<128x128xf32, #tpu.memory_space<vmem>>, vector<128x128xf32>
      %c0_12 = arith.constant 0 : index
      %c0_13 = arith.constant 0 : index
      %13 = vector.load %arg5[%c0_12, %c0_13] : memref<1x128xf32, #tpu.memory_space<vmem>>, vector<1x128xf32>
      %14 = vector.broadcast %13 : vector<1x128xf32> to vector<128x128xf32>
      %15 = arith.mulf %12, %14 : vector<128x128xf32>
      %c0_14 = arith.constant 0 : index
      %c0_15 = arith.constant 0 : index
      %16 = vector.load %arg6[%c0_14, %c0_15] : memref<1x128xf32, #tpu.memory_space<vmem>>, vector<1x128xf32>
      %17 = vector.broadcast %16 : vector<1x128xf32> to vector<128x128xf32>
      %18 = arith.addf %15, %17 : vector<128x128xf32>
      %cst_16 = arith.constant 0.000000e+00 : f32
      %19 = vector.broadcast %cst_16 : f32 to vector<128x128xf32>
      %20 = arith.maximumf %18, %19 : vector<128x128xf32>
      %21 = arith.truncf %20 : vector<128x128xf32> to vector<128x128xbf16>
      %c0_17 = arith.constant 0 : index
      %c0_18 = arith.constant 0 : index
      %22 = vector.load %arg7[%c0_17, %c0_18] : memref<128x128xbf16, #tpu.memory_space<vmem>>, vector<128x128xbf16>
      tpu.vector_store %arg7[%c0_17, %c0_18], %21 {strides = array<i32>} : memref<128x128xbf16, #tpu.memory_space<vmem>>, vector<128x128xbf16>,
    } else {
    }
    return
  }
  func.func @transform_0(%arg0: i32, %arg1: i32, %arg2: i32) -> (i32, i32) {
    %c0_i32 = arith.constant 0 : i32
    return %arg0, %arg2 : i32, i32
  }
  func.func @transform_1(%arg0: i32, %arg1: i32, %arg2: i32) -> (i32, i32) {
    %c0_i32 = arith.constant 0 : i32
    return %arg2, %arg1 : i32, i32
  }
  func.func @transform_2(%arg0: i32, %arg1: i32, %arg2: i32) -> (i32, i32) {
    %c0_i32 = arith.constant 0 : i32
    %c0_i32_0 = arith.constant 0 : i32
    return %c0_i32, %arg1 : i32, i32
  }
  func.func @transform_3(%arg0: i32, %arg1: i32, %arg2: i32) -> (i32, i32) {
    %c0_i32 = arith.constant 0 : i32
    %c0_i32_0 = arith.constant 0 : i32
    return %c0_i32, %arg1 : i32, i32
  }
  func.func @transform_4(%arg0: i32, %arg1: i32, %arg2: i32) -> (i32, i32) {
    %c0_i32 = arith.constant 0 : i32
    return %arg0, %arg1 : i32, i32
  }
}

module attributes {stable_mosaic.version = 11 : i64} {
  func.func @kernel(%arg0: i32, %arg1: memref<1x18x18x8xbf16, #tpu.memory_space<vmem>>, %arg2: memref<9x8x8xbf16, #tpu.memory_space<vmem>>, %arg3: memref<1x8xf32, #tpu.memory_space<vmem>>, %arg4: memref<1x8xf32, #tpu.memory_space<vmem>>, %arg5: memref<1x256x8xbf16, #tpu.memory_space<vmem>>) attributes {dimension_semantics = [#tpu.dimension_semantics<parallel>], iteration_bounds = array<i64: 2>, scalar_prefetch = 0 : i64, scratch_operands = 0 : i64, tpu.core_type = #tpu.core_type<tc>, window_params = [{transform_indices = @transform_0, window_bounds = array<i64: 1, 18, 18, 8>}, {pipeline_mode = #tpu.pipeline_mode<synchronous>, transform_indices = @transform_1, window_bounds = array<i64: 9, 8, 8>}, {pipeline_mode = #tpu.pipeline_mode<synchronous>, transform_indices = @transform_2, window_bounds = array<i64: 1, 8>}, {pipeline_mode = #tpu.pipeline_mode<synchronous>, transform_indices = @transform_3, window_bounds = array<i64: 1, 8>}, {transform_indices = @transform_4, window_bounds = array<i64: 1, 256, 8>}]} {
    %c0 = arith.constant 0 : index
    %c0_0 = arith.constant 0 : index
    %c0_1 = arith.constant 0 : index
    %c0_2 = arith.constant 0 : index
    %0 = vector.load %arg1[%c0, %c0_0, %c0_1, %c0_2] : memref<1x18x18x8xbf16, #tpu.memory_space<vmem>>, vector<1x18x18x8xbf16>
    %1 = vector.shape_cast %0 : vector<1x18x18x8xbf16> to vector<18x18x8xbf16>
    %c0_3 = arith.constant 0 : index
    %c0_4 = arith.constant 0 : index
    %c0_5 = arith.constant 0 : index
    %2 = vector.load %arg2[%c0_3, %c0_4, %c0_5] : memref<9x8x8xbf16, #tpu.memory_space<vmem>>, vector<9x8x8xbf16>
    %cst = arith.constant 0.000000e+00 : f32
    %3 = vector.broadcast %cst : f32 to vector<256x8xf32>
    %4 = vector.extract_strided_slice %1 {offsets = [0, 0, 0], sizes = [16, 16, 8], strides = [1, 1, 1]} : vector<18x18x8xbf16> to vector<16x16x8xbf16>
    %5 = vector.shape_cast %4 : vector<16x16x8xbf16> to vector<256x8xbf16>
    %6 = vector.extract_strided_slice %2 {offsets = [0, 0, 0], sizes = [1, 8, 8], strides = [1, 1, 1]} : vector<9x8x8xbf16> to vector<1x8x8xbf16>
    %7 = vector.shape_cast %6 : vector<1x8x8xbf16> to vector<8x8xbf16>
    %cst_6 = arith.constant dense<0.000000e+00> : vector<256x8xf32>
    %8 = tpu.matmul %5, %7, %cst_6 {dimension_numbers = #tpu.dot_dimension_numbers<[1], [0], [0], [1], [0, 0, 1, 1], [], []>} : vector<256x8xbf16>, vector<8x8xbf16>, vector<256x8xf32> -> vector<256x8xf32>
    %9 = arith.addf %3, %8 : vector<256x8xf32>
    %10 = vector.extract_strided_slice %1 {offsets = [0, 1, 0], sizes = [16, 16, 8], strides = [1, 1, 1]} : vector<18x18x8xbf16> to vector<16x16x8xbf16>
    %11 = vector.shape_cast %10 : vector<16x16x8xbf16> to vector<256x8xbf16>
    %12 = vector.extract_strided_slice %2 {offsets = [1, 0, 0], sizes = [1, 8, 8], strides = [1, 1, 1]} : vector<9x8x8xbf16> to vector<1x8x8xbf16>
    %13 = vector.shape_cast %12 : vector<1x8x8xbf16> to vector<8x8xbf16>
    %cst_7 = arith.constant dense<0.000000e+00> : vector<256x8xf32>
    %14 = tpu.matmul %11, %13, %cst_7 {dimension_numbers = #tpu.dot_dimension_numbers<[1], [0], [0], [1], [0, 0, 1, 1], [], []>} : vector<256x8xbf16>, vector<8x8xbf16>, vector<256x8xf32> -> vector<256x8xf32>
    %15 = arith.addf %9, %14 : vector<256x8xf32>
    %16 = vector.extract_strided_slice %1 {offsets = [0, 2, 0], sizes = [16, 16, 8], strides = [1, 1, 1]} : vector<18x18x8xbf16> to vector<16x16x8xbf16>
    %17 = vector.shape_cast %16 : vector<16x16x8xbf16> to vector<256x8xbf16>
    %18 = vector.extract_strided_slice %2 {offsets = [2, 0, 0], sizes = [1, 8, 8], strides = [1, 1, 1]} : vector<9x8x8xbf16> to vector<1x8x8xbf16>
    %19 = vector.shape_cast %18 : vector<1x8x8xbf16> to vector<8x8xbf16>
    %cst_8 = arith.constant dense<0.000000e+00> : vector<256x8xf32>
    %20 = tpu.matmul %17, %19, %cst_8 {dimension_numbers = #tpu.dot_dimension_numbers<[1], [0], [0], [1], [0, 0, 1, 1], [], []>} : vector<256x8xbf16>, vector<8x8xbf16>, vector<256x8xf32> -> vector<256x8xf32>
    %21 = arith.addf %15, %20 : vector<256x8xf32>
    %22 = vector.extract_strided_slice %1 {offsets = [1, 0, 0], sizes = [16, 16, 8], strides = [1, 1, 1]} : vector<18x18x8xbf16> to vector<16x16x8xbf16>
    %23 = vector.shape_cast %22 : vector<16x16x8xbf16> to vector<256x8xbf16>
    %24 = vector.extract_strided_slice %2 {offsets = [3, 0, 0], sizes = [1, 8, 8], strides = [1, 1, 1]} : vector<9x8x8xbf16> to vector<1x8x8xbf16>
    %25 = vector.shape_cast %24 : vector<1x8x8xbf16> to vector<8x8xbf16>
    %cst_9 = arith.constant dense<0.000000e+00> : vector<256x8xf32>
    %26 = tpu.matmul %23, %25, %cst_9 {dimension_numbers = #tpu.dot_dimension_numbers<[1], [0], [0], [1], [0, 0, 1, 1], [], []>} : vector<256x8xbf16>, vector<8x8xbf16>, vector<256x8xf32> -> vector<256x8xf32>
    %27 = arith.addf %21, %26 : vector<256x8xf32>
    %28 = vector.extract_strided_slice %1 {offsets = [1, 1, 0], sizes = [16, 16, 8], strides = [1, 1, 1]} : vector<18x18x8xbf16> to vector<16x16x8xbf16>
    %29 = vector.shape_cast %28 : vector<16x16x8xbf16> to vector<256x8xbf16>
    %30 = vector.extract_strided_slice %2 {offsets = [4, 0, 0], sizes = [1, 8, 8], strides = [1, 1, 1]} : vector<9x8x8xbf16> to vector<1x8x8xbf16>
    %31 = vector.shape_cast %30 : vector<1x8x8xbf16> to vector<8x8xbf16>
    %cst_10 = arith.constant dense<0.000000e+00> : vector<256x8xf32>
    %32 = tpu.matmul %29, %31, %cst_10 {dimension_numbers = #tpu.dot_dimension_numbers<[1], [0], [0], [1], [0, 0, 1, 1], [], []>} : vector<256x8xbf16>, vector<8x8xbf16>, vector<256x8xf32> -> vector<256x8xf32>
    %33 = arith.addf %27, %32 : vector<256x8xf32>
    %34 = vector.extract_strided_slice %1 {offsets = [1, 2, 0], sizes = [16, 16, 8], strides = [1, 1, 1]} : vector<18x18x8xbf16> to vector<16x16x8xbf16>
    %35 = vector.shape_cast %34 : vector<16x16x8xbf16> to vector<256x8xbf16>
    %36 = vector.extract_strided_slice %2 {offsets = [5, 0, 0], sizes = [1, 8, 8], strides = [1, 1, 1]} : vector<9x8x8xbf16> to vector<1x8x8xbf16>
    %37 = vector.shape_cast %36 : vector<1x8x8xbf16> to vector<8x8xbf16>
    %cst_11 = arith.constant dense<0.000000e+00> : vector<256x8xf32>
    %38 = tpu.matmul %35, %37, %cst_11 {dimension_numbers = #tpu.dot_dimension_numbers<[1], [0], [0], [1], [0, 0, 1, 1], [], []>} : vector<256x8xbf16>, vector<8x8xbf16>, vector<256x8xf32> -> vector<256x8xf32>
    %39 = arith.addf %33, %38 : vector<256x8xf32>
    %40 = vector.extract_strided_slice %1 {offsets = [2, 0, 0], sizes = [16, 16, 8], strides = [1, 1, 1]} : vector<18x18x8xbf16> to vector<16x16x8xbf16>
    %41 = vector.shape_cast %40 : vector<16x16x8xbf16> to vector<256x8xbf16>
    %42 = vector.extract_strided_slice %2 {offsets = [6, 0, 0], sizes = [1, 8, 8], strides = [1, 1, 1]} : vector<9x8x8xbf16> to vector<1x8x8xbf16>
    %43 = vector.shape_cast %42 : vector<1x8x8xbf16> to vector<8x8xbf16>
    %cst_12 = arith.constant dense<0.000000e+00> : vector<256x8xf32>
    %44 = tpu.matmul %41, %43, %cst_12 {dimension_numbers = #tpu.dot_dimension_numbers<[1], [0], [0], [1], [0, 0, 1, 1], [], []>} : vector<256x8xbf16>, vector<8x8xbf16>, vector<256x8xf32> -> vector<256x8xf32>
    %45 = arith.addf %39, %44 : vector<256x8xf32>
    %46 = vector.extract_strided_slice %1 {offsets = [2, 1, 0], sizes = [16, 16, 8], strides = [1, 1, 1]} : vector<18x18x8xbf16> to vector<16x16x8xbf16>
    %47 = vector.shape_cast %46 : vector<16x16x8xbf16> to vector<256x8xbf16>
    %48 = vector.extract_strided_slice %2 {offsets = [7, 0, 0], sizes = [1, 8, 8], strides = [1, 1, 1]} : vector<9x8x8xbf16> to vector<1x8x8xbf16>
    %49 = vector.shape_cast %48 : vector<1x8x8xbf16> to vector<8x8xbf16>
    %cst_13 = arith.constant dense<0.000000e+00> : vector<256x8xf32>
    %50 = tpu.matmul %47, %49, %cst_13 {dimension_numbers = #tpu.dot_dimension_numbers<[1], [0], [0], [1], [0, 0, 1, 1], [], []>} : vector<256x8xbf16>, vector<8x8xbf16>, vector<256x8xf32> -> vector<256x8xf32>
    %51 = arith.addf %45, %50 : vector<256x8xf32>
    %52 = vector.extract_strided_slice %1 {offsets = [2, 2, 0], sizes = [16, 16, 8], strides = [1, 1, 1]} : vector<18x18x8xbf16> to vector<16x16x8xbf16>
    %53 = vector.shape_cast %52 : vector<16x16x8xbf16> to vector<256x8xbf16>
    %54 = vector.extract_strided_slice %2 {offsets = [8, 0, 0], sizes = [1, 8, 8], strides = [1, 1, 1]} : vector<9x8x8xbf16> to vector<1x8x8xbf16>
    %55 = vector.shape_cast %54 : vector<1x8x8xbf16> to vector<8x8xbf16>
    %cst_14 = arith.constant dense<0.000000e+00> : vector<256x8xf32>
    %56 = tpu.matmul %53, %55, %cst_14 {dimension_numbers = #tpu.dot_dimension_numbers<[1], [0], [0], [1], [0, 0, 1, 1], [], []>} : vector<256x8xbf16>, vector<8x8xbf16>, vector<256x8xf32> -> vector<256x8xf32>
    %57 = arith.addf %51, %56 : vector<256x8xf32>
    %c0_15 = arith.constant 0 : index
    %c0_16 = arith.constant 0 : index
    %58 = vector.load %arg3[%c0_15, %c0_16] : memref<1x8xf32, #tpu.memory_space<vmem>>, vector<1x8xf32>
    %59 = vector.broadcast %58 : vector<1x8xf32> to vector<256x8xf32>
    %60 = arith.mulf %57, %59 : vector<256x8xf32>
    %c0_17 = arith.constant 0 : index
    %c0_18 = arith.constant 0 : index
    %61 = vector.load %arg4[%c0_17, %c0_18] : memref<1x8xf32, #tpu.memory_space<vmem>>, vector<1x8xf32>
    %62 = vector.broadcast %61 : vector<1x8xf32> to vector<256x8xf32>
    %63 = arith.addf %60, %62 : vector<256x8xf32>
    %cst_19 = arith.constant 0.000000e+00 : f32
    %64 = vector.broadcast %cst_19 : f32 to vector<256x8xf32>
    %65 = arith.maximumf %63, %64 : vector<256x8xf32>
    %66 = vector.shape_cast %65 : vector<256x8xf32> to vector<1x256x8xf32>
    %67 = arith.truncf %66 : vector<1x256x8xf32> to vector<1x256x8xbf16>
    %c0_20 = arith.constant 0 : index
    %c0_21 = arith.constant 0 : index
    %c0_22 = arith.constant 0 : index
    %68 = vector.load %arg5[%c0_20, %c0_21, %c0_22] : memref<1x256x8xbf16, #tpu.memory_space<vmem>>, vector<1x256x8xbf16>
    tpu.vector_store %arg5[%c0_20, %c0_21, %c0_22], %67 {strides = array<i32>} : memref<1x256x8xbf16, #tpu.memory_space<vmem>>, vector<1x256x8xbf16>,
    return
  }
  func.func @transform_0(%arg0: i32) -> (i32, i32, i32, i32) {
    %c0_i32 = arith.constant 0 : i32
    %c0_i32_0 = arith.constant 0 : i32
    %c0_i32_1 = arith.constant 0 : i32
    %c0_i32_2 = arith.constant 0 : i32
    return %arg0, %c0_i32, %c0_i32_0, %c0_i32_1 : i32, i32, i32, i32
  }
  func.func @transform_1(%arg0: i32) -> (i32, i32, i32) {
    %c0_i32 = arith.constant 0 : i32
    %c0_i32_0 = arith.constant 0 : i32
    %c0_i32_1 = arith.constant 0 : i32
    %c0_i32_2 = arith.constant 0 : i32
    return %c0_i32, %c0_i32_0, %c0_i32_1 : i32, i32, i32
  }
  func.func @transform_2(%arg0: i32) -> (i32, i32) {
    %c0_i32 = arith.constant 0 : i32
    %c0_i32_0 = arith.constant 0 : i32
    %c0_i32_1 = arith.constant 0 : i32
    return %c0_i32, %c0_i32_0 : i32, i32
  }
  func.func @transform_3(%arg0: i32) -> (i32, i32) {
    %c0_i32 = arith.constant 0 : i32
    %c0_i32_0 = arith.constant 0 : i32
    %c0_i32_1 = arith.constant 0 : i32
    return %c0_i32, %c0_i32_0 : i32, i32
  }
  func.func @transform_4(%arg0: i32) -> (i32, i32, i32) {
    %c0_i32 = arith.constant 0 : i32
    %c0_i32_0 = arith.constant 0 : i32
    %c0_i32_1 = arith.constant 0 : i32
    return %arg0, %c0_i32, %c0_i32_0 : i32, i32, i32
  }
}

module attributes {stable_mosaic.version = 11 : i64} {
  func.func @kernel(%arg0: i32, %arg1: i32, %arg2: i32, %arg3: memref<128x128xbf16, #tpu.memory_space<vmem>>, %arg4: memref<128x128xbf16, #tpu.memory_space<vmem>>, %arg5: memref<1x128xf32, #tpu.memory_space<vmem>>, %arg6: memref<1x128xf32, #tpu.memory_space<vmem>>, %arg7: memref<128x128xbf16, #tpu.memory_space<vmem>>, %arg8: memref<128x128xf32, #tpu.memory_space<vmem>>, %arg9: memref<128x128xf32, #tpu.memory_space<vmem>>) attributes {dimension_semantics = [#tpu.dimension_semantics<parallel>, #tpu.dimension_semantics<parallel>, #tpu.dimension_semantics<arbitrary>], iteration_bounds = array<i64: 4, 1, 1>, scalar_prefetch = 0 : i64, scratch_operands = 1 : i64, tpu.core_type = #tpu.core_type<tc>, window_params = [{transform_indices = @transform_0, window_bounds = array<i64: 128, 128>}, {transform_indices = @transform_1, window_bounds = array<i64: 128, 128>}, {transform_indices = @transform_2, window_bounds = array<i64: 1, 128>}, {transform_indices = @transform_3, window_bounds = array<i64: 1, 128>}, {transform_indices = @transform_4, window_bounds = array<i64: 128, 128>}, {transform_indices = @transform_5, window_bounds = array<i64: 128, 128>}]} {
    %c0_i32 = arith.constant 0 : i32
    %0 = arith.cmpi eq, %arg2, %c0_i32 : i32
    %1 = arith.extui %0 : i1 to i32
    %c0_i32_0 = arith.constant 0 : i32
    %2 = arith.cmpi ne, %1, %c0_i32_0 : i32
    scf.if %2 {
      %cst_10 = arith.constant 0.000000e+00 : f32
      %12 = vector.broadcast %cst_10 : f32 to vector<128x128xf32>
      %c0_11 = arith.constant 0 : index
      %c0_12 = arith.constant 0 : index
      %13 = vector.load %arg9[%c0_11, %c0_12] : memref<128x128xf32, #tpu.memory_space<vmem>>, vector<128x128xf32>
      tpu.vector_store %arg9[%c0_11, %c0_12], %12 {strides = array<i32>} : memref<128x128xf32, #tpu.memory_space<vmem>>, vector<128x128xf32>,
    } else {
    }
    %c0 = arith.constant 0 : index
    %c0_1 = arith.constant 0 : index
    %3 = vector.load %arg9[%c0, %c0_1] : memref<128x128xf32, #tpu.memory_space<vmem>>, vector<128x128xf32>
    %c0_2 = arith.constant 0 : index
    %c0_3 = arith.constant 0 : index
    %4 = vector.load %arg3[%c0_2, %c0_3] : memref<128x128xbf16, #tpu.memory_space<vmem>>, vector<128x128xbf16>
    %c0_4 = arith.constant 0 : index
    %c0_5 = arith.constant 0 : index
    %5 = vector.load %arg4[%c0_4, %c0_5] : memref<128x128xbf16, #tpu.memory_space<vmem>>, vector<128x128xbf16>
    %cst = arith.constant dense<0.000000e+00> : vector<128x128xf32>
    %6 = tpu.matmul %4, %5, %cst {dimension_numbers = #tpu.dot_dimension_numbers<[1], [0], [0], [1], [0, 0, 1, 1], [], []>} : vector<128x128xbf16>, vector<128x128xbf16>, vector<128x128xf32> -> vector<128x128xf32>
    %7 = arith.addf %3, %6 : vector<128x128xf32>
    %c0_6 = arith.constant 0 : index
    %c0_7 = arith.constant 0 : index
    %8 = vector.load %arg9[%c0_6, %c0_7] : memref<128x128xf32, #tpu.memory_space<vmem>>, vector<128x128xf32>
    tpu.vector_store %arg9[%c0_6, %c0_7], %7 {strides = array<i32>} : memref<128x128xf32, #tpu.memory_space<vmem>>, vector<128x128xf32>,
    %c0_i32_8 = arith.constant 0 : i32
    %9 = arith.cmpi eq, %arg2, %c0_i32_8 : i32
    %10 = arith.extui %9 : i1 to i32
    %c0_i32_9 = arith.constant 0 : i32
    %11 = arith.cmpi ne, %10, %c0_i32_9 : i32
    scf.if %11 {
      %c0_10 = arith.constant 0 : index
      %c0_11 = arith.constant 0 : index
      %12 = vector.load %arg9[%c0_10, %c0_11] : memref<128x128xf32, #tpu.memory_space<vmem>>, vector<128x128xf32>
      %c0_12 = arith.constant 0 : index
      %c0_13 = arith.constant 0 : index
      %13 = vector.load %arg5[%c0_12, %c0_13] : memref<1x128xf32, #tpu.memory_space<vmem>>, vector<1x128xf32>
      %14 = vector.broadcast %13 : vector<1x128xf32> to vector<128x128xf32>
      %15 = arith.mulf %12, %14 : vector<128x128xf32>
      %c0_14 = arith.constant 0 : index
      %c0_15 = arith.constant 0 : index
      %16 = vector.load %arg6[%c0_14, %c0_15] : memref<1x128xf32, #tpu.memory_space<vmem>>, vector<1x128xf32>
      %17 = vector.broadcast %16 : vector<1x128xf32> to vector<128x128xf32>
      %18 = arith.addf %15, %17 : vector<128x128xf32>
      %c0_16 = arith.constant 0 : index
      %c0_17 = arith.constant 0 : index
      %19 = vector.load %arg7[%c0_16, %c0_17] : memref<128x128xbf16, #tpu.memory_space<vmem>>, vector<128x128xbf16>
      %20 = arith.extf %19 : vector<128x128xbf16> to vector<128x128xf32>
      %21 = arith.addf %18, %20 : vector<128x128xf32>
      %cst_18 = arith.constant 0.000000e+00 : f32
      %22 = vector.broadcast %cst_18 : f32 to vector<128x128xf32>
      %23 = arith.maximumf %21, %22 : vector<128x128xf32>
      %c0_19 = arith.constant 0 : index
      %c0_20 = arith.constant 0 : index
      %24 = vector.load %arg8[%c0_19, %c0_20] : memref<128x128xf32, #tpu.memory_space<vmem>>, vector<128x128xf32>
      tpu.vector_store %arg8[%c0_19, %c0_20], %23 {strides = array<i32>} : memref<128x128xf32, #tpu.memory_space<vmem>>, vector<128x128xf32>,
    } else {
    }
    return
  }
  func.func @transform_0(%arg0: i32, %arg1: i32, %arg2: i32) -> (i32, i32) {
    %c0_i32 = arith.constant 0 : i32
    return %arg0, %arg2 : i32, i32
  }
  func.func @transform_1(%arg0: i32, %arg1: i32, %arg2: i32) -> (i32, i32) {
    %c0_i32 = arith.constant 0 : i32
    return %arg2, %arg1 : i32, i32
  }
  func.func @transform_2(%arg0: i32, %arg1: i32, %arg2: i32) -> (i32, i32) {
    %c0_i32 = arith.constant 0 : i32
    %c0_i32_0 = arith.constant 0 : i32
    return %c0_i32, %arg1 : i32, i32
  }
  func.func @transform_3(%arg0: i32, %arg1: i32, %arg2: i32) -> (i32, i32) {
    %c0_i32 = arith.constant 0 : i32
    %c0_i32_0 = arith.constant 0 : i32
    return %c0_i32, %arg1 : i32, i32
  }
  func.func @transform_4(%arg0: i32, %arg1: i32, %arg2: i32) -> (i32, i32) {
    %c0_i32 = arith.constant 0 : i32
    return %arg0, %arg1 : i32, i32
  }
  func.func @transform_5(%arg0: i32, %arg1: i32, %arg2: i32) -> (i32, i32) {
    %c0_i32 = arith.constant 0 : i32
    return %arg0, %arg1 : i32, i32
  }
}

</mosaic_0001>

<llo_original>
// kernel: _lambda_.6
$region0: #{_lambda_.6}
  #allocation0 [shape = 'u32[]', space=smem, size = 0x4, offset = 0x4, fixed_abs, tag = 'smem constant byte address 0x4 - core index']
  #allocation1 [shape = 'u32[144,128]{1,0:T(1,128)}', space=vmem, size = 0x12000, scoped, tag = 'internal scratch']
  #allocation2 [shape = 'f32[128,128]{1,0:T(8,128)}', space=vmem, size = 0x10000, scoped, tag = 'scratch operand']
  %s0 = inlined_call_operand.vmem [shape: bf16[512,128], index: 0, kind: input, shape index: {}]
  %s1 = inlined_call_operand.vmem [shape: bf16[128,128], index: 1, kind: input, shape index: {}]
  %s2 = inlined_call_operand.vmem [shape: f32[1,128], index: 2, kind: input, shape index: {}]
  %s3 = inlined_call_operand.vmem [shape: f32[1,128], index: 3, kind: input, shape index: {}]
  %s4 = inlined_call_operand.vmem [shape: bf16[512,128], index: 4, kind: output, shape index: {}]
  %s5 = sld [smem:[#allocation0]]
  $region57: #{_lambda_.6} parent=0
    _
  %s7 = ssub.s32 1, %s5
  %s8 = scalar_select 0, %s7, %s5
  loop: start=0, step=1, limit=6
  $region2: #{_lambda_.6} parent=0 // loop_pre_header
    _
  $region3: #{_lambda_.6} parent=0 // loop_header
    %s10 = sphi 0, %s14
    %p11 = scmp.ge.s32.totalorder %s10, 6
    %s17 = sphi 0, %s36
    %s18 = sphi 0, %s32
    %s19 = sphi 0, %s28
    %s20 = sphi 0, %s17
    %s21 = sphi 0, %s18
    %s22 = sphi 0, %s19
    %s23 = sphi 0, %s20
    %s24 = sphi 0, %s21
    %s25 = sphi 0, %s22
    %s41 = sphi 0, %s43
    %s44 = sphi 0, %s41
    %s45 = sphi 0, %s44
    %s61 = sphi 0, %s45
    %s69 = sphi 0, %s71
    %s72 = sphi 0, %s69
    %s73 = sphi 0, %s72
    %s89 = sphi 0, %s73
    %s95 = sphi 0, %s97
    %s98 = sphi 0, %s95
    %s99 = sphi 0, %s98
    %s115 = sphi 0, %s99
    %s121 = sphi 0, %s123
    %s124 = sphi 0, %s121
    %s125 = sphi 0, %s124
    %s141 = sphi 0, %s125
    %s149 = sphi 0, %s151
    %s152 = sphi 0, %s149
    %s153 = sphi 0, %s152
    %s169 = sphi 0, %s153
  $region4: #{_lambda_.6} parent=0 // loop_header_branch
    %13 = sbr.rel (%p11) target = $region8
  $region5: #{_lambda_.6} parent=0 // loop_body
    %s15 = ssub.s32 %s10, 1
    %s16 = ssub.s32 %s10, 2
    %s26 = sadd.s32 1, %s19
    %p27 = scmp.ge.s32.totalorder %s26, 1
    %s28 = scalar_select %p27, 0, %s26
    %s29 = sadd.s32 1, %s18
    %s30 = scalar_select %p27, %s29, %s18
    %p31 = scmp.ge.s32.totalorder %s30, 1
    %s32 = scalar_select %p31, 0, %s30
    %s33 = sadd.s32 1, %s17
    %s34 = scalar_select %p31, %s33, %s17
    %p35 = scmp.ge.s32.totalorder %s34, 4
    %s36 = scalar_select %p35, 0, %s34
    %s37 = ssub.s32 %s17, %s36
    %s38 = ssub.s32 %s19, %s28
    %s39 = sor.u32 %s37, %s38
    %p40 = scmp.eq.s32.totalorder %s39, 0
    %s42 = sadd.s32 %s41, 1
    %s43 = scalar_select %p40, %s41, %s42
    %p46 = pneg %p40
    %p47 = scmp.eq.s32.totalorder %s10, 3
    %p48 = por %p46, %p47
    %p49 = scmp.ne.s32.totalorder %s41, %s44
    %p50 = scmp.eq.s32.totalorder %s10, 0
    %p51 = por %p49, %p50
    %p52 = scmp.ne.s32.totalorder %s41, %s44
    %p53 = scmp.eq.s32.totalorder %s15, 3
    %p54 = por %p52, %p53
    %p55 = scmp.ne.s32.totalorder %s44, %s45
    %p56 = scmp.eq.s32.totalorder %s15, 0
    %p57 = por %p55, %p56
    %p58 = scmp.ne.s32.totalorder %s44, %s45
    %p59 = scmp.eq.s32.totalorder %s16, 3
    %p60 = por %p58, %p59
    %p62 = scmp.ne.s32.totalorder %s45, %s61
    %p63 = scmp.eq.s32.totalorder %s16, 0
    %p64 = por %p62, %p63
    %s65 = ssub.s32 %s19, %s28
    %s66 = ssub.s32 %s18, %s32
    %s67 = sor.u32 %s65, %s66
    %p68 = scmp.eq.s32.totalorder %s67, 0
    %s70 = sadd.s32 %s69, 1
    %s71 = scalar_select %p68, %s69, %s70
    %p74 = pneg %p68
    %p75 = scmp.eq.s32.totalorder %s10, 3
    %p76 = por %p74, %p75
    %p77 = scmp.ne.s32.totalorder %s69, %s72
    %p78 = scmp.eq.s32.totalorder %s10, 0
    %p79 = por %p77, %p78
    %p80 = scmp.ne.s32.totalorder %s69, %s72
    %p81 = scmp.eq.s32.totalorder %s15, 3
    %p82 = por %p80, %p81
    %p83 = scmp.ne.s32.totalorder %s72, %s73
    %p84 = scmp.eq.s32.totalorder %s15, 0
    %p85 = por %p83, %p84
    %p86 = scmp.ne.s32.totalorder %s72, %s73
    %p87 = scmp.eq.s32.totalorder %s16, 3
    %p88 = por %p86, %p87
    %p90 = scmp.ne.s32.totalorder %s73, %s89
    %p91 = scmp.eq.s32.totalorder %s16, 0
    %p92 = por %p90, %p91
    %s93 = ssub.s32 %s18, %s32
    %p94 = scmp.eq.s32.totalorder %s93, 0
    %s96 = sadd.s32 %s95, 1
    %s97 = scalar_select %p94, %s95, %s96
    %p100 = pneg %p94
    %p101 = scmp.eq.s32.totalorder %s10, 3
    %p102 = por %p100, %p101
    %p103 = scmp.ne.s32.totalorder %s95, %s98
    %p104 = scmp.eq.s32.totalorder %s10, 0
    %p105 = por %p103, %p104
    %p106 = scmp.ne.s32.totalorder %s95, %s98
    %p107 = scmp.eq.s32.totalorder %s15, 3
    %p108 = por %p106, %p107
    %p109 = scmp.ne.s32.totalorder %s98, %s99
    %p110 = scmp.eq.s32.totalorder %s15, 0
    %p111 = por %p109, %p110
    %p112 = scmp.ne.s32.totalorder %s98, %s99
    %p113 = scmp.eq.s32.totalorder %s16, 3
    %p114 = por %p112, %p113
    %p116 = scmp.ne.s32.totalorder %s99, %s115
    %p117 = scmp.eq.s32.totalorder %s16, 0
    %p118 = por %p116, %p117
    %s119 = ssub.s32 %s18, %s32
    %p120 = scmp.eq.s32.totalorder %s119, 0
    %s122 = sadd.s32 %s121, 1
    %s123 = scalar_select %p120, %s121, %s122
    %p126 = pneg %p120
    %p127 = scmp.eq.s32.totalorder %s10, 3
    %p128 = por %p126, %p127
    %p129 = scmp.ne.s32.totalorder %s121, %s124
    %p130 = scmp.eq.s32.totalorder %s10, 0
    %p131 = por %p129, %p130
    %p132 = scmp.ne.s32.totalorder %s121, %s124
    %p133 = scmp.eq.s32.totalorder %s15, 3
    %p134 = por %p132, %p133
    %p135 = scmp.ne.s32.totalorder %s124, %s125
    %p136 = scmp.eq.s32.totalorder %s15, 0
    %p137 = por %p135, %p136
    %p138 = scmp.ne.s32.totalorder %s124, %s125
    %p139 = scmp.eq.s32.totalorder %s16, 3
    %p140 = por %p138, %p139
    %p142 = scmp.ne.s32.totalorder %s125, %s141
    %p143 = scmp.eq.s32.totalorder %s16, 0
    %p144 = por %p142, %p143
    %s145 = ssub.s32 %s17, %s36
    %s146 = ssub.s32 %s18, %s32
    %s147 = sor.u32 %s145, %s146
    %p148 = scmp.eq.s32.totalorder %s147, 0
    %s150 = sadd.s32 %s149, 1
    %s151 = scalar_select %p148, %s149, %s150
    %p154 = pneg %p148
    %p155 = scmp.eq.s32.totalorder %s10, 3
    %p156 = por %p154, %p155
    %p157 = scmp.ne.s32.totalorder %s149, %s152
    %p158 = scmp.eq.s32.totalorder %s10, 0
    %p159 = por %p157, %p158
    %p160 = scmp.ne.s32.totalorder %s149, %s152
    %p161 = scmp.eq.s32.totalorder %s15, 3
    %p162 = por %p160, %p161
    %p163 = scmp.ne.s32.totalorder %s152, %s153
    %p164 = scmp.eq.s32.totalorder %s15, 0
    %p165 = por %p163, %p164
    %p166 = scmp.ne.s32.totalorder %s152, %s153
    %p167 = scmp.eq.s32.totalorder %s16, 3
    %p168 = por %p166, %p167
    %p170 = scmp.ne.s32.totalorder %s153, %s169
    %p171 = scmp.eq.s32.totalorder %s16, 0
    %p172 = por %p170, %p171
    %p173 = scmp.le.s32.totalorder 1, %s10
    %p174 = scmp.lt.s32.totalorder %s10, 5
    %p175 = pnand %p173, %p174
    %p176 = pneg %p175
    // Predicated region
    $region9: #{_lambda_.6} parent=5 // pred_check
      _
    $region10: #{_lambda_.6} parent=5 // pred_check_branch
      %178 = sbr.rel (%p175) target = $region12
    $region11: #{_lambda_.6} parent=5 // pred_region
      %s179 = ssub.s32 %s10, 1
      // Predicated region
      $region13: #{_lambda_.6} parent=11 // pred_check
        %p180 = pneg %p85
      $region14: #{_lambda_.6} parent=11 // pred_check_branch
        %182 = sbr.rel (%p180) target = $region16
      $region15: #{_lambda_.6} parent=11 // pred_region
        %s183 = smul.u32 16, %s22
        %p184 = scmp.lt.s32.totalorder %s183, 15
        %s185 = scalar_select %p184, %s183, 15
        %p186 = scmp.lt.s32.totalorder %s21, 0
        %s187 = scalar_select %p186, %s21, 0
        %s188 = sadd.s32 %s187, %s185
        %s189 = smul.addr %s188, 4
        %s190 = scalar_lea.vmem %s1, %s189
        %s191 = smul.u32 16, %s22
      $region16: #{_lambda_.6} parent=11 // pred_fallthru
        _
      // Predicated region
      $region17: #{_lambda_.6} parent=11 // pred_check
        %p192 = pneg %p111
      $region18: #{_lambda_.6} parent=11 // pred_check_branch
        %194 = sbr.rel (%p192) target = $region20
      $region19: #{_lambda_.6} parent=11 // pred_region
        %p195 = scmp.lt.s32.totalorder %s21, 0
        %s196 = scalar_select %p195, %s21, 0
        %s197 = scalar_lea.vmem %s2, %s196
      $region20: #{_lambda_.6} parent=11 // pred_fallthru
        _
      // Predicated region
      $region21: #{_lambda_.6} parent=11 // pred_check
        %p198 = pneg %p137
      $region22: #{_lambda_.6} parent=11 // pred_check_branch
        %200 = sbr.rel (%p198) target = $region24
      $region23: #{_lambda_.6} parent=11 // pred_region
        %p201 = scmp.lt.s32.totalorder %s21, 0
        %s202 = scalar_select %p201, %s21, 0
        %s203 = scalar_lea.vmem %s3, %s202
      $region24: #{_lambda_.6} parent=11 // pred_fallthru
        _
    $region12: #{_lambda_.6} parent=5 // pred_fallthru
      _
    %p204 = scmp.lt.s32.totalorder %s10, 4
    // Predicated region
    $region25: #{_lambda_.6} parent=5 // pred_check
      %p205 = pneg %p204
    $region26: #{_lambda_.6} parent=5 // pred_check_branch
      %207 = sbr.rel (%p205) target = $region28
    $region27: #{_lambda_.6} parent=5 // pred_region
      // Predicated region
      $region29: #{_lambda_.6} parent=27 // pred_check
        %p208 = pneg %p51
      $region30: #{_lambda_.6} parent=27 // pred_check_branch
        %210 = sbr.rel (%p208) target = $region32
      $region31: #{_lambda_.6} parent=27 // pred_region
        %s211 = smul.u32 16, %s17
        %p212 = scmp.lt.s32.totalorder %s211, 63
        %s213 = scalar_select %p212, %s211, 63
        %p214 = scmp.lt.s32.totalorder %s19, 0
        %s215 = scalar_select %p214, %s19, 0
        %s216 = sadd.s32 %s215, %s213
        %s217 = smul.addr %s216, 4
        %s218 = scalar_lea.vmem %s0, %s217
        %s219 = smul.u32 16, %s17
      $region32: #{_lambda_.6} parent=27 // pred_fallthru
        _
    $region28: #{_lambda_.6} parent=5 // pred_fallthru
      _
    %p220 = scmp.le.s32.totalorder 1, %s10
    %p221 = scmp.lt.s32.totalorder %s10, 5
    %p222 = pnand %p220, %p221
    %p223 = pneg %p222
    // Predicated region
    $region33: #{_lambda_.6} parent=5 // pred_check
      _
    $region34: #{_lambda_.6} parent=5 // pred_check_branch
      %225 = sbr.rel (%p222) target = $region36
    $region35: #{_lambda_.6} parent=5 // pred_region
      %s226 = ssub.s32 %s10, 1
      %s227 = smul.u32 16, %s20
      %p228 = scmp.lt.s32.totalorder %s227, 63
      %s229 = scalar_select %p228, %s227, 63
      %p230 = scmp.lt.s32.totalorder %s22, 0
      %s231 = scalar_select %p230, %s22, 0
      %s232 = sadd.s32 %s231, %s229
      %s233 = smul.addr %s232, 4
      %s234 = scalar_lea.vmem %s0, %s233
      %p235 = pneg %p57
      %p236 = pneg %p54
      %s237 = smul.u32 16, %s22
      %p238 = scmp.lt.s32.totalorder %s237, 15
      %s239 = scalar_select %p238, %s237, 15
      %p240 = scmp.lt.s32.totalorder %s21, 0
      %s241 = scalar_select %p240, %s21, 0
      %s242 = sadd.s32 %s241, %s239
      %s243 = smul.addr %s242, 4
      %s244 = scalar_lea.vmem %s1, %s243
      %p245 = pneg %p85
      %p246 = pneg %p82
      %p247 = scmp.lt.s32.totalorder %s21, 0
      %s248 = scalar_select %p247, %s21, 0
      %s249 = scalar_lea.vmem %s2, %s248
      %p250 = pneg %p111
      %p251 = pneg %p108
      %p252 = scmp.lt.s32.totalorder %s21, 0
      %s253 = scalar_select %p252, %s21, 0
      %s254 = scalar_lea.vmem %s3, %s253
      %p255 = pneg %p137
      %p256 = pneg %p134
      %p257 = pneg %p165
      %p258 = pneg %p162
      %s259 = smul.u32 16, %s20
      %p260 = scmp.lt.s32.totalorder %s259, 63
      %s261 = scalar_select %p260, %s259, 63
      %p262 = scmp.lt.s32.totalorder %s21, 0
      %s263 = scalar_select %p262, %s21, 0
      %s264 = sadd.s32 %s263, %s261
      %s265 = smul.addr %s264, 4
      %s266 = scalar_lea.vmem %s4, %s265
      %s267 = smul.u32 16, %s20
      %p268 = scmp.lt.s32.totalorder %s267, 63
      %s269 = scalar_select %p268, %s267, 63
      %p270 = scmp.lt.s32.totalorder %s22, 0
      %s271 = scalar_select %p270, %s22, 0
      %s272 = sadd.s32 %s271, %s269
      %s273 = smul.addr %s272, 4
      %s274 = scalar_lea.vmem %s0, %s273
      %s275 = smul.u32 16, %s20
      %s276 = smul.u32 16, %s22
      %p277 = scmp.lt.s32.totalorder %s276, 15
      %s278 = scalar_select %p277, %s276, 15
      %p279 = scmp.lt.s32.totalorder %s21, 0
      %s280 = scalar_select %p279, %s21, 0
      %s281 = sadd.s32 %s280, %s278
      %s282 = smul.addr %s281, 4
      %s283 = scalar_lea.vmem %s1, %s282
      %s284 = smul.u32 16, %s22
      %p285 = scmp.lt.s32.totalorder %s21, 0
      %s286 = scalar_select %p285, %s21, 0
      %s287 = scalar_lea.vmem %s2, %s286
      %p288 = scmp.lt.s32.totalorder %s21, 0
      %s289 = scalar_select %p288, %s21, 0
      %s290 = scalar_lea.vmem %s3, %s289
      %s291 = smul.u32 16, %s20
      %p292 = scmp.lt.s32.totalorder %s291, 63
      %s293 = scalar_select %p292, %s291, 63
      %p294 = scmp.lt.s32.totalorder %s21, 0
      %s295 = scalar_select %p294, %s21, 0
      %s296 = sadd.s32 %s295, %s293
      %s297 = smul.addr %s296, 4
      %s298 = scalar_lea.vmem %s4, %s297
      %s299 = smul.u32 16, %s20
      %p301 = scmp.eq.s32.totalorder %s22, 0
      // Predicated region
      $region37: #{_lambda_.6} parent=35 // pred_check
        %p302 = pneg %p301
      $region38: #{_lambda_.6} parent=35 // pred_check_branch
        %304 = sbr.rel (%p302) target = $region40
      $region39: #{_lambda_.6} parent=35 // pred_region
        %305 = vst [vmem:[#allocation2] sm:$0xff] 0.0
        %306 = vst [vmem:[#allocation2 + $0x8] sm:$0xff] 0.0
        %307 = vst [vmem:[#allocation2 + $0x10] sm:$0xff] 0.0
        %308 = vst [vmem:[#allocation2 + $0x18] sm:$0xff] 0.0
        %309 = vst [vmem:[#allocation2 + $0x20] sm:$0xff] 0.0
        %310 = vst [vmem:[#allocation2 + $0x28] sm:$0xff] 0.0
        %311 = vst [vmem:[#allocation2 + $0x30] sm:$0xff] 0.0
        %312 = vst [vmem:[#allocation2 + $0x38] sm:$0xff] 0.0
        %313 = vst [vmem:[#allocation2 + $0x40] sm:$0xff] 0.0
        %314 = vst [vmem:[#allocation2 + $0x48] sm:$0xff] 0.0
        %315 = vst [vmem:[#allocation2 + $0x50] sm:$0xff] 0.0
        %316 = vst [vmem:[#allocation2 + $0x58] sm:$0xff] 0.0
        %317 = vst [vmem:[#allocation2 + $0x60] sm:$0xff] 0.0
        %318 = vst [vmem:[#allocation2 + $0x68] sm:$0xff] 0.0
        %319 = vst [vmem:[#allocation2 + $0x70] sm:$0xff] 0.0
        %320 = vst [vmem:[#allocation2 + $0x78] sm:$0xff] 0.0
      $region40: #{_lambda_.6} parent=35 // pred_fallthru
        _
      %v321 = vld [vmem:[#allocation2] sm:$0xff]
      %v322 = vld [vmem:[#allocation2 + $0x8] sm:$0xff]
      %v323 = vld [vmem:[#allocation2 + $0x10] sm:$0xff]
      %v324 = vld [vmem:[#allocation2 + $0x18] sm:$0xff]
      %v325 = vld [vmem:[#allocation2 + $0x20] sm:$0xff]
      %v326 = vld [vmem:[#allocation2 + $0x28] sm:$0xff]
      %v327 = vld [vmem:[#allocation2 + $0x30] sm:$0xff]
      %v328 = vld [vmem:[#allocation2 + $0x38] sm:$0xff]
      %v329 = vld [vmem:[#allocation2 + $0x40] sm:$0xff]
      %v330 = vld [vmem:[#allocation2 + $0x48] sm:$0xff]
      %v331 = vld [vmem:[#allocation2 + $0x50] sm:$0xff]
      %v332 = vld [vmem:[#allocation2 + $0x58] sm:$0xff]
      %v333 = vld [vmem:[#allocation2 + $0x60] sm:$0xff]
      %v334 = vld [vmem:[#allocation2 + $0x68] sm:$0xff]
      %v335 = vld [vmem:[#allocation2 + $0x70] sm:$0xff]
      %v336 = vld [vmem:[#allocation2 + $0x78] sm:$0xff]
      %v337 = vld [vmem:[%s274] sm:$0xf]
      %v338 = vld [vmem:[%s274 + $0x4] sm:$0xf]
      %v339 = vld [vmem:[%s274 + $0x8] sm:$0xf]
      %v340 = vld [vmem:[%s274 + $0xc] sm:$0xf]
      %v341 = vld [vmem:[%s274 + $0x10] sm:$0xf]
      %v342 = vld [vmem:[%s274 + $0x14] sm:$0xf]
      %v343 = vld [vmem:[%s274 + $0x18] sm:$0xf]
      %v344 = vld [vmem:[%s274 + $0x1c] sm:$0xf]
      %v345 = vld [vmem:[%s274 + $0x20] sm:$0xf]
      %v346 = vld [vmem:[%s274 + $0x24] sm:$0xf]
      %v347 = vld [vmem:[%s274 + $0x28] sm:$0xf]
      %v348 = vld [vmem:[%s274 + $0x2c] sm:$0xf]
      %v349 = vld [vmem:[%s274 + $0x30] sm:$0xf]
      %v350 = vld [vmem:[%s274 + $0x34] sm:$0xf]
      %v351 = vld [vmem:[%s274 + $0x38] sm:$0xf]
      %v352 = vld [vmem:[%s274 + $0x3c] sm:$0xf]
      %v353 = vld [vmem:[%s283] sm:$0xf]
      %v354 = vld [vmem:[%s283 + $0x4] sm:$0xf]
      %v355 = vld [vmem:[%s283 + $0x8] sm:$0xf]
      %v356 = vld [vmem:[%s283 + $0xc] sm:$0xf]
      %v357 = vld [vmem:[%s283 + $0x10] sm:$0xf]
      %v358 = vld [vmem:[%s283 + $0x14] sm:$0xf]
      %v359 = vld [vmem:[%s283 + $0x18] sm:$0xf]
      %v360 = vld [vmem:[%s283 + $0x1c] sm:$0xf]
      %v361 = vld [vmem:[%s283 + $0x20] sm:$0xf]
      %v362 = vld [vmem:[%s283 + $0x24] sm:$0xf]
      %v363 = vld [vmem:[%s283 + $0x28] sm:$0xf]
      %v364 = vld [vmem:[%s283 + $0x2c] sm:$0xf]
      %v365 = vld [vmem:[%s283 + $0x30] sm:$0xf]
      %v366 = vld [vmem:[%s283 + $0x34] sm:$0xf]
      %v367 = vld [vmem:[%s283 + $0x38] sm:$0xf]
      %v368 = vld [vmem:[%s283 + $0x3c] sm:$0xf]
      %v385 = vunpack.c.l.b16 %v337
      %v386 = vunpack.c.l.b16 %v338
      %v387 = vunpack.c.l.b16 %v339
      %v388 = vunpack.c.l.b16 %v340
      %v389 = vunpack.c.l.b16 %v341
      %v390 = vunpack.c.l.b16 %v342
      %v391 = vunpack.c.l.b16 %v343
      %v392 = vunpack.c.l.b16 %v344
      %v393 = vunpack.c.l.b16 %v345
      %v394 = vunpack.c.l.b16 %v346
      %v395 = vunpack.c.l.b16 %v347
      %v396 = vunpack.c.l.b16 %v348
      %v397 = vunpack.c.l.b16 %v349
      %v398 = vunpack.c.l.b16 %v350
      %v399 = vunpack.c.l.b16 %v351
      %v400 = vunpack.c.l.b16 %v352
      %v401 = vpack.c.b16 %v386, %v385
      %v402 = vpack.c.b16 %v388, %v387
      %v403 = vpack.c.b16 %v390, %v389
      %v404 = vpack.c.b16 %v392, %v391
      %v405 = vpack.c.b16 %v394, %v393
      %v406 = vpack.c.b16 %v396, %v395
      %v407 = vpack.c.b16 %v398, %v397
      %v408 = vpack.c.b16 %v400, %v399
      %v433 = vunpack.c.l.b16 %v353
      %v434 = vunpack.c.l.b16 %v354
      %v435 = vunpack.c.l.b16 %v355
      %v436 = vunpack.c.l.b16 %v356
      %v437 = vunpack.c.l.b16 %v357
      %v438 = vunpack.c.l.b16 %v358
      %v439 = vunpack.c.l.b16 %v359
      %v440 = vunpack.c.l.b16 %v360
      %v441 = vunpack.c.l.b16 %v361
      %v442 = vunpack.c.l.b16 %v362
      %v443 = vunpack.c.l.b16 %v363
      %v444 = vunpack.c.l.b16 %v364
      %v445 = vunpack.c.l.b16 %v365
      %v446 = vunpack.c.l.b16 %v366
      %v447 = vunpack.c.l.b16 %v367
      %v448 = vunpack.c.l.b16 %v368
      %v449 = vpack.c.b16 %v434, %v433
      %v450 = vpack.c.b16 %v436, %v435
      %v451 = vpack.c.b16 %v438, %v437
      %v452 = vpack.c.b16 %v440, %v439
      %v453 = vpack.c.b16 %v442, %v441
      %v454 = vpack.c.b16 %v444, %v443
      %v455 = vpack.c.b16 %v446, %v445
      %v456 = vpack.c.b16 %v448, %v447
      %465 = vmatprep.subr.bf16.mxu0 0
      %466 = vmatpush1.bf16.msra.mxu0 %v449
      %467 = vmatprep.subr.bf16.mxu0 0
      %468 = vmatpush1.bf16.msra.mxu0 %v450
      %469 = vmatprep.subr.bf16.mxu0 0
      %470 = vmatpush1.bf16.msra.mxu0 %v451
      %471 = vmatprep.subr.bf16.mxu0 0
      %472 = vmatpush1.bf16.msra.mxu0 %v452
      %473 = vmatprep.subr.bf16.mxu0 0
      %474 = vmatpush1.bf16.msra.mxu0 %v453
      %475 = vmatprep.subr.bf16.mxu0 0
      %476 = vmatpush1.bf16.msra.mxu0 %v454
      %477 = vmatprep.subr.bf16.mxu0 0
      %478 = vmatpush1.bf16.msra.mxu0 %v455
      %479 = vmatprep.subr.bf16.mxu0 0
      %480 = vmatpush1.bf16.msra.mxu0 %v456
      %481 = vmatprep.subr.bf16.mxu0 0
      %482 = vmatpush1.bf16.msra.mxu0 0
      %483 = vmatprep.subr.bf16.mxu0 0
      %484 = vmatpush1.bf16.msra.mxu0 0
      %485 = vmatprep.subr.bf16.mxu0 0
      %486 = vmatpush1.bf16.msra.mxu0 0
      %487 = vmatprep.subr.bf16.mxu0 0
      %488 = vmatpush1.bf16.msra.mxu0 0
      %489 = vmatprep.subr.bf16.mxu0 0
      %490 = vmatpush1.bf16.msra.mxu0 0
      %491 = vmatprep.subr.bf16.mxu0 0
      %492 = vmatpush1.bf16.msra.mxu0 0
      %493 = vmatprep.subr.bf16.mxu0 0
      %494 = vmatpush1.bf16.msra.mxu0 0
      %495 = vmatprep.subr.bf16.mxu0 0
      %496 = vmatpush1.bf16.msra.mxu0 0
      %497 = vmatprep.mubr.bf16.mxu0 0
      %498 = vmatmul.mubr.bf16.gmra.mrb[0].mxu0 %v401
      %v499 = vpop.f32.mrb[0].mxu0
      %v500 = vadd.f32 0.0, %v499
      %v501 = vpop.f32.mrb[0].mxu0
      %v502 = vpop.f32.mrb[0].mxu0
      %v503 = vadd.f32 0.0, %v502
      %v504 = vpop.f32.mrb[0].mxu0
      %505 = vmatprep.mubr.bf16.mxu0 0
      %506 = vmatmul.mubr.bf16.gmra.mrb[0].mxu0 %v402
      %v507 = vpop.f32.mrb[0].mxu0
      %v508 = vadd.f32 0.0, %v507
      %v509 = vpop.f32.mrb[0].mxu0
      %v510 = vpop.f32.mrb[0].mxu0
      %v511 = vadd.f32 0.0, %v510
      %v512 = vpop.f32.mrb[0].mxu0
      %513 = vmatprep.mubr.bf16.mxu0 0
      %514 = vmatmul.mubr.bf16.gmra.mrb[0].mxu0 %v403
      %v515 = vpop.f32.mrb[0].mxu0
      %v516 = vadd.f32 0.0, %v515
      %v517 = vpop.f32.mrb[0].mxu0
      %v518 = vpop.f32.mrb[0].mxu0
      %v519 = vadd.f32 0.0, %v518
      %v520 = vpop.f32.mrb[0].mxu0
      %521 = vmatprep.mubr.bf16.mxu0 0
      %522 = vmatmul.mubr.bf16.gmra.mrb[0].mxu0 %v404
      %v523 = vpop.f32.mrb[0].mxu0
      %v524 = vadd.f32 0.0, %v523
      %v525 = vpop.f32.mrb[0].mxu0
      %v526 = vpop.f32.mrb[0].mxu0
      %v527 = vadd.f32 0.0, %v526
      %v528 = vpop.f32.mrb[0].mxu0
      %529 = vmatprep.mubr.bf16.mxu0 0
      %530 = vmatmul.mubr.bf16.gmra.mrb[0].mxu0 %v405
      %v531 = vpop.f32.mrb[0].mxu0
      %v532 = vadd.f32 0.0, %v531
      %v533 = vpop.f32.mrb[0].mxu0
      %v534 = vpop.f32.mrb[0].mxu0
      %v535 = vadd.f32 0.0, %v534
      %v536 = vpop.f32.mrb[0].mxu0
      %537 = vmatprep.mubr.bf16.mxu0 0
      %538 = vmatmul.mubr.bf16.gmra.mrb[0].mxu0 %v406
      %v539 = vpop.f32.mrb[0].mxu0
      %v540 = vadd.f32 0.0, %v539
      %v541 = vpop.f32.mrb[0].mxu0
      %v542 = vpop.f32.mrb[0].mxu0
      %v543 = vadd.f32 0.0, %v542
      %v544 = vpop.f32.mrb[0].mxu0
      %545 = vmatprep.mubr.bf16.mxu0 0
      %546 = vmatmul.mubr.bf16.gmra.mrb[0].mxu0 %v407
      %v547 = vpop.f32.mrb[0].mxu0
      %v548 = vadd.f32 0.0, %v547
      %v549 = vpop.f32.mrb[0].mxu0
      %v550 = vpop.f32.mrb[0].mxu0
      %v551 = vadd.f32 0.0, %v550
      %v552 = vpop.f32.mrb[0].mxu0
      %553 = vmatprep.mubr.bf16.mxu0 0
      %554 = vmatmul.mubr.bf16.gmra.mrb[0].mxu0 %v408
      %v555 = vpop.f32.mrb[0].mxu0
      %v556 = vadd.f32 0.0, %v555
      %v557 = vpop.f32.mrb[0].mxu0
      %v558 = vpop.f32.mrb[0].mxu0
      %v559 = vadd.f32 0.0, %v558
      %v560 = vpop.f32.mrb[0].mxu0
      %561 = vdwg.mxu0
      %v562 = vadd.f32 %v321, %v500
      %v563 = vadd.f32 %v322, %v503
      %v564 = vadd.f32 %v323, %v508
      %v565 = vadd.f32 %v324, %v511
      %v566 = vadd.f32 %v325, %v516
      %v567 = vadd.f32 %v326, %v519
      %v568 = vadd.f32 %v327, %v524
      %v569 = vadd.f32 %v328, %v527
      %v570 = vadd.f32 %v329, %v532
      %v571 = vadd.f32 %v330, %v535
      %v572 = vadd.f32 %v331, %v540
      %v573 = vadd.f32 %v332, %v543
      %v574 = vadd.f32 %v333, %v548
      %v575 = vadd.f32 %v334, %v551
      %v576 = vadd.f32 %v335, %v556
      %v577 = vadd.f32 %v336, %v559
      %578 = vst [vmem:[#allocation2] sm:$0xff] %v562
      %579 = vst [vmem:[#allocation2 + $0x8] sm:$0xff] %v563
      %580 = vst [vmem:[#allocation2 + $0x10] sm:$0xff] %v564
      %581 = vst [vmem:[#allocation2 + $0x18] sm:$0xff] %v565
      %582 = vst [vmem:[#allocation2 + $0x20] sm:$0xff] %v566
      %583 = vst [vmem:[#allocation2 + $0x28] sm:$0xff] %v567
      %584 = vst [vmem:[#allocation2 + $0x30] sm:$0xff] %v568
      %585 = vst [vmem:[#allocation2 + $0x38] sm:$0xff] %v569
      %586 = vst [vmem:[#allocation2 + $0x40] sm:$0xff] %v570
      %587 = vst [vmem:[#allocation2 + $0x48] sm:$0xff] %v571
      %588 = vst [vmem:[#allocation2 + $0x50] sm:$0xff] %v572
      %589 = vst [vmem:[#allocation2 + $0x58] sm:$0xff] %v573
      %590 = vst [vmem:[#allocation2 + $0x60] sm:$0xff] %v574
      %591 = vst [vmem:[#allocation2 + $0x68] sm:$0xff] %v575
      %592 = vst [vmem:[#allocation2 + $0x70] sm:$0xff] %v576
      %593 = vst [vmem:[#allocation2 + $0x78] sm:$0xff] %v577
      // Predicated region
      $region41: #{_lambda_.6} parent=35 // pred_check
        %p594 = pneg %p301
      $region42: #{_lambda_.6} parent=35 // pred_check_branch
        %596 = sbr.rel (%p594) target = $region44
      $region43: #{_lambda_.6} parent=35 // pred_region
        %v597 = vld [vmem:[#allocation2] sm:$0xff]
        %v598 = vld [vmem:[#allocation2 + $0x8] sm:$0xff]
        %v599 = vld [vmem:[#allocation2 + $0x10] sm:$0xff]
        %v600 = vld [vmem:[#allocation2 + $0x18] sm:$0xff]
        %v601 = vld [vmem:[#allocation2 + $0x20] sm:$0xff]
        %v602 = vld [vmem:[#allocation2 + $0x28] sm:$0xff]
        %v603 = vld [vmem:[#allocation2 + $0x30] sm:$0xff]
        %v604 = vld [vmem:[#allocation2 + $0x38] sm:$0xff]
        %v605 = vld [vmem:[#allocation2 + $0x40] sm:$0xff]
        %v606 = vld [vmem:[#allocation2 + $0x48] sm:$0xff]
        %v607 = vld [vmem:[#allocation2 + $0x50] sm:$0xff]
        %v608 = vld [vmem:[#allocation2 + $0x58] sm:$0xff]
        %v609 = vld [vmem:[#allocation2 + $0x60] sm:$0xff]
        %v610 = vld [vmem:[#allocation2 + $0x68] sm:$0xff]
        %v611 = vld [vmem:[#allocation2 + $0x70] sm:$0xff]
        %v612 = vld [vmem:[#allocation2 + $0x78] sm:$0xff]
        %v613 = vld [vmem:[%s287] sm:$0x1]
        %v615 = vlaneseq
        %v616 = vshrl.u32 %v615, 7
        %v617 = vsub.s32 0, %v616
        %v618 = vrot.slane %v613, %v617
        %v620 = vmul.f32 %v597, %v618
        %v621 = vmul.f32 %v598, %v618
        %v622 = vmul.f32 %v599, %v618
        %v623 = vmul.f32 %v600, %v618
        %v624 = vmul.f32 %v601, %v618
        %v625 = vmul.f32 %v602, %v618
        %v626 = vmul.f32 %v603, %v618
        %v627 = vmul.f32 %v604, %v618
        %v628 = vmul.f32 %v605, %v618
        %v629 = vmul.f32 %v606, %v618
        %v630 = vmul.f32 %v607, %v618
        %v631 = vmul.f32 %v608, %v618
        %v632 = vmul.f32 %v609, %v618
        %v633 = vmul.f32 %v610, %v618
        %v634 = vmul.f32 %v611, %v618
        %v635 = vmul.f32 %v612, %v618
        %v636 = vld [vmem:[%s290] sm:$0x1]
        %v638 = vlaneseq
        %v639 = vshrl.u32 %v638, 7
        %v640 = vsub.s32 0, %v639
        %v641 = vrot.slane %v636, %v640
        %v643 = vadd.f32 %v620, %v641
        %v644 = vadd.f32 %v621, %v641
        %v645 = vadd.f32 %v622, %v641
        %v646 = vadd.f32 %v623, %v641
        %v647 = vadd.f32 %v624, %v641
        %v648 = vadd.f32 %v625, %v641
        %v649 = vadd.f32 %v626, %v641
        %v650 = vadd.f32 %v627, %v641
        %v651 = vadd.f32 %v628, %v641
        %v652 = vadd.f32 %v629, %v641
        %v653 = vadd.f32 %v630, %v641
        %v654 = vadd.f32 %v631, %v641
        %v655 = vadd.f32 %v632, %v641
        %v656 = vadd.f32 %v633, %v641
        %v657 = vadd.f32 %v634, %v641
        %v658 = vadd.f32 %v635, %v641
        %v659 = vpack.c.bf16 %v644, %v643
        %v660 = vpack.c.bf16 %v646, %v645
        %v661 = vpack.c.bf16 %v648, %v647
        %v662 = vpack.c.bf16 %v650, %v649
        %v663 = vpack.c.bf16 %v652, %v651
        %v664 = vpack.c.bf16 %v654, %v653
        %v665 = vpack.c.bf16 %v656, %v655
        %v666 = vpack.c.bf16 %v658, %v657
        %v675 = vunpack.c.l.b16 %v659
        %v676 = vunpack.c.h.b16 %v659
        %v677 = vunpack.c.l.b16 %v660
        %v678 = vunpack.c.h.b16 %v660
        %v679 = vunpack.c.l.b16 %v661
        %v680 = vunpack.c.h.b16 %v661
        %v681 = vunpack.c.l.b16 %v662
        %v682 = vunpack.c.h.b16 %v662
        %v683 = vunpack.c.l.b16 %v663
        %v684 = vunpack.c.h.b16 %v663
        %v685 = vunpack.c.l.b16 %v664
        %v686 = vunpack.c.h.b16 %v664
        %v687 = vunpack.c.l.b16 %v665
        %v688 = vunpack.c.h.b16 %v665
        %v689 = vunpack.c.l.b16 %v666
        %v690 = vunpack.c.h.b16 %v666
        %v691 = vpack.c.b16 %v675, %v675
        %v692 = vpack.c.b16 %v676, %v676
        %v693 = vpack.c.b16 %v677, %v677
        %v694 = vpack.c.b16 %v678, %v678
        %v695 = vpack.c.b16 %v679, %v679
        %v696 = vpack.c.b16 %v680, %v680
        %v697 = vpack.c.b16 %v681, %v681
        %v698 = vpack.c.b16 %v682, %v682
        %v699 = vpack.c.b16 %v683, %v683
        %v700 = vpack.c.b16 %v684, %v684
        %v701 = vpack.c.b16 %v685, %v685
        %v702 = vpack.c.b16 %v686, %v686
        %v703 = vpack.c.b16 %v687, %v687
        %v704 = vpack.c.b16 %v688, %v688
        %v705 = vpack.c.b16 %v689, %v689
        %v706 = vpack.c.b16 %v690, %v690
        %723 = vst [vmem:[%s298] sm:$0xf] %v691
        %724 = vst [vmem:[%s298 + $0x4] sm:$0xf] %v692
        %725 = vst [vmem:[%s298 + $0x8] sm:$0xf] %v693
        %726 = vst [vmem:[%s298 + $0xc] sm:$0xf] %v694
        %727 = vst [vmem:[%s298 + $0x10] sm:$0xf] %v695
        %728 = vst [vmem:[%s298 + $0x14] sm:$0xf] %v696
        %729 = vst [vmem:[%s298 + $0x18] sm:$0xf] %v697
        %730 = vst [vmem:[%s298 + $0x1c] sm:$0xf] %v698
        %731 = vst [vmem:[%s298 + $0x20] sm:$0xf] %v699
        %732 = vst [vmem:[%s298 + $0x24] sm:$0xf] %v700
        %733 = vst [vmem:[%s298 + $0x28] sm:$0xf] %v701
        %734 = vst [vmem:[%s298 + $0x2c] sm:$0xf] %v702
        %735 = vst [vmem:[%s298 + $0x30] sm:$0xf] %v703
        %736 = vst [vmem:[%s298 + $0x34] sm:$0xf] %v704
        %737 = vst [vmem:[%s298 + $0x38] sm:$0xf] %v705
        %738 = vst [vmem:[%s298 + $0x3c] sm:$0xf] %v706
      $region44: #{_lambda_.6} parent=35 // pred_fallthru
        _
      %s739 = smul.u32 16, %s20
      %p740 = scmp.lt.s32.totalorder %s739, 63
      %s741 = scalar_select %p740, %s739, 63
      %p742 = scmp.lt.s32.totalorder %s21, 0
      %s743 = scalar_select %p742, %s21, 0
      %s744 = sadd.s32 %s743, %s741
      %s745 = smul.addr %s744, 4
      %s746 = scalar_lea.vmem %s4, %s745
      // Predicated region
      $region45: #{_lambda_.6} parent=35 // pred_check
        %p747 = pneg %p162
      $region46: #{_lambda_.6} parent=35 // pred_check_branch
        %749 = sbr.rel (%p747) target = $region48
      $region47: #{_lambda_.6} parent=35 // pred_region
        %s750 = smul.u32 16, %s20
      $region48: #{_lambda_.6} parent=35 // pred_fallthru
        _
    $region36: #{_lambda_.6} parent=5 // pred_fallthru
      _
    %p751 = scmp.le.s32.totalorder 2, %s10
    // Predicated region
    $region49: #{_lambda_.6} parent=5 // pred_check
      %p752 = pneg %p751
    $region50: #{_lambda_.6} parent=5 // pred_check_branch
      %754 = sbr.rel (%p752) target = $region52
    $region51: #{_lambda_.6} parent=5 // pred_region
      %s755 = ssub.s32 %s10, 2
      // Predicated region
      $region53: #{_lambda_.6} parent=51 // pred_check
        %p756 = pneg %p168
      $region54: #{_lambda_.6} parent=51 // pred_check_branch
        %758 = sbr.rel (%p756) target = $region56
      $region55: #{_lambda_.6} parent=51 // pred_region
        %s759 = smul.u32 16, %s23
        %p760 = scmp.lt.s32.totalorder %s759, 63
        %s761 = scalar_select %p760, %s759, 63
        %p762 = scmp.lt.s32.totalorder %s24, 0
        %s763 = scalar_select %p762, %s24, 0
        %s764 = sadd.s32 %s763, %s761
        %s765 = smul.addr %s764, 4
        %s766 = scalar_lea.vmem %s4, %s765
      $region56: #{_lambda_.6} parent=51 // pred_fallthru
        _
    $region52: #{_lambda_.6} parent=5 // pred_fallthru
      _
  $region6: #{_lambda_.6} parent=0 // loop_footer
    %s14 = sadd.s32 1, %s10
  $region7: #{_lambda_.6} parent=0 // loop_footer_branch
    %9 = sbr.rel target = $region3
  $region8: #{_lambda_.6} parent=0 // loop_exit
    _

// kernel: _lambda_.4
$region0: #{_lambda_.4}
  #allocation0 [shape = 'u32[]', space=smem, size = 0x4, offset = 0x4, fixed_abs, tag = 'smem constant byte address 0x4 - core index']
  #allocation1 [shape = 'u32[144,128]{1,0:T(1,128)}', space=vmem, size = 0x12000, scoped, tag = 'internal scratch']
  #allocation2 [shape = 'f32[128,128]{1,0:T(8,128)}', space=vmem, size = 0x10000, scoped, tag = 'scratch operand']
  %s0 = inlined_call_operand.vmem [shape: bf16[512,128], index: 0, kind: input, shape index: {}]
  %s1 = inlined_call_operand.vmem [shape: bf16[128,128], index: 1, kind: input, shape index: {}]
  %s2 = inlined_call_operand.vmem [shape: f32[1,128], index: 2, kind: input, shape index: {}]
  %s3 = inlined_call_operand.vmem [shape: f32[1,128], index: 3, kind: input, shape index: {}]
  %s4 = inlined_call_operand.vmem [shape: bf16[512,128], index: 4, kind: output, shape index: {}]
  %s5 = sld [smem:[#allocation0]]
  $region57: #{_lambda_.4} parent=0
    _
  %s7 = ssub.s32 1, %s5
  %s8 = scalar_select 0, %s7, %s5
  loop: start=0, step=1, limit=6
  $region2: #{_lambda_.4} parent=0 // loop_pre_header
    _
  $region3: #{_lambda_.4} parent=0 // loop_header
    %s10 = sphi 0, %s14
    %p11 = scmp.ge.s32.totalorder %s10, 6
    %s17 = sphi 0, %s36
    %s18 = sphi 0, %s32
    %s19 = sphi 0, %s28
    %s20 = sphi 0, %s17
    %s21 = sphi 0, %s18
    %s22 = sphi 0, %s19
    %s23 = sphi 0, %s20
    %s24 = sphi 0, %s21
    %s25 = sphi 0, %s22
    %s41 = sphi 0, %s43
    %s44 = sphi 0, %s41
    %s45 = sphi 0, %s44
    %s61 = sphi 0, %s45
    %s69 = sphi 0, %s71
    %s72 = sphi 0, %s69
    %s73 = sphi 0, %s72
    %s89 = sphi 0, %s73
    %s95 = sphi 0, %s97
    %s98 = sphi 0, %s95
    %s99 = sphi 0, %s98
    %s115 = sphi 0, %s99
    %s121 = sphi 0, %s123
    %s124 = sphi 0, %s121
    %s125 = sphi 0, %s124
    %s141 = sphi 0, %s125
    %s149 = sphi 0, %s151
    %s152 = sphi 0, %s149
    %s153 = sphi 0, %s152
    %s169 = sphi 0, %s153
  $region4: #{_lambda_.4} parent=0 // loop_header_branch
    %13 = sbr.rel (%p11) target = $region8
  $region5: #{_lambda_.4} parent=0 // loop_body
    %s15 = ssub.s32 %s10, 1
    %s16 = ssub.s32 %s10, 2
    %s26 = sadd.s32 1, %s19
    %p27 = scmp.ge.s32.totalorder %s26, 1
    %s28 = scalar_select %p27, 0, %s26
    %s29 = sadd.s32 1, %s18
    %s30 = scalar_select %p27, %s29, %s18
    %p31 = scmp.ge.s32.totalorder %s30, 1
    %s32 = scalar_select %p31, 0, %s30
    %s33 = sadd.s32 1, %s17
    %s34 = scalar_select %p31, %s33, %s17
    %p35 = scmp.ge.s32.totalorder %s34, 4
    %s36 = scalar_select %p35, 0, %s34
    %s37 = ssub.s32 %s17, %s36
    %s38 = ssub.s32 %s19, %s28
    %s39 = sor.u32 %s37, %s38
    %p40 = scmp.eq.s32.totalorder %s39, 0
    %s42 = sadd.s32 %s41, 1
    %s43 = scalar_select %p40, %s41, %s42
    %p46 = pneg %p40
    %p47 = scmp.eq.s32.totalorder %s10, 3
    %p48 = por %p46, %p47
    %p49 = scmp.ne.s32.totalorder %s41, %s44
    %p50 = scmp.eq.s32.totalorder %s10, 0
    %p51 = por %p49, %p50
    %p52 = scmp.ne.s32.totalorder %s41, %s44
    %p53 = scmp.eq.s32.totalorder %s15, 3
    %p54 = por %p52, %p53
    %p55 = scmp.ne.s32.totalorder %s44, %s45
    %p56 = scmp.eq.s32.totalorder %s15, 0
    %p57 = por %p55, %p56
    %p58 = scmp.ne.s32.totalorder %s44, %s45
    %p59 = scmp.eq.s32.totalorder %s16, 3
    %p60 = por %p58, %p59
    %p62 = scmp.ne.s32.totalorder %s45, %s61
    %p63 = scmp.eq.s32.totalorder %s16, 0
    %p64 = por %p62, %p63
    %s65 = ssub.s32 %s19, %s28
    %s66 = ssub.s32 %s18, %s32
    %s67 = sor.u32 %s65, %s66
    %p68 = scmp.eq.s32.totalorder %s67, 0
    %s70 = sadd.s32 %s69, 1
    %s71 = scalar_select %p68, %s69, %s70
    %p74 = pneg %p68
    %p75 = scmp.eq.s32.totalorder %s10, 3
    %p76 = por %p74, %p75
    %p77 = scmp.ne.s32.totalorder %s69, %s72
    %p78 = scmp.eq.s32.totalorder %s10, 0
    %p79 = por %p77, %p78
    %p80 = scmp.ne.s32.totalorder %s69, %s72
    %p81 = scmp.eq.s32.totalorder %s15, 3
    %p82 = por %p80, %p81
    %p83 = scmp.ne.s32.totalorder %s72, %s73
    %p84 = scmp.eq.s32.totalorder %s15, 0
    %p85 = por %p83, %p84
    %p86 = scmp.ne.s32.totalorder %s72, %s73
    %p87 = scmp.eq.s32.totalorder %s16, 3
    %p88 = por %p86, %p87
    %p90 = scmp.ne.s32.totalorder %s73, %s89
    %p91 = scmp.eq.s32.totalorder %s16, 0
    %p92 = por %p90, %p91
    %s93 = ssub.s32 %s18, %s32
    %p94 = scmp.eq.s32.totalorder %s93, 0
    %s96 = sadd.s32 %s95, 1
    %s97 = scalar_select %p94, %s95, %s96
    %p100 = pneg %p94
    %p101 = scmp.eq.s32.totalorder %s10, 3
    %p102 = por %p100, %p101
    %p103 = scmp.ne.s32.totalorder %s95, %s98
    %p104 = scmp.eq.s32.totalorder %s10, 0
    %p105 = por %p103, %p104
    %p106 = scmp.ne.s32.totalorder %s95, %s98
    %p107 = scmp.eq.s32.totalorder %s15, 3
    %p108 = por %p106, %p107
    %p109 = scmp.ne.s32.totalorder %s98, %s99
    %p110 = scmp.eq.s32.totalorder %s15, 0
    %p111 = por %p109, %p110
    %p112 = scmp.ne.s32.totalorder %s98, %s99
    %p113 = scmp.eq.s32.totalorder %s16, 3
    %p114 = por %p112, %p113
    %p116 = scmp.ne.s32.totalorder %s99, %s115
    %p117 = scmp.eq.s32.totalorder %s16, 0
    %p118 = por %p116, %p117
    %s119 = ssub.s32 %s18, %s32
    %p120 = scmp.eq.s32.totalorder %s119, 0
    %s122 = sadd.s32 %s121, 1
    %s123 = scalar_select %p120, %s121, %s122
    %p126 = pneg %p120
    %p127 = scmp.eq.s32.totalorder %s10, 3
    %p128 = por %p126, %p127
    %p129 = scmp.ne.s32.totalorder %s121, %s124
    %p130 = scmp.eq.s32.totalorder %s10, 0
    %p131 = por %p129, %p130
    %p132 = scmp.ne.s32.totalorder %s121, %s124
    %p133 = scmp.eq.s32.totalorder %s15, 3
    %p134 = por %p132, %p133
    %p135 = scmp.ne.s32.totalorder %s124, %s125
    %p136 = scmp.eq.s32.totalorder %s15, 0
    %p137 = por %p135, %p136
    %p138 = scmp.ne.s32.totalorder %s124, %s125
    %p139 = scmp.eq.s32.totalorder %s16, 3
    %p140 = por %p138, %p139
    %p142 = scmp.ne.s32.totalorder %s125, %s141
    %p143 = scmp.eq.s32.totalorder %s16, 0
    %p144 = por %p142, %p143
    %s145 = ssub.s32 %s17, %s36
    %s146 = ssub.s32 %s18, %s32
    %s147 = sor.u32 %s145, %s146
    %p148 = scmp.eq.s32.totalorder %s147, 0
    %s150 = sadd.s32 %s149, 1
    %s151 = scalar_select %p148, %s149, %s150
    %p154 = pneg %p148
    %p155 = scmp.eq.s32.totalorder %s10, 3
    %p156 = por %p154, %p155
    %p157 = scmp.ne.s32.totalorder %s149, %s152
    %p158 = scmp.eq.s32.totalorder %s10, 0
    %p159 = por %p157, %p158
    %p160 = scmp.ne.s32.totalorder %s149, %s152
    %p161 = scmp.eq.s32.totalorder %s15, 3
    %p162 = por %p160, %p161
    %p163 = scmp.ne.s32.totalorder %s152, %s153
    %p164 = scmp.eq.s32.totalorder %s15, 0
    %p165 = por %p163, %p164
    %p166 = scmp.ne.s32.totalorder %s152, %s153
    %p167 = scmp.eq.s32.totalorder %s16, 3
    %p168 = por %p166, %p167
    %p170 = scmp.ne.s32.totalorder %s153, %s169
    %p171 = scmp.eq.s32.totalorder %s16, 0
    %p172 = por %p170, %p171
    %p173 = scmp.le.s32.totalorder 1, %s10
    %p174 = scmp.lt.s32.totalorder %s10, 5
    %p175 = pnand %p173, %p174
    %p176 = pneg %p175
    // Predicated region
    $region9: #{_lambda_.4} parent=5 // pred_check
      _
    $region10: #{_lambda_.4} parent=5 // pred_check_branch
      %178 = sbr.rel (%p175) target = $region12
    $region11: #{_lambda_.4} parent=5 // pred_region
      %s179 = ssub.s32 %s10, 1
      // Predicated region
      $region13: #{_lambda_.4} parent=11 // pred_check
        %p180 = pneg %p85
      $region14: #{_lambda_.4} parent=11 // pred_check_branch
        %182 = sbr.rel (%p180) target = $region16
      $region15: #{_lambda_.4} parent=11 // pred_region
        %s183 = smul.u32 16, %s22
        %p184 = scmp.lt.s32.totalorder %s183, 15
        %s185 = scalar_select %p184, %s183, 15
        %p186 = scmp.lt.s32.totalorder %s21, 0
        %s187 = scalar_select %p186, %s21, 0
        %s188 = sadd.s32 %s187, %s185
        %s189 = smul.addr %s188, 4
        %s190 = scalar_lea.vmem %s1, %s189
        %s191 = smul.u32 16, %s22
      $region16: #{_lambda_.4} parent=11 // pred_fallthru
        _
      // Predicated region
      $region17: #{_lambda_.4} parent=11 // pred_check
        %p192 = pneg %p111
      $region18: #{_lambda_.4} parent=11 // pred_check_branch
        %194 = sbr.rel (%p192) target = $region20
      $region19: #{_lambda_.4} parent=11 // pred_region
        %p195 = scmp.lt.s32.totalorder %s21, 0
        %s196 = scalar_select %p195, %s21, 0
        %s197 = scalar_lea.vmem %s2, %s196
      $region20: #{_lambda_.4} parent=11 // pred_fallthru
        _
      // Predicated region
      $region21: #{_lambda_.4} parent=11 // pred_check
        %p198 = pneg %p137
      $region22: #{_lambda_.4} parent=11 // pred_check_branch
        %200 = sbr.rel (%p198) target = $region24
      $region23: #{_lambda_.4} parent=11 // pred_region
        %p201 = scmp.lt.s32.totalorder %s21, 0
        %s202 = scalar_select %p201, %s21, 0
        %s203 = scalar_lea.vmem %s3, %s202
      $region24: #{_lambda_.4} parent=11 // pred_fallthru
        _
    $region12: #{_lambda_.4} parent=5 // pred_fallthru
      _
    %p204 = scmp.lt.s32.totalorder %s10, 4
    // Predicated region
    $region25: #{_lambda_.4} parent=5 // pred_check
      %p205 = pneg %p204
    $region26: #{_lambda_.4} parent=5 // pred_check_branch
      %207 = sbr.rel (%p205) target = $region28
    $region27: #{_lambda_.4} parent=5 // pred_region
      // Predicated region
      $region29: #{_lambda_.4} parent=27 // pred_check
        %p208 = pneg %p51
      $region30: #{_lambda_.4} parent=27 // pred_check_branch
        %210 = sbr.rel (%p208) target = $region32
      $region31: #{_lambda_.4} parent=27 // pred_region
        %s211 = smul.u32 16, %s17
        %p212 = scmp.lt.s32.totalorder %s211, 63
        %s213 = scalar_select %p212, %s211, 63
        %p214 = scmp.lt.s32.totalorder %s19, 0
        %s215 = scalar_select %p214, %s19, 0
        %s216 = sadd.s32 %s215, %s213
        %s217 = smul.addr %s216, 4
        %s218 = scalar_lea.vmem %s0, %s217
        %s219 = smul.u32 16, %s17
      $region32: #{_lambda_.4} parent=27 // pred_fallthru
        _
    $region28: #{_lambda_.4} parent=5 // pred_fallthru
      _
    %p220 = scmp.le.s32.totalorder 1, %s10
    %p221 = scmp.lt.s32.totalorder %s10, 5
    %p222 = pnand %p220, %p221
    %p223 = pneg %p222
    // Predicated region
    $region33: #{_lambda_.4} parent=5 // pred_check
      _
    $region34: #{_lambda_.4} parent=5 // pred_check_branch
      %225 = sbr.rel (%p222) target = $region36
    $region35: #{_lambda_.4} parent=5 // pred_region
      %s226 = ssub.s32 %s10, 1
      %s227 = smul.u32 16, %s20
      %p228 = scmp.lt.s32.totalorder %s227, 63
      %s229 = scalar_select %p228, %s227, 63
      %p230 = scmp.lt.s32.totalorder %s22, 0
      %s231 = scalar_select %p230, %s22, 0
      %s232 = sadd.s32 %s231, %s229
      %s233 = smul.addr %s232, 4
      %s234 = scalar_lea.vmem %s0, %s233
      %p235 = pneg %p57
      %p236 = pneg %p54
      %s237 = smul.u32 16, %s22
      %p238 = scmp.lt.s32.totalorder %s237, 15
      %s239 = scalar_select %p238, %s237, 15
      %p240 = scmp.lt.s32.totalorder %s21, 0
      %s241 = scalar_select %p240, %s21, 0
      %s242 = sadd.s32 %s241, %s239
      %s243 = smul.addr %s242, 4
      %s244 = scalar_lea.vmem %s1, %s243
      %p245 = pneg %p85
      %p246 = pneg %p82
      %p247 = scmp.lt.s32.totalorder %s21, 0
      %s248 = scalar_select %p247, %s21, 0
      %s249 = scalar_lea.vmem %s2, %s248
      %p250 = pneg %p111
      %p251 = pneg %p108
      %p252 = scmp.lt.s32.totalorder %s21, 0
      %s253 = scalar_select %p252, %s21, 0
      %s254 = scalar_lea.vmem %s3, %s253
      %p255 = pneg %p137
      %p256 = pneg %p134
      %p257 = pneg %p165
      %p258 = pneg %p162
      %s259 = smul.u32 16, %s20
      %p260 = scmp.lt.s32.totalorder %s259, 63
      %s261 = scalar_select %p260, %s259, 63
      %p262 = scmp.lt.s32.totalorder %s21, 0
      %s263 = scalar_select %p262, %s21, 0
      %s264 = sadd.s32 %s263, %s261
      %s265 = smul.addr %s264, 4
      %s266 = scalar_lea.vmem %s4, %s265
      %s267 = smul.u32 16, %s20
      %p268 = scmp.lt.s32.totalorder %s267, 63
      %s269 = scalar_select %p268, %s267, 63
      %p270 = scmp.lt.s32.totalorder %s22, 0
      %s271 = scalar_select %p270, %s22, 0
      %s272 = sadd.s32 %s271, %s269
      %s273 = smul.addr %s272, 4
      %s274 = scalar_lea.vmem %s0, %s273
      %s275 = smul.u32 16, %s20
      %s276 = smul.u32 16, %s22
      %p277 = scmp.lt.s32.totalorder %s276, 15
      %s278 = scalar_select %p277, %s276, 15
      %p279 = scmp.lt.s32.totalorder %s21, 0
      %s280 = scalar_select %p279, %s21, 0
      %s281 = sadd.s32 %s280, %s278
      %s282 = smul.addr %s281, 4
      %s283 = scalar_lea.vmem %s1, %s282
      %s284 = smul.u32 16, %s22
      %p285 = scmp.lt.s32.totalorder %s21, 0
      %s286 = scalar_select %p285, %s21, 0
      %s287 = scalar_lea.vmem %s2, %s286
      %p288 = scmp.lt.s32.totalorder %s21, 0
      %s289 = scalar_select %p288, %s21, 0
      %s290 = scalar_lea.vmem %s3, %s289
      %s291 = smul.u32 16, %s20
      %p292 = scmp.lt.s32.totalorder %s291, 63
      %s293 = scalar_select %p292, %s291, 63
      %p294 = scmp.lt.s32.totalorder %s21, 0
      %s295 = scalar_select %p294, %s21, 0
      %s296 = sadd.s32 %s295, %s293
      %s297 = smul.addr %s296, 4
      %s298 = scalar_lea.vmem %s4, %s297
      %s299 = smul.u32 16, %s20
      %p301 = scmp.eq.s32.totalorder %s22, 0
      // Predicated region
      $region37: #{_lambda_.4} parent=35 // pred_check
        %p302 = pneg %p301
      $region38: #{_lambda_.4} parent=35 // pred_check_branch
        %304 = sbr.rel (%p302) target = $region40
      $region39: #{_lambda_.4} parent=35 // pred_region
        %305 = vst [vmem:[#allocation2] sm:$0xff] 0.0
        %306 = vst [vmem:[#allocation2 + $0x8] sm:$0xff] 0.0
        %307 = vst [vmem:[#allocation2 + $0x10] sm:$0xff] 0.0
        %308 = vst [vmem:[#allocation2 + $0x18] sm:$0xff] 0.0
        %309 = vst [vmem:[#allocation2 + $0x20] sm:$0xff] 0.0
        %310 = vst [vmem:[#allocation2 + $0x28] sm:$0xff] 0.0
        %311 = vst [vmem:[#allocation2 + $0x30] sm:$0xff] 0.0
        %312 = vst [vmem:[#allocation2 + $0x38] sm:$0xff] 0.0
        %313 = vst [vmem:[#allocation2 + $0x40] sm:$0xff] 0.0
        %314 = vst [vmem:[#allocation2 + $0x48] sm:$0xff] 0.0
        %315 = vst [vmem:[#allocation2 + $0x50] sm:$0xff] 0.0
        %316 = vst [vmem:[#allocation2 + $0x58] sm:$0xff] 0.0
        %317 = vst [vmem:[#allocation2 + $0x60] sm:$0xff] 0.0
        %318 = vst [vmem:[#allocation2 + $0x68] sm:$0xff] 0.0
        %319 = vst [vmem:[#allocation2 + $0x70] sm:$0xff] 0.0
        %320 = vst [vmem:[#allocation2 + $0x78] sm:$0xff] 0.0
      $region40: #{_lambda_.4} parent=35 // pred_fallthru
        _
      %v321 = vld [vmem:[#allocation2] sm:$0xff]
      %v322 = vld [vmem:[#allocation2 + $0x8] sm:$0xff]
      %v323 = vld [vmem:[#allocation2 + $0x10] sm:$0xff]
      %v324 = vld [vmem:[#allocation2 + $0x18] sm:$0xff]
      %v325 = vld [vmem:[#allocation2 + $0x20] sm:$0xff]
      %v326 = vld [vmem:[#allocation2 + $0x28] sm:$0xff]
      %v327 = vld [vmem:[#allocation2 + $0x30] sm:$0xff]
      %v328 = vld [vmem:[#allocation2 + $0x38] sm:$0xff]
      %v329 = vld [vmem:[#allocation2 + $0x40] sm:$0xff]
      %v330 = vld [vmem:[#allocation2 + $0x48] sm:$0xff]
      %v331 = vld [vmem:[#allocation2 + $0x50] sm:$0xff]
      %v332 = vld [vmem:[#allocation2 + $0x58] sm:$0xff]
      %v333 = vld [vmem:[#allocation2 + $0x60] sm:$0xff]
      %v334 = vld [vmem:[#allocation2 + $0x68] sm:$0xff]
      %v335 = vld [vmem:[#allocation2 + $0x70] sm:$0xff]
      %v336 = vld [vmem:[#allocation2 + $0x78] sm:$0xff]
      %v337 = vld [vmem:[%s274] sm:$0xf]
      %v338 = vld [vmem:[%s274 + $0x4] sm:$0xf]
      %v339 = vld [vmem:[%s274 + $0x8] sm:$0xf]
      %v340 = vld [vmem:[%s274 + $0xc] sm:$0xf]
      %v341 = vld [vmem:[%s274 + $0x10] sm:$0xf]
      %v342 = vld [vmem:[%s274 + $0x14] sm:$0xf]
      %v343 = vld [vmem:[%s274 + $0x18] sm:$0xf]
      %v344 = vld [vmem:[%s274 + $0x1c] sm:$0xf]
      %v345 = vld [vmem:[%s274 + $0x20] sm:$0xf]
      %v346 = vld [vmem:[%s274 + $0x24] sm:$0xf]
      %v347 = vld [vmem:[%s274 + $0x28] sm:$0xf]
      %v348 = vld [vmem:[%s274 + $0x2c] sm:$0xf]
      %v349 = vld [vmem:[%s274 + $0x30] sm:$0xf]
      %v350 = vld [vmem:[%s274 + $0x34] sm:$0xf]
      %v351 = vld [vmem:[%s274 + $0x38] sm:$0xf]
      %v352 = vld [vmem:[%s274 + $0x3c] sm:$0xf]
      %v353 = vld [vmem:[%s283] sm:$0xf]
      %v354 = vld [vmem:[%s283 + $0x4] sm:$0xf]
      %v355 = vld [vmem:[%s283 + $0x8] sm:$0xf]
      %v356 = vld [vmem:[%s283 + $0xc] sm:$0xf]
      %v357 = vld [vmem:[%s283 + $0x10] sm:$0xf]
      %v358 = vld [vmem:[%s283 + $0x14] sm:$0xf]
      %v359 = vld [vmem:[%s283 + $0x18] sm:$0xf]
      %v360 = vld [vmem:[%s283 + $0x1c] sm:$0xf]
      %v361 = vld [vmem:[%s283 + $0x20] sm:$0xf]
      %v362 = vld [vmem:[%s283 + $0x24] sm:$0xf]
      %v363 = vld [vmem:[%s283 + $0x28] sm:$0xf]
      %v364 = vld [vmem:[%s283 + $0x2c] sm:$0xf]
      %v365 = vld [vmem:[%s283 + $0x30] sm:$0xf]
      %v366 = vld [vmem:[%s283 + $0x34] sm:$0xf]
      %v367 = vld [vmem:[%s283 + $0x38] sm:$0xf]
      %v368 = vld [vmem:[%s283 + $0x3c] sm:$0xf]
      %v385 = vunpack.c.l.b16 %v337
      %v386 = vunpack.c.l.b16 %v338
      %v387 = vunpack.c.l.b16 %v339
      %v388 = vunpack.c.l.b16 %v340
      %v389 = vunpack.c.l.b16 %v341
      %v390 = vunpack.c.l.b16 %v342
      %v391 = vunpack.c.l.b16 %v343
      %v392 = vunpack.c.l.b16 %v344
      %v393 = vunpack.c.l.b16 %v345
      %v394 = vunpack.c.l.b16 %v346
      %v395 = vunpack.c.l.b16 %v347
      %v396 = vunpack.c.l.b16 %v348
      %v397 = vunpack.c.l.b16 %v349
      %v398 = vunpack.c.l.b16 %v350
      %v399 = vunpack.c.l.b16 %v351
      %v400 = vunpack.c.l.b16 %v352
      %v401 = vpack.c.b16 %v386, %v385
      %v402 = vpack.c.b16 %v388, %v387
      %v403 = vpack.c.b16 %v390, %v389
      %v404 = vpack.c.b16 %v392, %v391
      %v405 = vpack.c.b16 %v394, %v393
      %v406 = vpack.c.b16 %v396, %v395
      %v407 = vpack.c.b16 %v398, %v397
      %v408 = vpack.c.b16 %v400, %v399
      %v433 = vunpack.c.l.b16 %v353
      %v434 = vunpack.c.l.b16 %v354
      %v435 = vunpack.c.l.b16 %v355
      %v436 = vunpack.c.l.b16 %v356
      %v437 = vunpack.c.l.b16 %v357
      %v438 = vunpack.c.l.b16 %v358
      %v439 = vunpack.c.l.b16 %v359
      %v440 = vunpack.c.l.b16 %v360
      %v441 = vunpack.c.l.b16 %v361
      %v442 = vunpack.c.l.b16 %v362
      %v443 = vunpack.c.l.b16 %v363
      %v444 = vunpack.c.l.b16 %v364
      %v445 = vunpack.c.l.b16 %v365
      %v446 = vunpack.c.l.b16 %v366
      %v447 = vunpack.c.l.b16 %v367
      %v448 = vunpack.c.l.b16 %v368
      %v449 = vpack.c.b16 %v434, %v433
      %v450 = vpack.c.b16 %v436, %v435
      %v451 = vpack.c.b16 %v438, %v437
      %v452 = vpack.c.b16 %v440, %v439
      %v453 = vpack.c.b16 %v442, %v441
      %v454 = vpack.c.b16 %v444, %v443
      %v455 = vpack.c.b16 %v446, %v445
      %v456 = vpack.c.b16 %v448, %v447
      %465 = vmatprep.subr.bf16.mxu0 0
      %466 = vmatpush1.bf16.msra.mxu0 %v449
      %467 = vmatprep.subr.bf16.mxu0 0
      %468 = vmatpush1.bf16.msra.mxu0 %v450
      %469 = vmatprep.subr.bf16.mxu0 0
      %470 = vmatpush1.bf16.msra.mxu0 %v451
      %471 = vmatprep.subr.bf16.mxu0 0
      %472 = vmatpush1.bf16.msra.mxu0 %v452
      %473 = vmatprep.subr.bf16.mxu0 0
      %474 = vmatpush1.bf16.msra.mxu0 %v453
      %475 = vmatprep.subr.bf16.mxu0 0
      %476 = vmatpush1.bf16.msra.mxu0 %v454
      %477 = vmatprep.subr.bf16.mxu0 0
      %478 = vmatpush1.bf16.msra.mxu0 %v455
      %479 = vmatprep.subr.bf16.mxu0 0
      %480 = vmatpush1.bf16.msra.mxu0 %v456
      %481 = vmatprep.subr.bf16.mxu0 0
      %482 = vmatpush1.bf16.msra.mxu0 0
      %483 = vmatprep.subr.bf16.mxu0 0
      %484 = vmatpush1.bf16.msra.mxu0 0
      %485 = vmatprep.subr.bf16.mxu0 0
      %486 = vmatpush1.bf16.msra.mxu0 0
      %487 = vmatprep.subr.bf16.mxu0 0
      %488 = vmatpush1.bf16.msra.mxu0 0
      %489 = vmatprep.subr.bf16.mxu0 0
      %490 = vmatpush1.bf16.msra.mxu0 0
      %491 = vmatprep.subr.bf16.mxu0 0
      %492 = vmatpush1.bf16.msra.mxu0 0
      %493 = vmatprep.subr.bf16.mxu0 0
      %494 = vmatpush1.bf16.msra.mxu0 0
      %495 = vmatprep.subr.bf16.mxu0 0
      %496 = vmatpush1.bf16.msra.mxu0 0
      %497 = vmatprep.mubr.bf16.mxu0 0
      %498 = vmatmul.mubr.bf16.gmra.mrb[0].mxu0 %v401
      %v499 = vpop.f32.mrb[0].mxu0
      %v500 = vadd.f32 0.0, %v499
      %v501 = vpop.f32.mrb[0].mxu0
      %v502 = vpop.f32.mrb[0].mxu0
      %v503 = vadd.f32 0.0, %v502
      %v504 = vpop.f32.mrb[0].mxu0
      %505 = vmatprep.mubr.bf16.mxu0 0
      %506 = vmatmul.mubr.bf16.gmra.mrb[0].mxu0 %v402
      %v507 = vpop.f32.mrb[0].mxu0
      %v508 = vadd.f32 0.0, %v507
      %v509 = vpop.f32.mrb[0].mxu0
      %v510 = vpop.f32.mrb[0].mxu0
      %v511 = vadd.f32 0.0, %v510
      %v512 = vpop.f32.mrb[0].mxu0
      %513 = vmatprep.mubr.bf16.mxu0 0
      %514 = vmatmul.mubr.bf16.gmra.mrb[0].mxu0 %v403
      %v515 = vpop.f32.mrb[0].mxu0
      %v516 = vadd.f32 0.0, %v515
      %v517 = vpop.f32.mrb[0].mxu0
      %v518 = vpop.f32.mrb[0].mxu0
      %v519 = vadd.f32 0.0, %v518
      %v520 = vpop.f32.mrb[0].mxu0
      %521 = vmatprep.mubr.bf16.mxu0 0
      %522 = vmatmul.mubr.bf16.gmra.mrb[0].mxu0 %v404
      %v523 = vpop.f32.mrb[0].mxu0
      %v524 = vadd.f32 0.0, %v523
      %v525 = vpop.f32.mrb[0].mxu0
      %v526 = vpop.f32.mrb[0].mxu0
      %v527 = vadd.f32 0.0, %v526
      %v528 = vpop.f32.mrb[0].mxu0
      %529 = vmatprep.mubr.bf16.mxu0 0
      %530 = vmatmul.mubr.bf16.gmra.mrb[0].mxu0 %v405
      %v531 = vpop.f32.mrb[0].mxu0
      %v532 = vadd.f32 0.0, %v531
      %v533 = vpop.f32.mrb[0].mxu0
      %v534 = vpop.f32.mrb[0].mxu0
      %v535 = vadd.f32 0.0, %v534
      %v536 = vpop.f32.mrb[0].mxu0
      %537 = vmatprep.mubr.bf16.mxu0 0
      %538 = vmatmul.mubr.bf16.gmra.mrb[0].mxu0 %v406
      %v539 = vpop.f32.mrb[0].mxu0
      %v540 = vadd.f32 0.0, %v539
      %v541 = vpop.f32.mrb[0].mxu0
      %v542 = vpop.f32.mrb[0].mxu0
      %v543 = vadd.f32 0.0, %v542
      %v544 = vpop.f32.mrb[0].mxu0
      %545 = vmatprep.mubr.bf16.mxu0 0
      %546 = vmatmul.mubr.bf16.gmra.mrb[0].mxu0 %v407
      %v547 = vpop.f32.mrb[0].mxu0
      %v548 = vadd.f32 0.0, %v547
      %v549 = vpop.f32.mrb[0].mxu0
      %v550 = vpop.f32.mrb[0].mxu0
      %v551 = vadd.f32 0.0, %v550
      %v552 = vpop.f32.mrb[0].mxu0
      %553 = vmatprep.mubr.bf16.mxu0 0
      %554 = vmatmul.mubr.bf16.gmra.mrb[0].mxu0 %v408
      %v555 = vpop.f32.mrb[0].mxu0
      %v556 = vadd.f32 0.0, %v555
      %v557 = vpop.f32.mrb[0].mxu0
      %v558 = vpop.f32.mrb[0].mxu0
      %v559 = vadd.f32 0.0, %v558
      %v560 = vpop.f32.mrb[0].mxu0
      %561 = vdwg.mxu0
      %v562 = vadd.f32 %v321, %v500
      %v563 = vadd.f32 %v322, %v503
      %v564 = vadd.f32 %v323, %v508
      %v565 = vadd.f32 %v324, %v511
      %v566 = vadd.f32 %v325, %v516
      %v567 = vadd.f32 %v326, %v519
      %v568 = vadd.f32 %v327, %v524
      %v569 = vadd.f32 %v328, %v527
      %v570 = vadd.f32 %v329, %v532
      %v571 = vadd.f32 %v330, %v535
      %v572 = vadd.f32 %v331, %v540
      %v573 = vadd.f32 %v332, %v543
      %v574 = vadd.f32 %v333, %v548
      %v575 = vadd.f32 %v334, %v551
      %v576 = vadd.f32 %v335, %v556
      %v577 = vadd.f32 %v336, %v559
      %578 = vst [vmem:[#allocation2] sm:$0xff] %v562
      %579 = vst [vmem:[#allocation2 + $0x8] sm:$0xff] %v563
      %580 = vst [vmem:[#allocation2 + $0x10] sm:$0xff] %v564
      %581 = vst [vmem:[#allocation2 + $0x18] sm:$0xff] %v565
      %582 = vst [vmem:[#allocation2 + $0x20] sm:$0xff] %v566
      %583 = vst [vmem:[#allocation2 + $0x28] sm:$0xff] %v567
      %584 = vst [vmem:[#allocation2 + $0x30] sm:$0xff] %v568
      %585 = vst [vmem:[#allocation2 + $0x38] sm:$0xff] %v569
      %586 = vst [vmem:[#allocation2 + $0x40] sm:$0xff] %v570
      %587 = vst [vmem:[#allocation2 + $0x48] sm:$0xff] %v571
      %588 = vst [vmem:[#allocation2 + $0x50] sm:$0xff] %v572
      %589 = vst [vmem:[#allocation2 + $0x58] sm:$0xff] %v573
      %590 = vst [vmem:[#allocation2 + $0x60] sm:$0xff] %v574
      %591 = vst [vmem:[#allocation2 + $0x68] sm:$0xff] %v575
      %592 = vst [vmem:[#allocation2 + $0x70] sm:$0xff] %v576
      %593 = vst [vmem:[#allocation2 + $0x78] sm:$0xff] %v577
      // Predicated region
      $region41: #{_lambda_.4} parent=35 // pred_check
        %p594 = pneg %p301
      $region42: #{_lambda_.4} parent=35 // pred_check_branch
        %596 = sbr.rel (%p594) target = $region44
      $region43: #{_lambda_.4} parent=35 // pred_region
        %v597 = vld [vmem:[#allocation2] sm:$0xff]
        %v598 = vld [vmem:[#allocation2 + $0x8] sm:$0xff]
        %v599 = vld [vmem:[#allocation2 + $0x10] sm:$0xff]
        %v600 = vld [vmem:[#allocation2 + $0x18] sm:$0xff]
        %v601 = vld [vmem:[#allocation2 + $0x20] sm:$0xff]
        %v602 = vld [vmem:[#allocation2 + $0x28] sm:$0xff]
        %v603 = vld [vmem:[#allocation2 + $0x30] sm:$0xff]
        %v604 = vld [vmem:[#allocation2 + $0x38] sm:$0xff]
        %v605 = vld [vmem:[#allocation2 + $0x40] sm:$0xff]
        %v606 = vld [vmem:[#allocation2 + $0x48] sm:$0xff]
        %v607 = vld [vmem:[#allocation2 + $0x50] sm:$0xff]
        %v608 = vld [vmem:[#allocation2 + $0x58] sm:$0xff]
        %v609 = vld [vmem:[#allocation2 + $0x60] sm:$0xff]
        %v610 = vld [vmem:[#allocation2 + $0x68] sm:$0xff]
        %v611 = vld [vmem:[#allocation2 + $0x70] sm:$0xff]
        %v612 = vld [vmem:[#allocation2 + $0x78] sm:$0xff]
        %v613 = vld [vmem:[%s287] sm:$0x1]
        %v615 = vlaneseq
        %v616 = vshrl.u32 %v615, 7
        %v617 = vsub.s32 0, %v616
        %v618 = vrot.slane %v613, %v617
        %v620 = vmul.f32 %v597, %v618
        %v621 = vmul.f32 %v598, %v618
        %v622 = vmul.f32 %v599, %v618
        %v623 = vmul.f32 %v600, %v618
        %v624 = vmul.f32 %v601, %v618
        %v625 = vmul.f32 %v602, %v618
        %v626 = vmul.f32 %v603, %v618
        %v627 = vmul.f32 %v604, %v618
        %v628 = vmul.f32 %v605, %v618
        %v629 = vmul.f32 %v606, %v618
        %v630 = vmul.f32 %v607, %v618
        %v631 = vmul.f32 %v608, %v618
        %v632 = vmul.f32 %v609, %v618
        %v633 = vmul.f32 %v610, %v618
        %v634 = vmul.f32 %v611, %v618
        %v635 = vmul.f32 %v612, %v618
        %v636 = vld [vmem:[%s290] sm:$0x1]
        %v638 = vlaneseq
        %v639 = vshrl.u32 %v638, 7
        %v640 = vsub.s32 0, %v639
        %v641 = vrot.slane %v636, %v640
        %v643 = vadd.f32 %v620, %v641
        %v644 = vadd.f32 %v621, %v641
        %v645 = vadd.f32 %v622, %v641
        %v646 = vadd.f32 %v623, %v641
        %v647 = vadd.f32 %v624, %v641
        %v648 = vadd.f32 %v625, %v641
        %v649 = vadd.f32 %v626, %v641
        %v650 = vadd.f32 %v627, %v641
        %v651 = vadd.f32 %v628, %v641
        %v652 = vadd.f32 %v629, %v641
        %v653 = vadd.f32 %v630, %v641
        %v654 = vadd.f32 %v631, %v641
        %v655 = vadd.f32 %v632, %v641
        %v656 = vadd.f32 %v633, %v641
        %v657 = vadd.f32 %v634, %v641
        %v658 = vadd.f32 %v635, %v641
        %v659 = vmax.f32 %v643, 0.0
        %v660 = vmax.f32 %v644, 0.0
        %v661 = vmax.f32 %v645, 0.0
        %v662 = vmax.f32 %v646, 0.0
        %v663 = vmax.f32 %v647, 0.0
        %v664 = vmax.f32 %v648, 0.0
        %v665 = vmax.f32 %v649, 0.0
        %v666 = vmax.f32 %v650, 0.0
        %v667 = vmax.f32 %v651, 0.0
        %v668 = vmax.f32 %v652, 0.0
        %v669 = vmax.f32 %v653, 0.0
        %v670 = vmax.f32 %v654, 0.0
        %v671 = vmax.f32 %v655, 0.0
        %v672 = vmax.f32 %v656, 0.0
        %v673 = vmax.f32 %v657, 0.0
        %v674 = vmax.f32 %v658, 0.0
        %v675 = vpack.c.bf16 %v660, %v659
        %v676 = vpack.c.bf16 %v662, %v661
        %v677 = vpack.c.bf16 %v664, %v663
        %v678 = vpack.c.bf16 %v666, %v665
        %v679 = vpack.c.bf16 %v668, %v667
        %v680 = vpack.c.bf16 %v670, %v669
        %v681 = vpack.c.bf16 %v672, %v671
        %v682 = vpack.c.bf16 %v674, %v673
        %v691 = vunpack.c.l.b16 %v675
        %v692 = vunpack.c.h.b16 %v675
        %v693 = vunpack.c.l.b16 %v676
        %v694 = vunpack.c.h.b16 %v676
        %v695 = vunpack.c.l.b16 %v677
        %v696 = vunpack.c.h.b16 %v677
        %v697 = vunpack.c.l.b16 %v678
        %v698 = vunpack.c.h.b16 %v678
        %v699 = vunpack.c.l.b16 %v679
        %v700 = vunpack.c.h.b16 %v679
        %v701 = vunpack.c.l.b16 %v680
        %v702 = vunpack.c.h.b16 %v680
        %v703 = vunpack.c.l.b16 %v681
        %v704 = vunpack.c.h.b16 %v681
        %v705 = vunpack.c.l.b16 %v682
        %v706 = vunpack.c.h.b16 %v682
        %v707 = vpack.c.b16 %v691, %v691
        %v708 = vpack.c.b16 %v692, %v692
        %v709 = vpack.c.b16 %v693, %v693
        %v710 = vpack.c.b16 %v694, %v694
        %v711 = vpack.c.b16 %v695, %v695
        %v712 = vpack.c.b16 %v696, %v696
        %v713 = vpack.c.b16 %v697, %v697
        %v714 = vpack.c.b16 %v698, %v698
        %v715 = vpack.c.b16 %v699, %v699
        %v716 = vpack.c.b16 %v700, %v700
        %v717 = vpack.c.b16 %v701, %v701
        %v718 = vpack.c.b16 %v702, %v702
        %v719 = vpack.c.b16 %v703, %v703
        %v720 = vpack.c.b16 %v704, %v704
        %v721 = vpack.c.b16 %v705, %v705
        %v722 = vpack.c.b16 %v706, %v706
        %739 = vst [vmem:[%s298] sm:$0xf] %v707
        %740 = vst [vmem:[%s298 + $0x4] sm:$0xf] %v708
        %741 = vst [vmem:[%s298 + $0x8] sm:$0xf] %v709
        %742 = vst [vmem:[%s298 + $0xc] sm:$0xf] %v710
        %743 = vst [vmem:[%s298 + $0x10] sm:$0xf] %v711
        %744 = vst [vmem:[%s298 + $0x14] sm:$0xf] %v712
        %745 = vst [vmem:[%s298 + $0x18] sm:$0xf] %v713
        %746 = vst [vmem:[%s298 + $0x1c] sm:$0xf] %v714
        %747 = vst [vmem:[%s298 + $0x20] sm:$0xf] %v715
        %748 = vst [vmem:[%s298 + $0x24] sm:$0xf] %v716
        %749 = vst [vmem:[%s298 + $0x28] sm:$0xf] %v717
        %750 = vst [vmem:[%s298 + $0x2c] sm:$0xf] %v718
        %751 = vst [vmem:[%s298 + $0x30] sm:$0xf] %v719
        %752 = vst [vmem:[%s298 + $0x34] sm:$0xf] %v720
        %753 = vst [vmem:[%s298 + $0x38] sm:$0xf] %v721
        %754 = vst [vmem:[%s298 + $0x3c] sm:$0xf] %v722
      $region44: #{_lambda_.4} parent=35 // pred_fallthru
        _
      %s755 = smul.u32 16, %s20
      %p756 = scmp.lt.s32.totalorder %s755, 63
      %s757 = scalar_select %p756, %s755, 63
      %p758 = scmp.lt.s32.totalorder %s21, 0
      %s759 = scalar_select %p758, %s21, 0
      %s760 = sadd.s32 %s759, %s757
      %s761 = smul.addr %s760, 4
      %s762 = scalar_lea.vmem %s4, %s761
      // Predicated region
      $region45: #{_lambda_.4} parent=35 // pred_check
        %p763 = pneg %p162
      $region46: #{_lambda_.4} parent=35 // pred_check_branch
        %765 = sbr.rel (%p763) target = $region48
      $region47: #{_lambda_.4} parent=35 // pred_region
        %s766 = smul.u32 16, %s20
      $region48: #{_lambda_.4} parent=35 // pred_fallthru
        _
    $region36: #{_lambda_.4} parent=5 // pred_fallthru
      _
    %p767 = scmp.le.s32.totalorder 2, %s10
    // Predicated region
    $region49: #{_lambda_.4} parent=5 // pred_check
      %p768 = pneg %p767
    $region50: #{_lambda_.4} parent=5 // pred_check_branch
      %770 = sbr.rel (%p768) target = $region52
    $region51: #{_lambda_.4} parent=5 // pred_region
      %s771 = ssub.s32 %s10, 2
      // Predicated region
      $region53: #{_lambda_.4} parent=51 // pred_check
        %p772 = pneg %p168
      $region54: #{_lambda_.4} parent=51 // pred_check_branch
        %774 = sbr.rel (%p772) target = $region56
      $region55: #{_lambda_.4} parent=51 // pred_region
        %s775 = smul.u32 16, %s23
        %p776 = scmp.lt.s32.totalorder %s775, 63
        %s777 = scalar_select %p776, %s775, 63
        %p778 = scmp.lt.s32.totalorder %s24, 0
        %s779 = scalar_select %p778, %s24, 0
        %s780 = sadd.s32 %s779, %s777
        %s781 = smul.addr %s780, 4
        %s782 = scalar_lea.vmem %s4, %s781
      $region56: #{_lambda_.4} parent=51 // pred_fallthru
        _
    $region52: #{_lambda_.4} parent=5 // pred_fallthru
      _
  $region6: #{_lambda_.4} parent=0 // loop_footer
    %s14 = sadd.s32 1, %s10
  $region7: #{_lambda_.4} parent=0 // loop_footer_branch
    %9 = sbr.rel target = $region3
  $region8: #{_lambda_.4} parent=0 // loop_exit
    _

// kernel: _lambda_.7
$region0: #{_lambda_.7}
  #allocation0 [shape = 'u32[]', space=smem, size = 0x4, offset = 0x4, fixed_abs, tag = 'smem constant byte address 0x4 - core index']
  #allocation1 [shape = 'u32[144,128]{1,0:T(1,128)}', space=vmem, size = 0x12000, scoped, tag = 'internal scratch']
  #allocation2 [shape = 'f32[128,128]{1,0:T(8,128)}', space=vmem, size = 0x10000, scoped, tag = 'scratch operand']
  %s0 = inlined_call_operand.vmem [shape: bf16[512,128], index: 0, kind: input, shape index: {}]
  %s1 = inlined_call_operand.vmem [shape: bf16[128,128], index: 1, kind: input, shape index: {}]
  %s2 = inlined_call_operand.vmem [shape: f32[1,128], index: 2, kind: input, shape index: {}]
  %s3 = inlined_call_operand.vmem [shape: f32[1,128], index: 3, kind: input, shape index: {}]
  %s4 = inlined_call_operand.vmem [shape: bf16[512,128], index: 4, kind: input, shape index: {}]
  %s5 = inlined_call_operand.hbm [shape: f32[512,128], index: 5, kind: output, shape index: {}]
  %s6 = sld [smem:[#allocation0]]
  $region61: #{_lambda_.7} parent=0
    _
  %s8 = ssub.s32 1, %s6
  %s9 = scalar_select 0, %s8, %s6
  $region1: #{_lambda_.7} parent=0
    #allocation3 [shape = 'u8[131072]{0}', space=vmem, size = 0x20000, scoped, tag = 'output window, operand 0']
    #allocation4 [shape = 's32[2]{0}', space=sflag, size = 0x8, scoped, tag = 'scoped memory for _lambda_.7']
    %10 = vsyncpa [#allocation4], 0
    %s11 = scalar_lea.sflag [#allocation4], 1
    %12 = vsyncpa %s11, 0
    loop: start=0, step=1, limit=6
    $region2: #{_lambda_.7} parent=1 // loop_pre_header
      _
    $region3: #{_lambda_.7} parent=1 // loop_header
      %s14 = sphi 0, %s18
      %p15 = scmp.ge.s32.totalorder %s14, 6
      %s21 = sphi 0, %s40
      %s22 = sphi 0, %s36
      %s23 = sphi 0, %s32
      %s24 = sphi 0, %s21
      %s25 = sphi 0, %s22
      %s26 = sphi 0, %s23
      %s27 = sphi 0, %s24
      %s28 = sphi 0, %s25
      %s29 = sphi 0, %s26
      %s45 = sphi 0, %s47
      %s48 = sphi 0, %s45
      %s49 = sphi 0, %s48
      %s65 = sphi 0, %s49
      %s73 = sphi 0, %s75
      %s76 = sphi 0, %s73
      %s77 = sphi 0, %s76
      %s93 = sphi 0, %s77
      %s99 = sphi 0, %s101
      %s102 = sphi 0, %s99
      %s103 = sphi 0, %s102
      %s119 = sphi 0, %s103
      %s125 = sphi 0, %s127
      %s128 = sphi 0, %s125
      %s129 = sphi 0, %s128
      %s145 = sphi 0, %s129
      %s153 = sphi 0, %s155
      %s156 = sphi 0, %s153
      %s157 = sphi 0, %s156
      %s173 = sphi 0, %s157
      %s181 = sphi 0, %s183
      %s184 = sphi 0, %s181
      %s185 = sphi 0, %s184
      %s201 = sphi 0, %s185
    $region4: #{_lambda_.7} parent=1 // loop_header_branch
      %17 = sbr.rel (%p15) target = $region8
    $region5: #{_lambda_.7} parent=1 // loop_body
      %s19 = ssub.s32 %s14, 1
      %s20 = ssub.s32 %s14, 2
      %s30 = sadd.s32 1, %s23
      %p31 = scmp.ge.s32.totalorder %s30, 1
      %s32 = scalar_select %p31, 0, %s30
      %s33 = sadd.s32 1, %s22
      %s34 = scalar_select %p31, %s33, %s22
      %p35 = scmp.ge.s32.totalorder %s34, 1
      %s36 = scalar_select %p35, 0, %s34
      %s37 = sadd.s32 1, %s21
      %s38 = scalar_select %p35, %s37, %s21
      %p39 = scmp.ge.s32.totalorder %s38, 4
      %s40 = scalar_select %p39, 0, %s38
      %s41 = ssub.s32 %s21, %s40
      %s42 = ssub.s32 %s23, %s32
      %s43 = sor.u32 %s41, %s42
      %p44 = scmp.eq.s32.totalorder %s43, 0
      %s46 = sadd.s32 %s45, 1
      %s47 = scalar_select %p44, %s45, %s46
      %p50 = pneg %p44
      %p51 = scmp.eq.s32.totalorder %s14, 3
      %p52 = por %p50, %p51
      %p53 = scmp.ne.s32.totalorder %s45, %s48
      %p54 = scmp.eq.s32.totalorder %s14, 0
      %p55 = por %p53, %p54
      %p56 = scmp.ne.s32.totalorder %s45, %s48
      %p57 = scmp.eq.s32.totalorder %s19, 3
      %p58 = por %p56, %p57
      %p59 = scmp.ne.s32.totalorder %s48, %s49
      %p60 = scmp.eq.s32.totalorder %s19, 0
      %p61 = por %p59, %p60
      %p62 = scmp.ne.s32.totalorder %s48, %s49
      %p63 = scmp.eq.s32.totalorder %s20, 3
      %p64 = por %p62, %p63
      %p66 = scmp.ne.s32.totalorder %s49, %s65
      %p67 = scmp.eq.s32.totalorder %s20, 0
      %p68 = por %p66, %p67
      %s69 = ssub.s32 %s23, %s32
      %s70 = ssub.s32 %s22, %s36
      %s71 = sor.u32 %s69, %s70
      %p72 = scmp.eq.s32.totalorder %s71, 0
      %s74 = sadd.s32 %s73, 1
      %s75 = scalar_select %p72, %s73, %s74
      %p78 = pneg %p72
      %p79 = scmp.eq.s32.totalorder %s14, 3
      %p80 = por %p78, %p79
      %p81 = scmp.ne.s32.totalorder %s73, %s76
      %p82 = scmp.eq.s32.totalorder %s14, 0
      %p83 = por %p81, %p82
      %p84 = scmp.ne.s32.totalorder %s73, %s76
      %p85 = scmp.eq.s32.totalorder %s19, 3
      %p86 = por %p84, %p85
      %p87 = scmp.ne.s32.totalorder %s76, %s77
      %p88 = scmp.eq.s32.totalorder %s19, 0
      %p89 = por %p87, %p88
      %p90 = scmp.ne.s32.totalorder %s76, %s77
      %p91 = scmp.eq.s32.totalorder %s20, 3
      %p92 = por %p90, %p91
      %p94 = scmp.ne.s32.totalorder %s77, %s93
      %p95 = scmp.eq.s32.totalorder %s20, 0
      %p96 = por %p94, %p95
      %s97 = ssub.s32 %s22, %s36
      %p98 = scmp.eq.s32.totalorder %s97, 0
      %s100 = sadd.s32 %s99, 1
      %s101 = scalar_select %p98, %s99, %s100
      %p104 = pneg %p98
      %p105 = scmp.eq.s32.totalorder %s14, 3
      %p106 = por %p104, %p105
      %p107 = scmp.ne.s32.totalorder %s99, %s102
      %p108 = scmp.eq.s32.totalorder %s14, 0
      %p109 = por %p107, %p108
      %p110 = scmp.ne.s32.totalorder %s99, %s102
      %p111 = scmp.eq.s32.totalorder %s19, 3
      %p112 = por %p110, %p111
      %p113 = scmp.ne.s32.totalorder %s102, %s103
      %p114 = scmp.eq.s32.totalorder %s19, 0
      %p115 = por %p113, %p114
      %p116 = scmp.ne.s32.totalorder %s102, %s103
      %p117 = scmp.eq.s32.totalorder %s20, 3
      %p118 = por %p116, %p117
      %p120 = scmp.ne.s32.totalorder %s103, %s119
      %p121 = scmp.eq.s32.totalorder %s20, 0
      %p122 = por %p120, %p121
      %s123 = ssub.s32 %s22, %s36
      %p124 = scmp.eq.s32.totalorder %s123, 0
      %s126 = sadd.s32 %s125, 1
      %s127 = scalar_select %p124, %s125, %s126
      %p130 = pneg %p124
      %p131 = scmp.eq.s32.totalorder %s14, 3
      %p132 = por %p130, %p131
      %p133 = scmp.ne.s32.totalorder %s125, %s128
      %p134 = scmp.eq.s32.totalorder %s14, 0
      %p135 = por %p133, %p134
      %p136 = scmp.ne.s32.totalorder %s125, %s128
      %p137 = scmp.eq.s32.totalorder %s19, 3
      %p138 = por %p136, %p137
      %p139 = scmp.ne.s32.totalorder %s128, %s129
      %p140 = scmp.eq.s32.totalorder %s19, 0
      %p141 = por %p139, %p140
      %p142 = scmp.ne.s32.totalorder %s128, %s129
      %p143 = scmp.eq.s32.totalorder %s20, 3
      %p144 = por %p142, %p143
      %p146 = scmp.ne.s32.totalorder %s129, %s145
      %p147 = scmp.eq.s32.totalorder %s20, 0
      %p148 = por %p146, %p147
      %s149 = ssub.s32 %s21, %s40
      %s150 = ssub.s32 %s22, %s36
      %s151 = sor.u32 %s149, %s150
      %p152 = scmp.eq.s32.totalorder %s151, 0
      %s154 = sadd.s32 %s153, 1
      %s155 = scalar_select %p152, %s153, %s154
      %p158 = pneg %p152
      %p159 = scmp.eq.s32.totalorder %s14, 3
      %p160 = por %p158, %p159
      %p161 = scmp.ne.s32.totalorder %s153, %s156
      %p162 = scmp.eq.s32.totalorder %s14, 0
      %p163 = por %p161, %p162
      %p164 = scmp.ne.s32.totalorder %s153, %s156
      %p165 = scmp.eq.s32.totalorder %s19, 3
      %p166 = por %p164, %p165
      %p167 = scmp.ne.s32.totalorder %s156, %s157
      %p168 = scmp.eq.s32.totalorder %s19, 0
      %p169 = por %p167, %p168
      %p170 = scmp.ne.s32.totalorder %s156, %s157
      %p171 = scmp.eq.s32.totalorder %s20, 3
      %p172 = por %p170, %p171
      %p174 = scmp.ne.s32.totalorder %s157, %s173
      %p175 = scmp.eq.s32.totalorder %s20, 0
      %p176 = por %p174, %p175
      %s177 = ssub.s32 %s21, %s40
      %s178 = ssub.s32 %s22, %s36
      %s179 = sor.u32 %s177, %s178
      %p180 = scmp.eq.s32.totalorder %s179, 0
      %s182 = sadd.s32 %s181, 1
      %s183 = scalar_select %p180, %s181, %s182
      %p186 = pneg %p180
      %p187 = scmp.eq.s32.totalorder %s14, 3
      %p188 = por %p186, %p187
      %p189 = scmp.ne.s32.totalorder %s181, %s184
      %p190 = scmp.eq.s32.totalorder %s14, 0
      %p191 = por %p189, %p190
      %p192 = scmp.ne.s32.totalorder %s181, %s184
      %p193 = scmp.eq.s32.totalorder %s19, 3
      %p194 = por %p192, %p193
      %p195 = scmp.ne.s32.totalorder %s184, %s185
      %p196 = scmp.eq.s32.totalorder %s19, 0
      %p197 = por %p195, %p196
      %p198 = scmp.ne.s32.totalorder %s184, %s185
      %p199 = scmp.eq.s32.totalorder %s20, 3
      %p200 = por %p198, %p199
      %p202 = scmp.ne.s32.totalorder %s185, %s201
      %p203 = scmp.eq.s32.totalorder %s20, 0
      %p204 = por %p202, %p203
      %p205 = scmp.le.s32.totalorder 1, %s14
      %p206 = scmp.lt.s32.totalorder %s14, 5
      %p207 = pnand %p205, %p206
      %p208 = pneg %p207
      // Predicated region
      $region9: #{_lambda_.7} parent=5 // pred_check
        _
      $region10: #{_lambda_.7} parent=5 // pred_check_branch
        %210 = sbr.rel (%p207) target = $region12
      $region11: #{_lambda_.7} parent=5 // pred_region
        %s211 = ssub.s32 %s14, 1
        // Predicated region
        $region13: #{_lambda_.7} parent=11 // pred_check
          %p212 = pneg %p89
        $region14: #{_lambda_.7} parent=11 // pred_check_branch
          %214 = sbr.rel (%p212) target = $region16
        $region15: #{_lambda_.7} parent=11 // pred_region
          %s215 = smul.u32 16, %s26
          %p216 = scmp.lt.s32.totalorder %s215, 15
          %s217 = scalar_select %p216, %s215, 15
          %p218 = scmp.lt.s32.totalorder %s25, 0
          %s219 = scalar_select %p218, %s25, 0
          %s220 = sadd.s32 %s219, %s217
          %s221 = smul.addr %s220, 4
          %s222 = scalar_lea.vmem %s1, %s221
          %s223 = smul.u32 16, %s26
        $region16: #{_lambda_.7} parent=11 // pred_fallthru
          _
        // Predicated region
        $region17: #{_lambda_.7} parent=11 // pred_check
          %p224 = pneg %p115
        $region18: #{_lambda_.7} parent=11 // pred_check_branch
          %226 = sbr.rel (%p224) target = $region20
        $region19: #{_lambda_.7} parent=11 // pred_region
          %p227 = scmp.lt.s32.totalorder %s25, 0
          %s228 = scalar_select %p227, %s25, 0
          %s229 = scalar_lea.vmem %s2, %s228
        $region20: #{_lambda_.7} parent=11 // pred_fallthru
          _
        // Predicated region
        $region21: #{_lambda_.7} parent=11 // pred_check
          %p230 = pneg %p141
        $region22: #{_lambda_.7} parent=11 // pred_check_branch
          %232 = sbr.rel (%p230) target = $region24
        $region23: #{_lambda_.7} parent=11 // pred_region
          %p233 = scmp.lt.s32.totalorder %s25, 0
          %s234 = scalar_select %p233, %s25, 0
          %s235 = scalar_lea.vmem %s3, %s234
        $region24: #{_lambda_.7} parent=11 // pred_fallthru
          _
      $region12: #{_lambda_.7} parent=5 // pred_fallthru
        _
      %p236 = scmp.lt.s32.totalorder %s14, 4
      // Predicated region
      $region25: #{_lambda_.7} parent=5 // pred_check
        %p237 = pneg %p236
      $region26: #{_lambda_.7} parent=5 // pred_check_branch
        %239 = sbr.rel (%p237) target = $region28
      $region27: #{_lambda_.7} parent=5 // pred_region
        // Predicated region
        $region29: #{_lambda_.7} parent=27 // pred_check
          %p240 = pneg %p55
        $region30: #{_lambda_.7} parent=27 // pred_check_branch
          %242 = sbr.rel (%p240) target = $region32
        $region31: #{_lambda_.7} parent=27 // pred_region
          %s243 = smul.u32 16, %s21
          %p244 = scmp.lt.s32.totalorder %s243, 63
          %s245 = scalar_select %p244, %s243, 63
          %p246 = scmp.lt.s32.totalorder %s23, 0
          %s247 = scalar_select %p246, %s23, 0
          %s248 = sadd.s32 %s247, %s245
          %s249 = smul.addr %s248, 4
          %s250 = scalar_lea.vmem %s0, %s249
          %s251 = smul.u32 16, %s21
        $region32: #{_lambda_.7} parent=27 // pred_fallthru
          _
        // Predicated region
        $region33: #{_lambda_.7} parent=27 // pred_check
          %p252 = pneg %p163
        $region34: #{_lambda_.7} parent=27 // pred_check_branch
          %254 = sbr.rel (%p252) target = $region36
        $region35: #{_lambda_.7} parent=27 // pred_region
          %s255 = smul.u32 16, %s21
          %p256 = scmp.lt.s32.totalorder %s255, 63
          %s257 = scalar_select %p256, %s255, 63
          %p258 = scmp.lt.s32.totalorder %s22, 0
          %s259 = scalar_select %p258, %s22, 0
          %s260 = sadd.s32 %s259, %s257
          %s261 = smul.addr %s260, 4
          %s262 = scalar_lea.vmem %s4, %s261
          %s263 = smul.u32 16, %s21
        $region36: #{_lambda_.7} parent=27 // pred_fallthru
          _
      $region28: #{_lambda_.7} parent=5 // pred_fallthru
        _
      %p264 = scmp.le.s32.totalorder 1, %s14
      %p265 = scmp.lt.s32.totalorder %s14, 5
      %p266 = pnand %p264, %p265
      %p267 = pneg %p266
      // Predicated region
      $region37: #{_lambda_.7} parent=5 // pred_check
        _
      $region38: #{_lambda_.7} parent=5 // pred_check_branch
        %269 = sbr.rel (%p266) target = $region40
      $region39: #{_lambda_.7} parent=5 // pred_region
        %s270 = ssub.s32 %s14, 1
        %s271 = smul.u32 16, %s24
        %p272 = scmp.lt.s32.totalorder %s271, 63
        %s273 = scalar_select %p272, %s271, 63
        %p274 = scmp.lt.s32.totalorder %s26, 0
        %s275 = scalar_select %p274, %s26, 0
        %s276 = sadd.s32 %s275, %s273
        %s277 = smul.addr %s276, 4
        %s278 = scalar_lea.vmem %s0, %s277
        %p279 = pneg %p61
        %p280 = pneg %p58
        %s281 = smul.u32 16, %s26
        %p282 = scmp.lt.s32.totalorder %s281, 15
        %s283 = scalar_select %p282, %s281, 15
        %p284 = scmp.lt.s32.totalorder %s25, 0
        %s285 = scalar_select %p284, %s25, 0
        %s286 = sadd.s32 %s285, %s283
        %s287 = smul.addr %s286, 4
        %s288 = scalar_lea.vmem %s1, %s287
        %p289 = pneg %p89
        %p290 = pneg %p86
        %p291 = scmp.lt.s32.totalorder %s25, 0
        %s292 = scalar_select %p291, %s25, 0
        %s293 = scalar_lea.vmem %s2, %s292
        %p294 = pneg %p115
        %p295 = pneg %p112
        %p296 = scmp.lt.s32.totalorder %s25, 0
        %s297 = scalar_select %p296, %s25, 0
        %s298 = scalar_lea.vmem %s3, %s297
        %p299 = pneg %p141
        %p300 = pneg %p138
        %s301 = smul.u32 16, %s24
        %p302 = scmp.lt.s32.totalorder %s301, 63
        %s303 = scalar_select %p302, %s301, 63
        %p304 = scmp.lt.s32.totalorder %s25, 0
        %s305 = scalar_select %p304, %s25, 0
        %s306 = sadd.s32 %s305, %s303
        %s307 = smul.addr %s306, 4
        %s308 = scalar_lea.vmem %s4, %s307
        %p309 = pneg %p169
        %p310 = pneg %p166
        %p311 = pneg %p197
        %p312 = pneg %p194
        %s313 = sand.u32 %s184, 1
        %s314 = scalar_lea.sflag [#allocation4], %s313
        %s315 = sand.u32 %s184, 1
        %s316 = smul.addr %s315, 128
        %s317 = scalar_lea.vmem [#allocation3], %s316
        %s318 = smul.u32 16, %s24
        %p319 = scmp.lt.s32.totalorder %s318, 63
        %s320 = scalar_select %p319, %s318, 63
        %p321 = scmp.lt.s32.totalorder %s26, 0
        %s322 = scalar_select %p321, %s26, 0
        %s323 = sadd.s32 %s322, %s320
        %s324 = smul.addr %s323, 4
        %s325 = scalar_lea.vmem %s0, %s324
        %s326 = smul.u32 16, %s24
        %s327 = smul.u32 16, %s26
        %p328 = scmp.lt.s32.totalorder %s327, 15
        %s329 = scalar_select %p328, %s327, 15
        %p330 = scmp.lt.s32.totalorder %s25, 0
        %s331 = scalar_select %p330, %s25, 0
        %s332 = sadd.s32 %s331, %s329
        %s333 = smul.addr %s332, 4
        %s334 = scalar_lea.vmem %s1, %s333
        %s335 = smul.u32 16, %s26
        %p336 = scmp.lt.s32.totalorder %s25, 0
        %s337 = scalar_select %p336, %s25, 0
        %s338 = scalar_lea.vmem %s2, %s337
        %p339 = scmp.lt.s32.totalorder %s25, 0
        %s340 = scalar_select %p339, %s25, 0
        %s341 = scalar_lea.vmem %s3, %s340
        %s342 = smul.u32 16, %s24
        %p343 = scmp.lt.s32.totalorder %s342, 63
        %s344 = scalar_select %p343, %s342, 63
        %p345 = scmp.lt.s32.totalorder %s25, 0
        %s346 = scalar_select %p345, %s25, 0
        %s347 = sadd.s32 %s346, %s344
        %s348 = smul.addr %s347, 4
        %s349 = scalar_lea.vmem %s4, %s348
        %s350 = smul.u32 16, %s24
        %s351 = smul.u32 16, %s24
        %p353 = scmp.eq.s32.totalorder %s26, 0
        // Predicated region
        $region41: #{_lambda_.7} parent=39 // pred_check
          %p354 = pneg %p353
        $region42: #{_lambda_.7} parent=39 // pred_check_branch
          %356 = sbr.rel (%p354) target = $region44
        $region43: #{_lambda_.7} parent=39 // pred_region
          %357 = vst [vmem:[#allocation2] sm:$0xff] 0.0
          %358 = vst [vmem:[#allocation2 + $0x8] sm:$0xff] 0.0
          %359 = vst [vmem:[#allocation2 + $0x10] sm:$0xff] 0.0
          %360 = vst [vmem:[#allocation2 + $0x18] sm:$0xff] 0.0
          %361 = vst [vmem:[#allocation2 + $0x20] sm:$0xff] 0.0
          %362 = vst [vmem:[#allocation2 + $0x28] sm:$0xff] 0.0
          %363 = vst [vmem:[#allocation2 + $0x30] sm:$0xff] 0.0
          %364 = vst [vmem:[#allocation2 + $0x38] sm:$0xff] 0.0
          %365 = vst [vmem:[#allocation2 + $0x40] sm:$0xff] 0.0
          %366 = vst [vmem:[#allocation2 + $0x48] sm:$0xff] 0.0
          %367 = vst [vmem:[#allocation2 + $0x50] sm:$0xff] 0.0
          %368 = vst [vmem:[#allocation2 + $0x58] sm:$0xff] 0.0
          %369 = vst [vmem:[#allocation2 + $0x60] sm:$0xff] 0.0
          %370 = vst [vmem:[#allocation2 + $0x68] sm:$0xff] 0.0
          %371 = vst [vmem:[#allocation2 + $0x70] sm:$0xff] 0.0
          %372 = vst [vmem:[#allocation2 + $0x78] sm:$0xff] 0.0
        $region44: #{_lambda_.7} parent=39 // pred_fallthru
          _
        %v373 = vld [vmem:[#allocation2] sm:$0xff]
        %v374 = vld [vmem:[#allocation2 + $0x8] sm:$0xff]
        %v375 = vld [vmem:[#allocation2 + $0x10] sm:$0xff]
        %v376 = vld [vmem:[#allocation2 + $0x18] sm:$0xff]
        %v377 = vld [vmem:[#allocation2 + $0x20] sm:$0xff]
        %v378 = vld [vmem:[#allocation2 + $0x28] sm:$0xff]
        %v379 = vld [vmem:[#allocation2 + $0x30] sm:$0xff]
        %v380 = vld [vmem:[#allocation2 + $0x38] sm:$0xff]
        %v381 = vld [vmem:[#allocation2 + $0x40] sm:$0xff]
        %v382 = vld [vmem:[#allocation2 + $0x48] sm:$0xff]
        %v383 = vld [vmem:[#allocation2 + $0x50] sm:$0xff]
        %v384 = vld [vmem:[#allocation2 + $0x58] sm:$0xff]
        %v385 = vld [vmem:[#allocation2 + $0x60] sm:$0xff]
        %v386 = vld [vmem:[#allocation2 + $0x68] sm:$0xff]
        %v387 = vld [vmem:[#allocation2 + $0x70] sm:$0xff]
        %v388 = vld [vmem:[#allocation2 + $0x78] sm:$0xff]
        %v389 = vld [vmem:[%s325] sm:$0xf]
        %v390 = vld [vmem:[%s325 + $0x4] sm:$0xf]
        %v391 = vld [vmem:[%s325 + $0x8] sm:$0xf]
        %v392 = vld [vmem:[%s325 + $0xc] sm:$0xf]
        %v393 = vld [vmem:[%s325 + $0x10] sm:$0xf]
        %v394 = vld [vmem:[%s325 + $0x14] sm:$0xf]
        %v395 = vld [vmem:[%s325 + $0x18] sm:$0xf]
        %v396 = vld [vmem:[%s325 + $0x1c] sm:$0xf]
        %v397 = vld [vmem:[%s325 + $0x20] sm:$0xf]
        %v398 = vld [vmem:[%s325 + $0x24] sm:$0xf]
        %v399 = vld [vmem:[%s325 + $0x28] sm:$0xf]
        %v400 = vld [vmem:[%s325 + $0x2c] sm:$0xf]
        %v401 = vld [vmem:[%s325 + $0x30] sm:$0xf]
        %v402 = vld [vmem:[%s325 + $0x34] sm:$0xf]
        %v403 = vld [vmem:[%s325 + $0x38] sm:$0xf]
        %v404 = vld [vmem:[%s325 + $0x3c] sm:$0xf]
        %v405 = vld [vmem:[%s334] sm:$0xf]
        %v406 = vld [vmem:[%s334 + $0x4] sm:$0xf]
        %v407 = vld [vmem:[%s334 + $0x8] sm:$0xf]
        %v408 = vld [vmem:[%s334 + $0xc] sm:$0xf]
        %v409 = vld [vmem:[%s334 + $0x10] sm:$0xf]
        %v410 = vld [vmem:[%s334 + $0x14] sm:$0xf]
        %v411 = vld [vmem:[%s334 + $0x18] sm:$0xf]
        %v412 = vld [vmem:[%s334 + $0x1c] sm:$0xf]
        %v413 = vld [vmem:[%s334 + $0x20] sm:$0xf]
        %v414 = vld [vmem:[%s334 + $0x24] sm:$0xf]
        %v415 = vld [vmem:[%s334 + $0x28] sm:$0xf]
        %v416 = vld [vmem:[%s334 + $0x2c] sm:$0xf]
        %v417 = vld [vmem:[%s334 + $0x30] sm:$0xf]
        %v418 = vld [vmem:[%s334 + $0x34] sm:$0xf]
        %v419 = vld [vmem:[%s334 + $0x38] sm:$0xf]
        %v420 = vld [vmem:[%s334 + $0x3c] sm:$0xf]
        %v437 = vunpack.c.l.b16 %v389
        %v438 = vunpack.c.l.b16 %v390
        %v439 = vunpack.c.l.b16 %v391
        %v440 = vunpack.c.l.b16 %v392
        %v441 = vunpack.c.l.b16 %v393
        %v442 = vunpack.c.l.b16 %v394
        %v443 = vunpack.c.l.b16 %v395
        %v444 = vunpack.c.l.b16 %v396
        %v445 = vunpack.c.l.b16 %v397
        %v446 = vunpack.c.l.b16 %v398
        %v447 = vunpack.c.l.b16 %v399
        %v448 = vunpack.c.l.b16 %v400
        %v449 = vunpack.c.l.b16 %v401
        %v450 = vunpack.c.l.b16 %v402
        %v451 = vunpack.c.l.b16 %v403
        %v452 = vunpack.c.l.b16 %v404
        %v453 = vpack.c.b16 %v438, %v437
        %v454 = vpack.c.b16 %v440, %v439
        %v455 = vpack.c.b16 %v442, %v441
        %v456 = vpack.c.b16 %v444, %v443
        %v457 = vpack.c.b16 %v446, %v445
        %v458 = vpack.c.b16 %v448, %v447
        %v459 = vpack.c.b16 %v450, %v449
        %v460 = vpack.c.b16 %v452, %v451
        %v485 = vunpack.c.l.b16 %v405
        %v486 = vunpack.c.l.b16 %v406
        %v487 = vunpack.c.l.b16 %v407
        %v488 = vunpack.c.l.b16 %v408
        %v489 = vunpack.c.l.b16 %v409
        %v490 = vunpack.c.l.b16 %v410
        %v491 = vunpack.c.l.b16 %v411
        %v492 = vunpack.c.l.b16 %v412
        %v493 = vunpack.c.l.b16 %v413
        %v494 = vunpack.c.l.b16 %v414
        %v495 = vunpack.c.l.b16 %v415
        %v496 = vunpack.c.l.b16 %v416
        %v497 = vunpack.c.l.b16 %v417
        %v498 = vunpack.c.l.b16 %v418
        %v499 = vunpack.c.l.b16 %v419
        %v500 = vunpack.c.l.b16 %v420
        %v501 = vpack.c.b16 %v486, %v485
        %v502 = vpack.c.b16 %v488, %v487
        %v503 = vpack.c.b16 %v490, %v489
        %v504 = vpack.c.b16 %v492, %v491
        %v505 = vpack.c.b16 %v494, %v493
        %v506 = vpack.c.b16 %v496, %v495
        %v507 = vpack.c.b16 %v498, %v497
        %v508 = vpack.c.b16 %v500, %v499
        %517 = vmatprep.subr.bf16.mxu0 0
        %518 = vmatpush1.bf16.msra.mxu0 %v501
        %519 = vmatprep.subr.bf16.mxu0 0
        %520 = vmatpush1.bf16.msra.mxu0 %v502
        %521 = vmatprep.subr.bf16.mxu0 0
        %522 = vmatpush1.bf16.msra.mxu0 %v503
        %523 = vmatprep.subr.bf16.mxu0 0
        %524 = vmatpush1.bf16.msra.mxu0 %v504
        %525 = vmatprep.subr.bf16.mxu0 0
        %526 = vmatpush1.bf16.msra.mxu0 %v505
        %527 = vmatprep.subr.bf16.mxu0 0
        %528 = vmatpush1.bf16.msra.mxu0 %v506
        %529 = vmatprep.subr.bf16.mxu0 0
        %530 = vmatpush1.bf16.msra.mxu0 %v507
        %531 = vmatprep.subr.bf16.mxu0 0
        %532 = vmatpush1.bf16.msra.mxu0 %v508
        %533 = vmatprep.subr.bf16.mxu0 0
        %534 = vmatpush1.bf16.msra.mxu0 0
        %535 = vmatprep.subr.bf16.mxu0 0
        %536 = vmatpush1.bf16.msra.mxu0 0
        %537 = vmatprep.subr.bf16.mxu0 0
        %538 = vmatpush1.bf16.msra.mxu0 0
        %539 = vmatprep.subr.bf16.mxu0 0
        %540 = vmatpush1.bf16.msra.mxu0 0
        %541 = vmatprep.subr.bf16.mxu0 0
        %542 = vmatpush1.bf16.msra.mxu0 0
        %543 = vmatprep.subr.bf16.mxu0 0
        %544 = vmatpush1.bf16.msra.mxu0 0
        %545 = vmatprep.subr.bf16.mxu0 0
        %546 = vmatpush1.bf16.msra.mxu0 0
        %547 = vmatprep.subr.bf16.mxu0 0
        %548 = vmatpush1.bf16.msra.mxu0 0
        %549 = vmatprep.mubr.bf16.mxu0 0
        %550 = vmatmul.mubr.bf16.gmra.mrb[0].mxu0 %v453
        %v551 = vpop.f32.mrb[0].mxu0
        %v552 = vadd.f32 0.0, %v551
        %v553 = vpop.f32.mrb[0].mxu0
        %v554 = vpop.f32.mrb[0].mxu0
        %v555 = vadd.f32 0.0, %v554
        %v556 = vpop.f32.mrb[0].mxu0
        %557 = vmatprep.mubr.bf16.mxu0 0
        %558 = vmatmul.mubr.bf16.gmra.mrb[0].mxu0 %v454
        %v559 = vpop.f32.mrb[0].mxu0
        %v560 = vadd.f32 0.0, %v559
        %v561 = vpop.f32.mrb[0].mxu0
        %v562 = vpop.f32.mrb[0].mxu0
        %v563 = vadd.f32 0.0, %v562
        %v564 = vpop.f32.mrb[0].mxu0
        %565 = vmatprep.mubr.bf16.mxu0 0
        %566 = vmatmul.mubr.bf16.gmra.mrb[0].mxu0 %v455
        %v567 = vpop.f32.mrb[0].mxu0
        %v568 = vadd.f32 0.0, %v567
        %v569 = vpop.f32.mrb[0].mxu0
        %v570 = vpop.f32.mrb[0].mxu0
        %v571 = vadd.f32 0.0, %v570
        %v572 = vpop.f32.mrb[0].mxu0
        %573 = vmatprep.mubr.bf16.mxu0 0
        %574 = vmatmul.mubr.bf16.gmra.mrb[0].mxu0 %v456
        %v575 = vpop.f32.mrb[0].mxu0
        %v576 = vadd.f32 0.0, %v575
        %v577 = vpop.f32.mrb[0].mxu0
        %v578 = vpop.f32.mrb[0].mxu0
        %v579 = vadd.f32 0.0, %v578
        %v580 = vpop.f32.mrb[0].mxu0
        %581 = vmatprep.mubr.bf16.mxu0 0
        %582 = vmatmul.mubr.bf16.gmra.mrb[0].mxu0 %v457
        %v583 = vpop.f32.mrb[0].mxu0
        %v584 = vadd.f32 0.0, %v583
        %v585 = vpop.f32.mrb[0].mxu0
        %v586 = vpop.f32.mrb[0].mxu0
        %v587 = vadd.f32 0.0, %v586
        %v588 = vpop.f32.mrb[0].mxu0
        %589 = vmatprep.mubr.bf16.mxu0 0
        %590 = vmatmul.mubr.bf16.gmra.mrb[0].mxu0 %v458
        %v591 = vpop.f32.mrb[0].mxu0
        %v592 = vadd.f32 0.0, %v591
        %v593 = vpop.f32.mrb[0].mxu0
        %v594 = vpop.f32.mrb[0].mxu0
        %v595 = vadd.f32 0.0, %v594
        %v596 = vpop.f32.mrb[0].mxu0
        %597 = vmatprep.mubr.bf16.mxu0 0
        %598 = vmatmul.mubr.bf16.gmra.mrb[0].mxu0 %v459
        %v599 = vpop.f32.mrb[0].mxu0
        %v600 = vadd.f32 0.0, %v599
        %v601 = vpop.f32.mrb[0].mxu0
        %v602 = vpop.f32.mrb[0].mxu0
        %v603 = vadd.f32 0.0, %v602
        %v604 = vpop.f32.mrb[0].mxu0
        %605 = vmatprep.mubr.bf16.mxu0 0
        %606 = vmatmul.mubr.bf16.gmra.mrb[0].mxu0 %v460
        %v607 = vpop.f32.mrb[0].mxu0
        %v608 = vadd.f32 0.0, %v607
        %v609 = vpop.f32.mrb[0].mxu0
        %v610 = vpop.f32.mrb[0].mxu0
        %v611 = vadd.f32 0.0, %v610
        %v612 = vpop.f32.mrb[0].mxu0
        %613 = vdwg.mxu0
        %v614 = vadd.f32 %v373, %v552
        %v615 = vadd.f32 %v374, %v555
        %v616 = vadd.f32 %v375, %v560
        %v617 = vadd.f32 %v376, %v563
        %v618 = vadd.f32 %v377, %v568
        %v619 = vadd.f32 %v378, %v571
        %v620 = vadd.f32 %v379, %v576
        %v621 = vadd.f32 %v380, %v579
        %v622 = vadd.f32 %v381, %v584
        %v623 = vadd.f32 %v382, %v587
        %v624 = vadd.f32 %v383, %v592
        %v625 = vadd.f32 %v384, %v595
        %v626 = vadd.f32 %v385, %v600
        %v627 = vadd.f32 %v386, %v603
        %v628 = vadd.f32 %v387, %v608
        %v629 = vadd.f32 %v388, %v611
        %630 = vst [vmem:[#allocation2] sm:$0xff] %v614
        %631 = vst [vmem:[#allocation2 + $0x8] sm:$0xff] %v615
        %632 = vst [vmem:[#allocation2 + $0x10] sm:$0xff] %v616
        %633 = vst [vmem:[#allocation2 + $0x18] sm:$0xff] %v617
        %634 = vst [vmem:[#allocation2 + $0x20] sm:$0xff] %v618
        %635 = vst [vmem:[#allocation2 + $0x28] sm:$0xff] %v619
        %636 = vst [vmem:[#allocation2 + $0x30] sm:$0xff] %v620
        %637 = vst [vmem:[#allocation2 + $0x38] sm:$0xff] %v621
        %638 = vst [vmem:[#allocation2 + $0x40] sm:$0xff] %v622
        %639 = vst [vmem:[#allocation2 + $0x48] sm:$0xff] %v623
        %640 = vst [vmem:[#allocation2 + $0x50] sm:$0xff] %v624
        %641 = vst [vmem:[#allocation2 + $0x58] sm:$0xff] %v625
        %642 = vst [vmem:[#allocation2 + $0x60] sm:$0xff] %v626
        %643 = vst [vmem:[#allocation2 + $0x68] sm:$0xff] %v627
        %644 = vst [vmem:[#allocation2 + $0x70] sm:$0xff] %v628
        %645 = vst [vmem:[#allocation2 + $0x78] sm:$0xff] %v629
        // Predicated region
        $region45: #{_lambda_.7} parent=39 // pred_check
          %p646 = pneg %p353
        $region46: #{_lambda_.7} parent=39 // pred_check_branch
          %648 = sbr.rel (%p646) target = $region48
        $region47: #{_lambda_.7} parent=39 // pred_region
          %v649 = vld [vmem:[#allocation2] sm:$0xff]
          %v650 = vld [vmem:[#allocation2 + $0x8] sm:$0xff]
          %v651 = vld [vmem:[#allocation2 + $0x10] sm:$0xff]
          %v652 = vld [vmem:[#allocation2 + $0x18] sm:$0xff]
          %v653 = vld [vmem:[#allocation2 + $0x20] sm:$0xff]
          %v654 = vld [vmem:[#allocation2 + $0x28] sm:$0xff]
          %v655 = vld [vmem:[#allocation2 + $0x30] sm:$0xff]
          %v656 = vld [vmem:[#allocation2 + $0x38] sm:$0xff]
          %v657 = vld [vmem:[#allocation2 + $0x40] sm:$0xff]
          %v658 = vld [vmem:[#allocation2 + $0x48] sm:$0xff]
          %v659 = vld [vmem:[#allocation2 + $0x50] sm:$0xff]
          %v660 = vld [vmem:[#allocation2 + $0x58] sm:$0xff]
          %v661 = vld [vmem:[#allocation2 + $0x60] sm:$0xff]
          %v662 = vld [vmem:[#allocation2 + $0x68] sm:$0xff]
          %v663 = vld [vmem:[#allocation2 + $0x70] sm:$0xff]
          %v664 = vld [vmem:[#allocation2 + $0x78] sm:$0xff]
          %v665 = vld [vmem:[%s338] sm:$0x1]
          %v667 = vlaneseq
          %v668 = vshrl.u32 %v667, 7
          %v669 = vsub.s32 0, %v668
          %v670 = vrot.slane %v665, %v669
          %v672 = vmul.f32 %v649, %v670
          %v673 = vmul.f32 %v650, %v670
          %v674 = vmul.f32 %v651, %v670
          %v675 = vmul.f32 %v652, %v670
          %v676 = vmul.f32 %v653, %v670
          %v677 = vmul.f32 %v654, %v670
          %v678 = vmul.f32 %v655, %v670
          %v679 = vmul.f32 %v656, %v670
          %v680 = vmul.f32 %v657, %v670
          %v681 = vmul.f32 %v658, %v670
          %v682 = vmul.f32 %v659, %v670
          %v683 = vmul.f32 %v660, %v670
          %v684 = vmul.f32 %v661, %v670
          %v685 = vmul.f32 %v662, %v670
          %v686 = vmul.f32 %v663, %v670
          %v687 = vmul.f32 %v664, %v670
          %v688 = vld [vmem:[%s341] sm:$0x1]
          %v690 = vlaneseq
          %v691 = vshrl.u32 %v690, 7
          %v692 = vsub.s32 0, %v691
          %v693 = vrot.slane %v688, %v692
          %v695 = vadd.f32 %v672, %v693
          %v696 = vadd.f32 %v673, %v693
          %v697 = vadd.f32 %v674, %v693
          %v698 = vadd.f32 %v675, %v693
          %v699 = vadd.f32 %v676, %v693
          %v700 = vadd.f32 %v677, %v693
          %v701 = vadd.f32 %v678, %v693
          %v702 = vadd.f32 %v679, %v693
          %v703 = vadd.f32 %v680, %v693
          %v704 = vadd.f32 %v681, %v693
          %v705 = vadd.f32 %v682, %v693
          %v706 = vadd.f32 %v683, %v693
          %v707 = vadd.f32 %v684, %v693
          %v708 = vadd.f32 %v685, %v693
          %v709 = vadd.f32 %v686, %v693
          %v710 = vadd.f32 %v687, %v693
          %v711 = vld [vmem:[%s349] sm:$0xf]
          %v712 = vld [vmem:[%s349 + $0x4] sm:$0xf]
          %v713 = vld [vmem:[%s349 + $0x8] sm:$0xf]
          %v714 = vld [vmem:[%s349 + $0xc] sm:$0xf]
          %v715 = vld [vmem:[%s349 + $0x10] sm:$0xf]
          %v716 = vld [vmem:[%s349 + $0x14] sm:$0xf]
          %v717 = vld [vmem:[%s349 + $0x18] sm:$0xf]
          %v718 = vld [vmem:[%s349 + $0x1c] sm:$0xf]
          %v719 = vld [vmem:[%s349 + $0x20] sm:$0xf]
          %v720 = vld [vmem:[%s349 + $0x24] sm:$0xf]
          %v721 = vld [vmem:[%s349 + $0x28] sm:$0xf]
          %v722 = vld [vmem:[%s349 + $0x2c] sm:$0xf]
          %v723 = vld [vmem:[%s349 + $0x30] sm:$0xf]
          %v724 = vld [vmem:[%s349 + $0x34] sm:$0xf]
          %v725 = vld [vmem:[%s349 + $0x38] sm:$0xf]
          %v726 = vld [vmem:[%s349 + $0x3c] sm:$0xf]
          %v727 = vunpack.c.l.bf16 %v711
          %v728 = vunpack.c.l.bf16 %v712
          %v729 = vunpack.c.l.bf16 %v713
          %v730 = vunpack.c.l.bf16 %v714
          %v731 = vunpack.c.l.bf16 %v715
          %v732 = vunpack.c.l.bf16 %v716
          %v733 = vunpack.c.l.bf16 %v717
          %v734 = vunpack.c.l.bf16 %v718
          %v735 = vunpack.c.l.bf16 %v719
          %v736 = vunpack.c.l.bf16 %v720
          %v737 = vunpack.c.l.bf16 %v721
          %v738 = vunpack.c.l.bf16 %v722
          %v739 = vunpack.c.l.bf16 %v723
          %v740 = vunpack.c.l.bf16 %v724
          %v741 = vunpack.c.l.bf16 %v725
          %v742 = vunpack.c.l.bf16 %v726
          %v743 = vadd.f32 %v695, %v727
          %v744 = vadd.f32 %v696, %v728
          %v745 = vadd.f32 %v697, %v729
          %v746 = vadd.f32 %v698, %v730
          %v747 = vadd.f32 %v699, %v731
          %v748 = vadd.f32 %v700, %v732
          %v749 = vadd.f32 %v701, %v733
          %v750 = vadd.f32 %v702, %v734
          %v751 = vadd.f32 %v703, %v735
          %v752 = vadd.f32 %v704, %v736
          %v753 = vadd.f32 %v705, %v737
          %v754 = vadd.f32 %v706, %v738
          %v755 = vadd.f32 %v707, %v739
          %v756 = vadd.f32 %v708, %v740
          %v757 = vadd.f32 %v709, %v741
          %v758 = vadd.f32 %v710, %v742
          %v759 = vmax.f32 %v743, 0.0
          %v760 = vmax.f32 %v744, 0.0
          %v761 = vmax.f32 %v745, 0.0
          %v762 = vmax.f32 %v746, 0.0
          %v763 = vmax.f32 %v747, 0.0
          %v764 = vmax.f32 %v748, 0.0
          %v765 = vmax.f32 %v749, 0.0
          %v766 = vmax.f32 %v750, 0.0
          %v767 = vmax.f32 %v751, 0.0
          %v768 = vmax.f32 %v752, 0.0
          %v769 = vmax.f32 %v753, 0.0
          %v770 = vmax.f32 %v754, 0.0
          %v771 = vmax.f32 %v755, 0.0
          %v772 = vmax.f32 %v756, 0.0
          %v773 = vmax.f32 %v757, 0.0
          %v774 = vmax.f32 %v758, 0.0
          %775 = vst [vmem:[%s317] sm:$0xff] %v759
          %776 = vst [vmem:[%s317 + $0x8] sm:$0xff] %v760
          %777 = vst [vmem:[%s317 + $0x10] sm:$0xff] %v761
          %778 = vst [vmem:[%s317 + $0x18] sm:$0xff] %v762
          %779 = vst [vmem:[%s317 + $0x20] sm:$0xff] %v763
          %780 = vst [vmem:[%s317 + $0x28] sm:$0xff] %v764
          %781 = vst [vmem:[%s317 + $0x30] sm:$0xff] %v765
          %782 = vst [vmem:[%s317 + $0x38] sm:$0xff] %v766
          %783 = vst [vmem:[%s317 + $0x40] sm:$0xff] %v767
          %784 = vst [vmem:[%s317 + $0x48] sm:$0xff] %v768
          %785 = vst [vmem:[%s317 + $0x50] sm:$0xff] %v769
          %786 = vst [vmem:[%s317 + $0x58] sm:$0xff] %v770
          %787 = vst [vmem:[%s317 + $0x60] sm:$0xff] %v771
          %788 = vst [vmem:[%s317 + $0x68] sm:$0xff] %v772
          %789 = vst [vmem:[%s317 + $0x70] sm:$0xff] %v773
          %790 = vst [vmem:[%s317 + $0x78] sm:$0xff] %v774
        $region48: #{_lambda_.7} parent=39 // pred_fallthru
          _
        %s791 = sand.u32 %s184, 1
        %s792 = scalar_lea.sflag [#allocation4], %s791
        %s793 = sand.u32 %s184, 1
        %s794 = smul.addr %s793, 128
        %s795 = scalar_lea.vmem [#allocation3], %s794
        // Predicated region
        $region49: #{_lambda_.7} parent=39 // pred_check
          %p796 = pneg %p194
        $region50: #{_lambda_.7} parent=39 // pred_check_branch
          %798 = sbr.rel (%p796) target = $region52
        $region51: #{_lambda_.7} parent=39 // pred_region
          %s799 = smul.u32 16, %s24
          %s801 = ssub.s32 2048, 2048
          %802 = vsyncadd %s792, %s801
          %s803 = sadd.s32 %s25, %s799
          %s804 = smul.addr %s803, 128
          %s805 = scalar_lea.hbm %s5, %s804
          %s806 = sshll.u32 %s795, 4
          %s807 = int_to_ptr.vmem [resolvable:$true] %s806
          %812 = dma.vmem_to_hbm [thread:$0]  %s807, 2048, %s805, %s792, 128, 128, 8
        $region52: #{_lambda_.7} parent=39 // pred_fallthru
          _
      $region40: #{_lambda_.7} parent=5 // pred_fallthru
        _
      %p813 = scmp.le.s32.totalorder 2, %s14
      // Predicated region
      $region53: #{_lambda_.7} parent=5 // pred_check
        %p814 = pneg %p813
      $region54: #{_lambda_.7} parent=5 // pred_check_branch
        %816 = sbr.rel (%p814) target = $region56
      $region55: #{_lambda_.7} parent=5 // pred_region
        %s817 = ssub.s32 %s14, 2
        // Predicated region
        $region57: #{_lambda_.7} parent=55 // pred_check
          %p818 = pneg %p200
        $region58: #{_lambda_.7} parent=55 // pred_check_branch
          %820 = sbr.rel (%p818) target = $region60
        $region59: #{_lambda_.7} parent=55 // pred_region
          %s821 = sand.u32 %s185, 1
          %s822 = scalar_lea.sflag [#allocation4], %s821
          %s823 = sand.u32 %s185, 1
          %s824 = smul.addr %s823, 128
          %s825 = scalar_lea.vmem [#allocation3], %s824
          %826 = dma.done %s822, 2048
        $region60: #{_lambda_.7} parent=55 // pred_fallthru
          _
      $region56: #{_lambda_.7} parent=5 // pred_fallthru
        _
    $region6: #{_lambda_.7} parent=1 // loop_footer
      %s18 = sadd.s32 1, %s14
    $region7: #{_lambda_.7} parent=1 // loop_footer_branch
      %13 = sbr.rel target = $region3
    $region8: #{_lambda_.7} parent=1 // loop_exit
      _
    %827 = vsyncpa [#allocation4], 1
    %s828 = scalar_lea.sflag [#allocation4], 1
    %829 = vsyncpa %s828, 1

// kernel: _lambda_.5
$region0: #{_lambda_.5}
  #allocation0 [shape = 'u32[]', space=smem, size = 0x4, offset = 0x4, fixed_abs, tag = 'smem constant byte address 0x4 - core index']
  #allocation1 [shape = 'u32[144,128]{1,0:T(1,128)}', space=vmem, size = 0x12000, scoped, tag = 'internal scratch']
  %s0 = inlined_call_operand.vmem [shape: bf16[2,18,18,8], index: 0, kind: input, shape index: {}]
  %s1 = inlined_call_operand.vmem [shape: bf16[9,8,8], index: 1, kind: input, shape index: {}]
  %s2 = inlined_call_operand.vmem [shape: f32[1,8], index: 2, kind: input, shape index: {}]
  %s3 = inlined_call_operand.vmem [shape: f32[1,8], index: 3, kind: input, shape index: {}]
  %s4 = inlined_call_operand.vmem [shape: bf16[2,256,8], index: 4, kind: output, shape index: {}]
  %s5 = sld [smem:[#allocation0]]
  $region49: #{_lambda_.5} parent=0
    _
  %s7 = ssub.s32 1, %s5
  %s8 = scalar_select 0, %s7, %s5
  loop: start=0, step=1, limit=4
  $region2: #{_lambda_.5} parent=0 // loop_pre_header
    _
  $region3: #{_lambda_.5} parent=0 // loop_header
    %s10 = sphi 0, %s14
    %p11 = scmp.ge.s32.totalorder %s10, 4
    %s20 = sphi 0, %s22
    %s23 = sphi 0, %s20
    %s24 = sphi 0, %s23
    %s40 = sphi 0, %s24
    %s44 = sphi 0, %s44
    %s46 = sphi 0, %s44
    %s47 = sphi 0, %s46
    %s61 = sphi 0, %s47
    %s65 = sphi 0, %s65
    %s67 = sphi 0, %s65
    %s68 = sphi 0, %s67
    %s82 = sphi 0, %s68
    %s86 = sphi 0, %s86
    %s88 = sphi 0, %s86
    %s89 = sphi 0, %s88
    %s103 = sphi 0, %s89
    %s109 = sphi 0, %s111
    %s112 = sphi 0, %s109
    %s113 = sphi 0, %s112
    %s129 = sphi 0, %s113
  $region4: #{_lambda_.5} parent=0 // loop_header_branch
    %13 = sbr.rel (%p11) target = $region8
  $region5: #{_lambda_.5} parent=0 // loop_body
    %s15 = ssub.s32 %s10, 1
    %s16 = ssub.s32 %s10, 2
    %s17 = sadd.s32 %s10, 1
    %s18 = ssub.s32 %s10, %s17
    %p19 = scmp.eq.s32.totalorder %s18, 0
    %s21 = sadd.s32 %s20, 1
    %s22 = scalar_select %p19, %s20, %s21
    %p25 = pneg %p19
    %p26 = scmp.eq.s32.totalorder %s10, 1
    %p27 = por %p25, %p26
    %p28 = scmp.ne.s32.totalorder %s20, %s23
    %p29 = scmp.eq.s32.totalorder %s10, 0
    %p30 = por %p28, %p29
    %p31 = scmp.ne.s32.totalorder %s20, %s23
    %p32 = scmp.eq.s32.totalorder %s15, 1
    %p33 = por %p31, %p32
    %p34 = scmp.ne.s32.totalorder %s23, %s24
    %p35 = scmp.eq.s32.totalorder %s15, 0
    %p36 = por %p34, %p35
    %p37 = scmp.ne.s32.totalorder %s23, %s24
    %p38 = scmp.eq.s32.totalorder %s16, 1
    %p39 = por %p37, %p38
    %p41 = scmp.ne.s32.totalorder %s24, %s40
    %p42 = scmp.eq.s32.totalorder %s16, 0
    %p43 = por %p41, %p42
    %s45 = sadd.s32 %s44, 1
    %p48 = scmp.eq.s32.totalorder %s10, 1
    %p49 = scmp.ne.s32.totalorder %s44, %s46
    %p50 = scmp.eq.s32.totalorder %s10, 0
    %p51 = por %p49, %p50
    %p52 = scmp.ne.s32.totalorder %s44, %s46
    %p53 = scmp.eq.s32.totalorder %s15, 1
    %p54 = por %p52, %p53
    %p55 = scmp.ne.s32.totalorder %s46, %s47
    %p56 = scmp.eq.s32.totalorder %s15, 0
    %p57 = por %p55, %p56
    %p58 = scmp.ne.s32.totalorder %s46, %s47
    %p59 = scmp.eq.s32.totalorder %s16, 1
    %p60 = por %p58, %p59
    %p62 = scmp.ne.s32.totalorder %s47, %s61
    %p63 = scmp.eq.s32.totalorder %s16, 0
    %p64 = por %p62, %p63
    %s66 = sadd.s32 %s65, 1
    %p69 = scmp.eq.s32.totalorder %s10, 1
    %p70 = scmp.ne.s32.totalorder %s65, %s67
    %p71 = scmp.eq.s32.totalorder %s10, 0
    %p72 = por %p70, %p71
    %p73 = scmp.ne.s32.totalorder %s65, %s67
    %p74 = scmp.eq.s32.totalorder %s15, 1
    %p75 = por %p73, %p74
    %p76 = scmp.ne.s32.totalorder %s67, %s68
    %p77 = scmp.eq.s32.totalorder %s15, 0
    %p78 = por %p76, %p77
    %p79 = scmp.ne.s32.totalorder %s67, %s68
    %p80 = scmp.eq.s32.totalorder %s16, 1
    %p81 = por %p79, %p80
    %p83 = scmp.ne.s32.totalorder %s68, %s82
    %p84 = scmp.eq.s32.totalorder %s16, 0
    %p85 = por %p83, %p84
    %s87 = sadd.s32 %s86, 1
    %p90 = scmp.eq.s32.totalorder %s10, 1
    %p91 = scmp.ne.s32.totalorder %s86, %s88
    %p92 = scmp.eq.s32.totalorder %s10, 0
    %p93 = por %p91, %p92
    %p94 = scmp.ne.s32.totalorder %s86, %s88
    %p95 = scmp.eq.s32.totalorder %s15, 1
    %p96 = por %p94, %p95
    %p97 = scmp.ne.s32.totalorder %s88, %s89
    %p98 = scmp.eq.s32.totalorder %s15, 0
    %p99 = por %p97, %p98
    %p100 = scmp.ne.s32.totalorder %s88, %s89
    %p101 = scmp.eq.s32.totalorder %s16, 1
    %p102 = por %p100, %p101
    %p104 = scmp.ne.s32.totalorder %s89, %s103
    %p105 = scmp.eq.s32.totalorder %s16, 0
    %p106 = por %p104, %p105
    %s107 = ssub.s32 %s10, %s17
    %p108 = scmp.eq.s32.totalorder %s107, 0
    %s110 = sadd.s32 %s109, 1
    %s111 = scalar_select %p108, %s109, %s110
    %p114 = pneg %p108
    %p115 = scmp.eq.s32.totalorder %s10, 1
    %p116 = por %p114, %p115
    %p117 = scmp.ne.s32.totalorder %s109, %s112
    %p118 = scmp.eq.s32.totalorder %s10, 0
    %p119 = por %p117, %p118
    %p120 = scmp.ne.s32.totalorder %s109, %s112
    %p121 = scmp.eq.s32.totalorder %s15, 1
    %p122 = por %p120, %p121
    %p123 = scmp.ne.s32.totalorder %s112, %s113
    %p124 = scmp.eq.s32.totalorder %s15, 0
    %p125 = por %p123, %p124
    %p126 = scmp.ne.s32.totalorder %s112, %s113
    %p127 = scmp.eq.s32.totalorder %s16, 1
    %p128 = por %p126, %p127
    %p130 = scmp.ne.s32.totalorder %s113, %s129
    %p131 = scmp.eq.s32.totalorder %s16, 0
    %p132 = por %p130, %p131
    %p133 = scmp.le.s32.totalorder 1, %s10
    %p134 = scmp.lt.s32.totalorder %s10, 3
    %p135 = pnand %p133, %p134
    %p136 = pneg %p135
    // Predicated region
    $region9: #{_lambda_.5} parent=5 // pred_check
      _
    $region10: #{_lambda_.5} parent=5 // pred_check_branch
      %138 = sbr.rel (%p135) target = $region12
    $region11: #{_lambda_.5} parent=5 // pred_region
      %s139 = ssub.s32 %s10, 1
      // Predicated region
      $region13: #{_lambda_.5} parent=11 // pred_check
        %p140 = pneg %p57
      $region14: #{_lambda_.5} parent=11 // pred_check_branch
        %142 = sbr.rel (%p140) target = $region16
      $region15: #{_lambda_.5} parent=11 // pred_region
        _
      $region16: #{_lambda_.5} parent=11 // pred_fallthru
        _
      // Predicated region
      $region17: #{_lambda_.5} parent=11 // pred_check
        %p143 = pneg %p78
      $region18: #{_lambda_.5} parent=11 // pred_check_branch
        %145 = sbr.rel (%p143) target = $region20
      $region19: #{_lambda_.5} parent=11 // pred_region
        _
      $region20: #{_lambda_.5} parent=11 // pred_fallthru
        _
      // Predicated region
      $region21: #{_lambda_.5} parent=11 // pred_check
        %p146 = pneg %p99
      $region22: #{_lambda_.5} parent=11 // pred_check_branch
        %148 = sbr.rel (%p146) target = $region24
      $region23: #{_lambda_.5} parent=11 // pred_region
        _
      $region24: #{_lambda_.5} parent=11 // pred_fallthru
        _
    $region12: #{_lambda_.5} parent=5 // pred_fallthru
      _
    %p149 = scmp.lt.s32.totalorder %s10, 2
    // Predicated region
    $region25: #{_lambda_.5} parent=5 // pred_check
      %p150 = pneg %p149
    $region26: #{_lambda_.5} parent=5 // pred_check_branch
      %152 = sbr.rel (%p150) target = $region28
    $region27: #{_lambda_.5} parent=5 // pred_region
      // Predicated region
      $region29: #{_lambda_.5} parent=27 // pred_check
        %p153 = pneg %p30
      $region30: #{_lambda_.5} parent=27 // pred_check_branch
        %155 = sbr.rel (%p153) target = $region32
      $region31: #{_lambda_.5} parent=27 // pred_region
        %p156 = scmp.lt.s32.totalorder %s10, 1
        %s157 = scalar_select %p156, %s10, 1
        %s158 = smul.addr %s157, 54
        %s159 = smul.addr %s158, 4
        %s160 = scalar_lea.vmem %s0, %s159
      $region32: #{_lambda_.5} parent=27 // pred_fallthru
        _
    $region28: #{_lambda_.5} parent=5 // pred_fallthru
      _
    %p161 = scmp.le.s32.totalorder 1, %s10
    %p162 = scmp.lt.s32.totalorder %s10, 3
    %p163 = pnand %p161, %p162
    %p164 = pneg %p163
    // Predicated region
    $region33: #{_lambda_.5} parent=5 // pred_check
      _
    $region34: #{_lambda_.5} parent=5 // pred_check_branch
      %166 = sbr.rel (%p163) target = $region36
    $region35: #{_lambda_.5} parent=5 // pred_region
      %s167 = ssub.s32 %s10, 1
      %p168 = scmp.lt.s32.totalorder %s15, 1
      %s169 = scalar_select %p168, %s15, 1
      %s170 = smul.addr %s169, 54
      %s171 = smul.addr %s170, 4
      %s172 = scalar_lea.vmem %s0, %s171
      %p173 = pneg %p36
      %p174 = pneg %p33
      %p175 = pneg %p57
      %p176 = pneg %p54
      %p177 = pneg %p78
      %p178 = pneg %p75
      %p179 = pneg %p99
      %p180 = pneg %p96
      %p181 = pneg %p125
      %p182 = pneg %p122
      %p183 = scmp.lt.s32.totalorder %s15, 1
      %s184 = scalar_select %p183, %s15, 1
      %s185 = smul.addr %s184, 32
      %s186 = smul.addr %s185, 4
      %s187 = scalar_lea.vmem %s4, %s186
      %p188 = scmp.lt.s32.totalorder %s15, 1
      %s189 = scalar_select %p188, %s15, 1
      %s190 = smul.addr %s189, 54
      %s191 = smul.addr %s190, 4
      %s192 = scalar_lea.vmem %s0, %s191
      %p193 = scmp.lt.s32.totalorder %s15, 1
      %s194 = scalar_select %p193, %s15, 1
      %s195 = smul.addr %s194, 32
      %s196 = smul.addr %s195, 4
      %s197 = scalar_lea.vmem %s4, %s196
      %v199 = vld [vmem:[%s192] sm:$0xf]
      %v200 = vld [vmem:[%s192 + $0x4] sm:$0xf]
      %v201 = vld [vmem:[%s192 + $0x8] sm:$0x1]
      %v202 = vld [vmem:[%s192 + $0xc] sm:$0xf]
      %v203 = vld [vmem:[%s192 + $0x10] sm:$0xf]
      %v204 = vld [vmem:[%s192 + $0x14] sm:$0x1]
      %v205 = vld [vmem:[%s192 + $0x18] sm:$0xf]
      %v206 = vld [vmem:[%s192 + $0x1c] sm:$0xf]
      %v207 = vld [vmem:[%s192 + $0x20] sm:$0x1]
      %v208 = vld [vmem:[%s192 + $0x24] sm:$0xf]
      %v209 = vld [vmem:[%s192 + $0x28] sm:$0xf]
      %v210 = vld [vmem:[%s192 + $0x2c] sm:$0x1]
      %v211 = vld [vmem:[%s192 + $0x30] sm:$0xf]
      %v212 = vld [vmem:[%s192 + $0x34] sm:$0xf]
      %v213 = vld [vmem:[%s192 + $0x38] sm:$0x1]
      %v214 = vld [vmem:[%s192 + $0x3c] sm:$0xf]
      %v215 = vld [vmem:[%s192 + $0x40] sm:$0xf]
      %v216 = vld [vmem:[%s192 + $0x44] sm:$0x1]
      %v217 = vld [vmem:[%s192 + $0x48] sm:$0xf]
      %v218 = vld [vmem:[%s192 + $0x4c] sm:$0xf]
      %v219 = vld [vmem:[%s192 + $0x50] sm:$0x1]
      %v220 = vld [vmem:[%s192 + $0x54] sm:$0xf]
      %v221 = vld [vmem:[%s192 + $0x58] sm:$0xf]
      %v222 = vld [vmem:[%s192 + $0x5c] sm:$0x1]
      %v223 = vld [vmem:[%s192 + $0x60] sm:$0xf]
      %v224 = vld [vmem:[%s192 + $0x64] sm:$0xf]
      %v225 = vld [vmem:[%s192 + $0x68] sm:$0x1]
      %v226 = vld [vmem:[%s192 + $0x6c] sm:$0xf]
      %v227 = vld [vmem:[%s192 + $0x70] sm:$0xf]
      %v228 = vld [vmem:[%s192 + $0x74] sm:$0x1]
      %v229 = vld [vmem:[%s192 + $0x78] sm:$0xf]
      %v230 = vld [vmem:[%s192 + $0x7c] sm:$0xf]
      %v231 = vld [vmem:[%s192 + $0x80] sm:$0x1]
      %v232 = vld [vmem:[%s192 + $0x84] sm:$0xf]
      %v233 = vld [vmem:[%s192 + $0x88] sm:$0xf]
      %v234 = vld [vmem:[%s192 + $0x8c] sm:$0x1]
      %v235 = vld [vmem:[%s192 + $0x90] sm:$0xf]
      %v236 = vld [vmem:[%s192 + $0x94] sm:$0xf]
      %v237 = vld [vmem:[%s192 + $0x98] sm:$0x1]
      %v238 = vld [vmem:[%s192 + $0x9c] sm:$0xf]
      %v239 = vld [vmem:[%s192 + $0xa0] sm:$0xf]
      %v240 = vld [vmem:[%s192 + $0xa4] sm:$0x1]
      %v241 = vld [vmem:[%s192 + $0xa8] sm:$0xf]
      %v242 = vld [vmem:[%s192 + $0xac] sm:$0xf]
      %v243 = vld [vmem:[%s192 + $0xb0] sm:$0x1]
      %v244 = vld [vmem:[%s192 + $0xb4] sm:$0xf]
      %v245 = vld [vmem:[%s192 + $0xb8] sm:$0xf]
      %v246 = vld [vmem:[%s192 + $0xbc] sm:$0x1]
      %v247 = vld [vmem:[%s192 + $0xc0] sm:$0xf]
      %v248 = vld [vmem:[%s192 + $0xc4] sm:$0xf]
      %v249 = vld [vmem:[%s192 + $0xc8] sm:$0x1]
      %v250 = vld [vmem:[%s192 + $0xcc] sm:$0xf]
      %v251 = vld [vmem:[%s192 + $0xd0] sm:$0xf]
      %v252 = vld [vmem:[%s192 + $0xd4] sm:$0x1]
      %v253 = vld [vmem:[%s1] sm:$0xf]
      %v254 = vld [vmem:[%s1 + $0x4] sm:$0xf]
      %v255 = vld [vmem:[%s1 + $0x8] sm:$0xf]
      %v256 = vld [vmem:[%s1 + $0xc] sm:$0xf]
      %v257 = vld [vmem:[%s1 + $0x10] sm:$0xf]
      %v258 = vld [vmem:[%s1 + $0x14] sm:$0xf]
      %v259 = vld [vmem:[%s1 + $0x18] sm:$0xf]
      %v260 = vld [vmem:[%s1 + $0x1c] sm:$0xf]
      %v261 = vld [vmem:[%s1 + $0x20] sm:$0xf]
      %vm262 = vsmask.f32 3328
      %vm263 = vsmask.f32 7440
      %vm264 = vmor %vm262, %vm263
      %v266 = vshrl.u32 %v199, 16
      %v268 = vrot.slane %v266, 4
      %v269 = vshll.u32 %v199, 16
      %v271 = vrot.slane %v269, 5
      %v272 = vor.u32 %v268, %v271
      %v273 = vrot.slane %v272, 4
      %v275 = vshll.u32 %v200, 16
      %v277 = vrot.slane %v275, 5
      %v278 = vsel %vm264, %v273, %v277
      %v279 = vshrl.u32 %v200, 16
      %v281 = vrot.slane %v279, 4
      %v282 = vor.u32 %v281, %v277
      %v283 = vrot.slane %v282, 4
      %v285 = vshll.u32 %v201, 16
      %v287 = vrot.slane %v285, 5
      %v288 = vsel %vm264, %v283, %v287
      %v290 = vshrl.u32 %v202, 16
      %v292 = vrot.slane %v290, 4
      %v293 = vshll.u32 %v202, 16
      %v295 = vrot.slane %v293, 5
      %v296 = vor.u32 %v292, %v295
      %v297 = vrot.slane %v296, 4
      %v299 = vshll.u32 %v203, 16
      %v301 = vrot.slane %v299, 5
      %v302 = vsel %vm264, %v297, %v301
      %v303 = vshrl.u32 %v203, 16
      %v305 = vrot.slane %v303, 4
      %v306 = vor.u32 %v305, %v301
      %v307 = vrot.slane %v306, 4
      %v309 = vshll.u32 %v204, 16
      %v311 = vrot.slane %v309, 5
      %v312 = vsel %vm264, %v307, %v311
      %v314 = vshrl.u32 %v205, 16
      %v316 = vrot.slane %v314, 4
      %v317 = vshll.u32 %v205, 16
      %v319 = vrot.slane %v317, 5
      %v320 = vor.u32 %v316, %v319
      %v321 = vrot.slane %v320, 4
      %v323 = vshll.u32 %v206, 16
      %v325 = vrot.slane %v323, 5
      %v326 = vsel %vm264, %v321, %v325
      %v327 = vshrl.u32 %v206, 16
      %v329 = vrot.slane %v327, 4
      %v330 = vor.u32 %v329, %v325
      %v331 = vrot.slane %v330, 4
      %v333 = vshll.u32 %v207, 16
      %v335 = vrot.slane %v333, 5
      %v336 = vsel %vm264, %v331, %v335
      %v338 = vshrl.u32 %v208, 16
      %v340 = vrot.slane %v338, 4
      %v341 = vshll.u32 %v208, 16
      %v343 = vrot.slane %v341, 5
      %v344 = vor.u32 %v340, %v343
      %v345 = vrot.slane %v344, 4
      %v347 = vshll.u32 %v209, 16
      %v349 = vrot.slane %v347, 5
      %v350 = vsel %vm264, %v345, %v349
      %v351 = vshrl.u32 %v209, 16
      %v353 = vrot.slane %v351, 4
      %v354 = vor.u32 %v353, %v349
      %v355 = vrot.slane %v354, 4
      %v357 = vshll.u32 %v210, 16
      %v359 = vrot.slane %v357, 5
      %v360 = vsel %vm264, %v355, %v359
      %v362 = vshrl.u32 %v211, 16
      %v364 = vrot.slane %v362, 4
      %v365 = vshll.u32 %v211, 16
      %v367 = vrot.slane %v365, 5
      %v368 = vor.u32 %v364, %v367
      %v369 = vrot.slane %v368, 4
      %v371 = vshll.u32 %v212, 16
      %v373 = vrot.slane %v371, 5
      %v374 = vsel %vm264, %v369, %v373
      %v375 = vshrl.u32 %v212, 16
      %v377 = vrot.slane %v375, 4
      %v378 = vor.u32 %v377, %v373
      %v379 = vrot.slane %v378, 4
      %v381 = vshll.u32 %v213, 16
      %v383 = vrot.slane %v381, 5
      %v384 = vsel %vm264, %v379, %v383
      %v386 = vshrl.u32 %v214, 16
      %v388 = vrot.slane %v386, 4
      %v389 = vshll.u32 %v214, 16
      %v391 = vrot.slane %v389, 5
      %v392 = vor.u32 %v388, %v391
      %v393 = vrot.slane %v392, 4
      %v395 = vshll.u32 %v215, 16
      %v397 = vrot.slane %v395, 5
      %v398 = vsel %vm264, %v393, %v397
      %v399 = vshrl.u32 %v215, 16
      %v401 = vrot.slane %v399, 4
      %v402 = vor.u32 %v401, %v397
      %v403 = vrot.slane %v402, 4
      %v405 = vshll.u32 %v216, 16
      %v407 = vrot.slane %v405, 5
      %v408 = vsel %vm264, %v403, %v407
      %v410 = vshrl.u32 %v217, 16
      %v412 = vrot.slane %v410, 4
      %v413 = vshll.u32 %v217, 16
      %v415 = vrot.slane %v413, 5
      %v416 = vor.u32 %v412, %v415
      %v417 = vrot.slane %v416, 4
      %v419 = vshll.u32 %v218, 16
      %v421 = vrot.slane %v419, 5
      %v422 = vsel %vm264, %v417, %v421
      %v423 = vshrl.u32 %v218, 16
      %v425 = vrot.slane %v423, 4
      %v426 = vor.u32 %v425, %v421
      %v427 = vrot.slane %v426, 4
      %v429 = vshll.u32 %v219, 16
      %v431 = vrot.slane %v429, 5
      %v432 = vsel %vm264, %v427, %v431
      %v434 = vshrl.u32 %v220, 16
      %v436 = vrot.slane %v434, 4
      %v437 = vshll.u32 %v220, 16
      %v439 = vrot.slane %v437, 5
      %v440 = vor.u32 %v436, %v439
      %v441 = vrot.slane %v440, 4
      %v443 = vshll.u32 %v221, 16
      %v445 = vrot.slane %v443, 5
      %v446 = vsel %vm264, %v441, %v445
      %v447 = vshrl.u32 %v221, 16
      %v449 = vrot.slane %v447, 4
      %v450 = vor.u32 %v449, %v445
      %v451 = vrot.slane %v450, 4
      %v453 = vshll.u32 %v222, 16
      %v455 = vrot.slane %v453, 5
      %v456 = vsel %vm264, %v451, %v455
      %v458 = vshrl.u32 %v223, 16
      %v460 = vrot.slane %v458, 4
      %v461 = vshll.u32 %v223, 16
      %v463 = vrot.slane %v461, 5
      %v464 = vor.u32 %v460, %v463
      %v465 = vrot.slane %v464, 4
      %v467 = vshll.u32 %v224, 16
      %v469 = vrot.slane %v467, 5
      %v470 = vsel %vm264, %v465, %v469
      %v471 = vshrl.u32 %v224, 16
      %v473 = vrot.slane %v471, 4
      %v474 = vor.u32 %v473, %v469
      %v475 = vrot.slane %v474, 4
      %v477 = vshll.u32 %v225, 16
      %v479 = vrot.slane %v477, 5
      %v480 = vsel %vm264, %v475, %v479
      %v482 = vshrl.u32 %v226, 16
      %v484 = vrot.slane %v482, 4
      %v485 = vshll.u32 %v226, 16
      %v487 = vrot.slane %v485, 5
      %v488 = vor.u32 %v484, %v487
      %v489 = vrot.slane %v488, 4
      %v491 = vshll.u32 %v227, 16
      %v493 = vrot.slane %v491, 5
      %v494 = vsel %vm264, %v489, %v493
      %v495 = vshrl.u32 %v227, 16
      %v497 = vrot.slane %v495, 4
      %v498 = vor.u32 %v497, %v493
      %v499 = vrot.slane %v498, 4
      %v501 = vshll.u32 %v228, 16
      %v503 = vrot.slane %v501, 5
      %v504 = vsel %vm264, %v499, %v503
      %v506 = vshrl.u32 %v229, 16
      %v508 = vrot.slane %v506, 4
      %v509 = vshll.u32 %v229, 16
      %v511 = vrot.slane %v509, 5
      %v512 = vor.u32 %v508, %v511
      %v513 = vrot.slane %v512, 4
      %v515 = vshll.u32 %v230, 16
      %v517 = vrot.slane %v515, 5
      %v518 = vsel %vm264, %v513, %v517
      %v519 = vshrl.u32 %v230, 16
      %v521 = vrot.slane %v519, 4
      %v522 = vor.u32 %v521, %v517
      %v523 = vrot.slane %v522, 4
      %v525 = vshll.u32 %v231, 16
      %v527 = vrot.slane %v525, 5
      %v528 = vsel %vm264, %v523, %v527
      %v530 = vshrl.u32 %v232, 16
      %v532 = vrot.slane %v530, 4
      %v533 = vshll.u32 %v232, 16
      %v535 = vrot.slane %v533, 5
      %v536 = vor.u32 %v532, %v535
      %v537 = vrot.slane %v536, 4
      %v539 = vshll.u32 %v233, 16
      %v541 = vrot.slane %v539, 5
      %v542 = vsel %vm264, %v537, %v541
      %v543 = vshrl.u32 %v233, 16
      %v545 = vrot.slane %v543, 4
      %v546 = vor.u32 %v545, %v541
      %v547 = vrot.slane %v546, 4
      %v549 = vshll.u32 %v234, 16
      %v551 = vrot.slane %v549, 5
      %v552 = vsel %vm264, %v547, %v551
      %v554 = vshrl.u32 %v235, 16
      %v556 = vrot.slane %v554, 4
      %v557 = vshll.u32 %v235, 16
      %v559 = vrot.slane %v557, 5
      %v560 = vor.u32 %v556, %v559
      %v561 = vrot.slane %v560, 4
      %v563 = vshll.u32 %v236, 16
      %v565 = vrot.slane %v563, 5
      %v566 = vsel %vm264, %v561, %v565
      %v567 = vshrl.u32 %v236, 16
      %v569 = vrot.slane %v567, 4
      %v570 = vor.u32 %v569, %v565
      %v571 = vrot.slane %v570, 4
      %v573 = vshll.u32 %v237, 16
      %v575 = vrot.slane %v573, 5
      %v576 = vsel %vm264, %v571, %v575
      %v578 = vshrl.u32 %v238, 16
      %v580 = vrot.slane %v578, 4
      %v581 = vshll.u32 %v238, 16
      %v583 = vrot.slane %v581, 5
      %v584 = vor.u32 %v580, %v583
      %v585 = vrot.slane %v584, 4
      %v587 = vshll.u32 %v239, 16
      %v589 = vrot.slane %v587, 5
      %v590 = vsel %vm264, %v585, %v589
      %v591 = vshrl.u32 %v239, 16
      %v593 = vrot.slane %v591, 4
      %v594 = vor.u32 %v593, %v589
      %v595 = vrot.slane %v594, 4
      %v597 = vshll.u32 %v240, 16
      %v599 = vrot.slane %v597, 5
      %v600 = vsel %vm264, %v595, %v599
      %v602 = vshrl.u32 %v241, 16
      %v604 = vrot.slane %v602, 4
      %v605 = vshll.u32 %v241, 16
      %v607 = vrot.slane %v605, 5
      %v608 = vor.u32 %v604, %v607
      %v609 = vrot.slane %v608, 4
      %v611 = vshll.u32 %v242, 16
      %v613 = vrot.slane %v611, 5
      %v614 = vsel %vm264, %v609, %v613
      %v615 = vshrl.u32 %v242, 16
      %v617 = vrot.slane %v615, 4
      %v618 = vor.u32 %v617, %v613
      %v619 = vrot.slane %v618, 4
      %v621 = vshll.u32 %v243, 16
      %v623 = vrot.slane %v621, 5
      %v624 = vsel %vm264, %v619, %v623
      %v626 = vshrl.u32 %v244, 16
      %v628 = vrot.slane %v626, 4
      %v629 = vshll.u32 %v244, 16
      %v631 = vrot.slane %v629, 5
      %v632 = vor.u32 %v628, %v631
      %v633 = vrot.slane %v632, 4
      %v635 = vshll.u32 %v245, 16
      %v637 = vrot.slane %v635, 5
      %v638 = vsel %vm264, %v633, %v637
      %v639 = vshrl.u32 %v245, 16
      %v641 = vrot.slane %v639, 4
      %v642 = vor.u32 %v641, %v637
      %v643 = vrot.slane %v642, 4
      %v645 = vshll.u32 %v246, 16
      %v647 = vrot.slane %v645, 5
      %v648 = vsel %vm264, %v643, %v647
      %v649 = vunpack.c.l.b16 %v278
      %v650 = vunpack.c.l.b16 %v288
      %v651 = vunpack.c.l.b16 %v302
      %v652 = vunpack.c.l.b16 %v312
      %v653 = vunpack.c.l.b16 %v326
      %v654 = vunpack.c.l.b16 %v336
      %v655 = vunpack.c.l.b16 %v350
      %v656 = vunpack.c.l.b16 %v360
      %v657 = vunpack.c.l.b16 %v374
      %v658 = vunpack.c.l.b16 %v384
      %v659 = vunpack.c.l.b16 %v398
      %v660 = vunpack.c.l.b16 %v408
      %v661 = vunpack.c.l.b16 %v422
      %v662 = vunpack.c.l.b16 %v432
      %v663 = vunpack.c.l.b16 %v446
      %v664 = vunpack.c.l.b16 %v456
      %v665 = vunpack.c.l.b16 %v470
      %v666 = vunpack.c.l.b16 %v480
      %v667 = vunpack.c.l.b16 %v494
      %v668 = vunpack.c.l.b16 %v504
      %v669 = vunpack.c.l.b16 %v518
      %v670 = vunpack.c.l.b16 %v528
      %v671 = vunpack.c.l.b16 %v542
      %v672 = vunpack.c.l.b16 %v552
      %v673 = vunpack.c.l.b16 %v566
      %v674 = vunpack.c.l.b16 %v576
      %v675 = vunpack.c.l.b16 %v590
      %v676 = vunpack.c.l.b16 %v600
      %v677 = vunpack.c.l.b16 %v614
      %v678 = vunpack.c.l.b16 %v624
      %v679 = vunpack.c.l.b16 %v638
      %v680 = vunpack.c.l.b16 %v648
      %v681 = vpack.c.b16 %v650, %v649
      %v682 = vpack.c.b16 %v652, %v651
      %v683 = vpack.c.b16 %v654, %v653
      %v684 = vpack.c.b16 %v656, %v655
      %v685 = vpack.c.b16 %v658, %v657
      %v686 = vpack.c.b16 %v660, %v659
      %v687 = vpack.c.b16 %v662, %v661
      %v688 = vpack.c.b16 %v664, %v663
      %v689 = vpack.c.b16 %v666, %v665
      %v690 = vpack.c.b16 %v668, %v667
      %v691 = vpack.c.b16 %v670, %v669
      %v692 = vpack.c.b16 %v672, %v671
      %v693 = vpack.c.b16 %v674, %v673
      %v694 = vpack.c.b16 %v676, %v675
      %v695 = vpack.c.b16 %v678, %v677
      %v696 = vpack.c.b16 %v680, %v679
      %vm697 = vcmask 64512
      %v699 = vsel %vm697, %v681, 0
      %v702 = vsel %vm697, %v682, 0
      %v705 = vsel %vm697, %v683, 0
      %v708 = vsel %vm697, %v684, 0
      %v711 = vsel %vm697, %v685, 0
      %v714 = vsel %vm697, %v686, 0
      %v717 = vsel %vm697, %v687, 0
      %v720 = vsel %vm697, %v688, 0
      %v723 = vsel %vm697, %v689, 0
      %v726 = vsel %vm697, %v690, 0
      %v729 = vsel %vm697, %v691, 0
      %v732 = vsel %vm697, %v692, 0
      %v735 = vsel %vm697, %v693, 0
      %v738 = vsel %vm697, %v694, 0
      %v741 = vsel %vm697, %v695, 0
      %v744 = vsel %vm697, %v696, 0
      %vm746 = vcmask 1043456
      %v748 = vsel %vm746, %v254, 0
      %750 = vmatprep.subr.bf16.mxu0 0
      %751 = vmatpush1.bf16.msra.mxu0 %v748
      %752 = vmatprep.subr.bf16.mxu0 0
      %753 = vmatpush1.bf16.msra.mxu0 0
      %754 = vmatprep.subr.bf16.mxu0 0
      %755 = vmatpush1.bf16.msra.mxu0 0
      %756 = vmatprep.subr.bf16.mxu0 0
      %757 = vmatpush1.bf16.msra.mxu0 0
      %758 = vmatprep.subr.bf16.mxu0 0
      %759 = vmatpush1.bf16.msra.mxu0 0
      %760 = vmatprep.subr.bf16.mxu0 0
      %761 = vmatpush1.bf16.msra.mxu0 0
      %762 = vmatprep.subr.bf16.mxu0 0
      %763 = vmatpush1.bf16.msra.mxu0 0
      %764 = vmatprep.subr.bf16.mxu0 0
      %765 = vmatpush1.bf16.msra.mxu0 0
      %766 = vmatprep.subr.bf16.mxu0 0
      %767 = vmatpush1.bf16.msra.mxu0 0
      %768 = vmatprep.subr.bf16.mxu0 0
      %769 = vmatpush1.bf16.msra.mxu0 0
      %770 = vmatprep.subr.bf16.mxu0 0
      %771 = vmatpush1.bf16.msra.mxu0 0
      %772 = vmatprep.subr.bf16.mxu0 0
      %773 = vmatpush1.bf16.msra.mxu0 0
      %774 = vmatprep.subr.bf16.mxu0 0
      %775 = vmatpush1.bf16.msra.mxu0 0
      %776 = vmatprep.subr.bf16.mxu0 0
      %777 = vmatpush1.bf16.msra.mxu0 0
      %778 = vmatprep.subr.bf16.mxu0 0
      %779 = vmatpush1.bf16.msra.mxu0 0
      %780 = vmatprep.subr.bf16.mxu0 0
      %781 = vmatpush1.bf16.msra.mxu0 0
      %782 = vmatprep.mubr.bf16.mxu0 0
      %783 = vmatmul.mubr.bf16.gmra.mrb[0].mxu0 %v699
      %v784 = vpop.f32.mrb[0].mxu0
      %v785 = vadd.f32 0.0, %v784
      %v786 = vpop.f32.mrb[0].mxu0
      %v787 = vpop.f32.mrb[0].mxu0
      %v788 = vadd.f32 0.0, %v787
      %v789 = vpop.f32.mrb[0].mxu0
      %790 = vmatprep.mubr.bf16.mxu0 0
      %791 = vmatmul.mubr.bf16.gmra.mrb[0].mxu0 %v702
      %v792 = vpop.f32.mrb[0].mxu0
      %v793 = vadd.f32 0.0, %v792
      %v794 = vpop.f32.mrb[0].mxu0
      %v795 = vpop.f32.mrb[0].mxu0
      %v796 = vadd.f32 0.0, %v795
      %v797 = vpop.f32.mrb[0].mxu0
      %798 = vmatprep.mubr.bf16.mxu0 0
      %799 = vmatmul.mubr.bf16.gmra.mrb[0].mxu0 %v705
      %v800 = vpop.f32.mrb[0].mxu0
      %v801 = vadd.f32 0.0, %v800
      %v802 = vpop.f32.mrb[0].mxu0
      %v803 = vpop.f32.mrb[0].mxu0
      %v804 = vadd.f32 0.0, %v803
      %v805 = vpop.f32.mrb[0].mxu0
      %806 = vmatprep.mubr.bf16.mxu0 0
      %807 = vmatmul.mubr.bf16.gmra.mrb[0].mxu0 %v708
      %v808 = vpop.f32.mrb[0].mxu0
      %v809 = vadd.f32 0.0, %v808
      %v810 = vpop.f32.mrb[0].mxu0
      %v811 = vpop.f32.mrb[0].mxu0
      %v812 = vadd.f32 0.0, %v811
      %v813 = vpop.f32.mrb[0].mxu0
      %814 = vmatprep.mubr.bf16.mxu0 0
      %815 = vmatmul.mubr.bf16.gmra.mrb[0].mxu0 %v711
      %v816 = vpop.f32.mrb[0].mxu0
      %v817 = vadd.f32 0.0, %v816
      %v818 = vpop.f32.mrb[0].mxu0
      %v819 = vpop.f32.mrb[0].mxu0
      %v820 = vadd.f32 0.0, %v819
      %v821 = vpop.f32.mrb[0].mxu0
      %822 = vmatprep.mubr.bf16.mxu0 0
      %823 = vmatmul.mubr.bf16.gmra.mrb[0].mxu0 %v714
      %v824 = vpop.f32.mrb[0].mxu0
      %v825 = vadd.f32 0.0, %v824
      %v826 = vpop.f32.mrb[0].mxu0
      %v827 = vpop.f32.mrb[0].mxu0
      %v828 = vadd.f32 0.0, %v827
      %v829 = vpop.f32.mrb[0].mxu0
      %830 = vmatprep.mubr.bf16.mxu0 0
      %831 = vmatmul.mubr.bf16.gmra.mrb[0].mxu0 %v717
      %v832 = vpop.f32.mrb[0].mxu0
      %v833 = vadd.f32 0.0, %v832
      %v834 = vpop.f32.mrb[0].mxu0
      %v835 = vpop.f32.mrb[0].mxu0
      %v836 = vadd.f32 0.0, %v835
      %v837 = vpop.f32.mrb[0].mxu0
      %838 = vmatprep.mubr.bf16.mxu0 0
      %839 = vmatmul.mubr.bf16.gmra.mrb[0].mxu0 %v720
      %v840 = vpop.f32.mrb[0].mxu0
      %v841 = vadd.f32 0.0, %v840
      %v842 = vpop.f32.mrb[0].mxu0
      %v843 = vpop.f32.mrb[0].mxu0
      %v844 = vadd.f32 0.0, %v843
      %v845 = vpop.f32.mrb[0].mxu0
      %846 = vmatprep.mubr.bf16.mxu0 0
      %847 = vmatmul.mubr.bf16.gmra.mrb[0].mxu0 %v723
      %v848 = vpop.f32.mrb[0].mxu0
      %v849 = vadd.f32 0.0, %v848
      %v850 = vpop.f32.mrb[0].mxu0
      %v851 = vpop.f32.mrb[0].mxu0
      %v852 = vadd.f32 0.0, %v851
      %v853 = vpop.f32.mrb[0].mxu0
      %854 = vmatprep.mubr.bf16.mxu0 0
      %855 = vmatmul.mubr.bf16.gmra.mrb[0].mxu0 %v726
      %v856 = vpop.f32.mrb[0].mxu0
      %v857 = vadd.f32 0.0, %v856
      %v858 = vpop.f32.mrb[0].mxu0
      %v859 = vpop.f32.mrb[0].mxu0
      %v860 = vadd.f32 0.0, %v859
      %v861 = vpop.f32.mrb[0].mxu0
      %862 = vmatprep.mubr.bf16.mxu0 0
      %863 = vmatmul.mubr.bf16.gmra.mrb[0].mxu0 %v729
      %v864 = vpop.f32.mrb[0].mxu0
      %v865 = vadd.f32 0.0, %v864
      %v866 = vpop.f32.mrb[0].mxu0
      %v867 = vpop.f32.mrb[0].mxu0
      %v868 = vadd.f32 0.0, %v867
      %v869 = vpop.f32.mrb[0].mxu0
      %870 = vmatprep.mubr.bf16.mxu0 0
      %871 = vmatmul.mubr.bf16.gmra.mrb[0].mxu0 %v732
      %v872 = vpop.f32.mrb[0].mxu0
      %v873 = vadd.f32 0.0, %v872
      %v874 = vpop.f32.mrb[0].mxu0
      %v875 = vpop.f32.mrb[0].mxu0
      %v876 = vadd.f32 0.0, %v875
      %v877 = vpop.f32.mrb[0].mxu0
      %878 = vmatprep.mubr.bf16.mxu0 0
      %879 = vmatmul.mubr.bf16.gmra.mrb[0].mxu0 %v735
      %v880 = vpop.f32.mrb[0].mxu0
      %v881 = vadd.f32 0.0, %v880
      %v882 = vpop.f32.mrb[0].mxu0
      %v883 = vpop.f32.mrb[0].mxu0
      %v884 = vadd.f32 0.0, %v883
      %v885 = vpop.f32.mrb[0].mxu0
      %886 = vmatprep.mubr.bf16.mxu0 0
      %887 = vmatmul.mubr.bf16.gmra.mrb[0].mxu0 %v738
      %v888 = vpop.f32.mrb[0].mxu0
      %v889 = vadd.f32 0.0, %v888
      %v890 = vpop.f32.mrb[0].mxu0
      %v891 = vpop.f32.mrb[0].mxu0
      %v892 = vadd.f32 0.0, %v891
      %v893 = vpop.f32.mrb[0].mxu0
      %894 = vmatprep.mubr.bf16.mxu0 0
      %895 = vmatmul.mubr.bf16.gmra.mrb[0].mxu0 %v741
      %v896 = vpop.f32.mrb[0].mxu0
      %v897 = vadd.f32 0.0, %v896
      %v898 = vpop.f32.mrb[0].mxu0
      %v899 = vpop.f32.mrb[0].mxu0
      %v900 = vadd.f32 0.0, %v899
      %v901 = vpop.f32.mrb[0].mxu0
      %902 = vmatprep.mubr.bf16.mxu0 0
      %903 = vmatmul.mubr.bf16.gmra.mrb[0].mxu0 %v744
      %v904 = vpop.f32.mrb[0].mxu0
      %v905 = vadd.f32 0.0, %v904
      %v906 = vpop.f32.mrb[0].mxu0
      %v907 = vpop.f32.mrb[0].mxu0
      %v908 = vadd.f32 0.0, %v907
      %v909 = vpop.f32.mrb[0].mxu0
      %910 = vdwg.mxu0
      %v943 = vunpack.c.l.b16 %v199
      %v944 = vunpack.c.l.b16 %v200
      %v945 = vunpack.c.l.b16 %v202
      %v946 = vunpack.c.l.b16 %v203
      %v947 = vunpack.c.l.b16 %v205
      %v948 = vunpack.c.l.b16 %v206
      %v949 = vunpack.c.l.b16 %v208
      %v950 = vunpack.c.l.b16 %v209
      %v951 = vunpack.c.l.b16 %v211
      %v952 = vunpack.c.l.b16 %v212
      %v953 = vunpack.c.l.b16 %v214
      %v954 = vunpack.c.l.b16 %v215
      %v955 = vunpack.c.l.b16 %v217
      %v956 = vunpack.c.l.b16 %v218
      %v957 = vunpack.c.l.b16 %v220
      %v958 = vunpack.c.l.b16 %v221
      %v959 = vunpack.c.l.b16 %v223
      %v960 = vunpack.c.l.b16 %v224
      %v961 = vunpack.c.l.b16 %v226
      %v962 = vunpack.c.l.b16 %v227
      %v963 = vunpack.c.l.b16 %v229
      %v964 = vunpack.c.l.b16 %v230
      %v965 = vunpack.c.l.b16 %v232
      %v966 = vunpack.c.l.b16 %v233
      %v967 = vunpack.c.l.b16 %v235
      %v968 = vunpack.c.l.b16 %v236
      %v969 = vunpack.c.l.b16 %v238
      %v970 = vunpack.c.l.b16 %v239
      %v971 = vunpack.c.l.b16 %v241
      %v972 = vunpack.c.l.b16 %v242
      %v973 = vunpack.c.l.b16 %v244
      %v974 = vunpack.c.l.b16 %v245
      %v975 = vpack.c.b16 %v944, %v943
      %v976 = vpack.c.b16 %v946, %v945
      %v977 = vpack.c.b16 %v948, %v947
      %v978 = vpack.c.b16 %v950, %v949
      %v979 = vpack.c.b16 %v952, %v951
      %v980 = vpack.c.b16 %v954, %v953
      %v981 = vpack.c.b16 %v956, %v955
      %v982 = vpack.c.b16 %v958, %v957
      %v983 = vpack.c.b16 %v960, %v959
      %v984 = vpack.c.b16 %v962, %v961
      %v985 = vpack.c.b16 %v964, %v963
      %v986 = vpack.c.b16 %v966, %v965
      %v987 = vpack.c.b16 %v968, %v967
      %v988 = vpack.c.b16 %v970, %v969
      %v989 = vpack.c.b16 %v972, %v971
      %v990 = vpack.c.b16 %v974, %v973
      %v992 = vsel %vm697, %v975, 0
      %v995 = vsel %vm697, %v976, 0
      %v998 = vsel %vm697, %v977, 0
      %v1001 = vsel %vm697, %v978, 0
      %v1004 = vsel %vm697, %v979, 0
      %v1007 = vsel %vm697, %v980, 0
      %v1010 = vsel %vm697, %v981, 0
      %v1013 = vsel %vm697, %v982, 0
      %v1016 = vsel %vm697, %v983, 0
      %v1019 = vsel %vm697, %v984, 0
      %v1022 = vsel %vm697, %v985, 0
      %v1025 = vsel %vm697, %v986, 0
      %v1028 = vsel %vm697, %v987, 0
      %v1031 = vsel %vm697, %v988, 0
      %v1034 = vsel %vm697, %v989, 0
      %v1037 = vsel %vm697, %v990, 0
      %v1040 = vsel %vm746, %v253, 0
      %1042 = vmatprep.subr.bf16.mxu0 0
      %1043 = vmatpush1.bf16.msra.mxu0 %v1040
      %1044 = vmatprep.subr.bf16.mxu0 0
      %1045 = vmatpush1.bf16.msra.mxu0 0
      %1046 = vmatprep.subr.bf16.mxu0 0
      %1047 = vmatpush1.bf16.msra.mxu0 0
      %1048 = vmatprep.subr.bf16.mxu0 0
      %1049 = vmatpush1.bf16.msra.mxu0 0
      %1050 = vmatprep.subr.bf16.mxu0 0
      %1051 = vmatpush1.bf16.msra.mxu0 0
      %1052 = vmatprep.subr.bf16.mxu0 0
      %1053 = vmatpush1.bf16.msra.mxu0 0
      %1054 = vmatprep.subr.bf16.mxu0 0
      %1055 = vmatpush1.bf16.msra.mxu0 0
      %1056 = vmatprep.subr.bf16.mxu0 0
      %1057 = vmatpush1.bf16.msra.mxu0 0
      %1058 = vmatprep.subr.bf16.mxu0 0
      %1059 = vmatpush1.bf16.msra.mxu0 0
      %1060 = vmatprep.subr.bf16.mxu0 0
      %1061 = vmatpush1.bf16.msra.mxu0 0
      %1062 = vmatprep.subr.bf16.mxu0 0
      %1063 = vmatpush1.bf16.msra.mxu0 0
      %1064 = vmatprep.subr.bf16.mxu0 0
      %1065 = vmatpush1.bf16.msra.mxu0 0
      %1066 = vmatprep.subr.bf16.mxu0 0
      %1067 = vmatpush1.bf16.msra.mxu0 0
      %1068 = vmatprep.subr.bf16.mxu0 0
      %1069 = vmatpush1.bf16.msra.mxu0 0
      %1070 = vmatprep.subr.bf16.mxu0 0
      %1071 = vmatpush1.bf16.msra.mxu0 0
      %1072 = vmatprep.subr.bf16.mxu0 0
      %1073 = vmatpush1.bf16.msra.mxu0 0
      %1074 = vmatprep.mubr.bf16.mxu0 0
      %1075 = vmatmul.mubr.bf16.gmra.mrb[0].mxu0 %v992
      %v1076 = vpop.f32.mrb[0].mxu0
      %v1077 = vadd.f32 %v785, %v1076
      %v1078 = vpop.f32.mrb[0].mxu0
      %v1079 = vpop.f32.mrb[0].mxu0
      %v1080 = vadd.f32 %v788, %v1079
      %v1081 = vpop.f32.mrb[0].mxu0
      %1082 = vmatprep.mubr.bf16.mxu0 0
      %1083 = vmatmul.mubr.bf16.gmra.mrb[0].mxu0 %v995
      %v1084 = vpop.f32.mrb[0].mxu0
      %v1085 = vadd.f32 %v793, %v1084
      %v1086 = vpop.f32.mrb[0].mxu0
      %v1087 = vpop.f32.mrb[0].mxu0
      %v1088 = vadd.f32 %v796, %v1087
      %v1089 = vpop.f32.mrb[0].mxu0
      %1090 = vmatprep.mubr.bf16.mxu0 0
      %1091 = vmatmul.mubr.bf16.gmra.mrb[0].mxu0 %v998
      %v1092 = vpop.f32.mrb[0].mxu0
      %v1093 = vadd.f32 %v801, %v1092
      %v1094 = vpop.f32.mrb[0].mxu0
      %v1095 = vpop.f32.mrb[0].mxu0
      %v1096 = vadd.f32 %v804, %v1095
      %v1097 = vpop.f32.mrb[0].mxu0
      %1098 = vmatprep.mubr.bf16.mxu0 0
      %1099 = vmatmul.mubr.bf16.gmra.mrb[0].mxu0 %v1001
      %v1100 = vpop.f32.mrb[0].mxu0
      %v1101 = vadd.f32 %v809, %v1100
      %v1102 = vpop.f32.mrb[0].mxu0
      %v1103 = vpop.f32.mrb[0].mxu0
      %v1104 = vadd.f32 %v812, %v1103
      %v1105 = vpop.f32.mrb[0].mxu0
      %1106 = vmatprep.mubr.bf16.mxu0 0
      %1107 = vmatmul.mubr.bf16.gmra.mrb[0].mxu0 %v1004
      %v1108 = vpop.f32.mrb[0].mxu0
      %v1109 = vadd.f32 %v817, %v1108
      %v1110 = vpop.f32.mrb[0].mxu0
      %v1111 = vpop.f32.mrb[0].mxu0
      %v1112 = vadd.f32 %v820, %v1111
      %v1113 = vpop.f32.mrb[0].mxu0
      %1114 = vmatprep.mubr.bf16.mxu0 0
      %1115 = vmatmul.mubr.bf16.gmra.mrb[0].mxu0 %v1007
      %v1116 = vpop.f32.mrb[0].mxu0
      %v1117 = vadd.f32 %v825, %v1116
      %v1118 = vpop.f32.mrb[0].mxu0
      %v1119 = vpop.f32.mrb[0].mxu0
      %v1120 = vadd.f32 %v828, %v1119
      %v1121 = vpop.f32.mrb[0].mxu0
      %1122 = vmatprep.mubr.bf16.mxu0 0
      %1123 = vmatmul.mubr.bf16.gmra.mrb[0].mxu0 %v1010
      %v1124 = vpop.f32.mrb[0].mxu0
      %v1125 = vadd.f32 %v833, %v1124
      %v1126 = vpop.f32.mrb[0].mxu0
      %v1127 = vpop.f32.mrb[0].mxu0
      %v1128 = vadd.f32 %v836, %v1127
      %v1129 = vpop.f32.mrb[0].mxu0
      %1130 = vmatprep.mubr.bf16.mxu0 0
      %1131 = vmatmul.mubr.bf16.gmra.mrb[0].mxu0 %v1013
      %v1132 = vpop.f32.mrb[0].mxu0
      %v1133 = vadd.f32 %v841, %v1132
      %v1134 = vpop.f32.mrb[0].mxu0
      %v1135 = vpop.f32.mrb[0].mxu0
      %v1136 = vadd.f32 %v844, %v1135
      %v1137 = vpop.f32.mrb[0].mxu0
      %1138 = vmatprep.mubr.bf16.mxu0 0
      %1139 = vmatmul.mubr.bf16.gmra.mrb[0].mxu0 %v1016
      %v1140 = vpop.f32.mrb[0].mxu0
      %v1141 = vadd.f32 %v849, %v1140
      %v1142 = vpop.f32.mrb[0].mxu0
      %v1143 = vpop.f32.mrb[0].mxu0
      %v1144 = vadd.f32 %v852, %v1143
      %v1145 = vpop.f32.mrb[0].mxu0
      %1146 = vmatprep.mubr.bf16.mxu0 0
      %1147 = vmatmul.mubr.bf16.gmra.mrb[0].mxu0 %v1019
      %v1148 = vpop.f32.mrb[0].mxu0
      %v1149 = vadd.f32 %v857, %v1148
      %v1150 = vpop.f32.mrb[0].mxu0
      %v1151 = vpop.f32.mrb[0].mxu0
      %v1152 = vadd.f32 %v860, %v1151
      %v1153 = vpop.f32.mrb[0].mxu0
      %1154 = vmatprep.mubr.bf16.mxu0 0
      %1155 = vmatmul.mubr.bf16.gmra.mrb[0].mxu0 %v1022
      %v1156 = vpop.f32.mrb[0].mxu0
      %v1157 = vadd.f32 %v865, %v1156
      %v1158 = vpop.f32.mrb[0].mxu0
      %v1159 = vpop.f32.mrb[0].mxu0
      %v1160 = vadd.f32 %v868, %v1159
      %v1161 = vpop.f32.mrb[0].mxu0
      %1162 = vmatprep.mubr.bf16.mxu0 0
      %1163 = vmatmul.mubr.bf16.gmra.mrb[0].mxu0 %v1025
      %v1164 = vpop.f32.mrb[0].mxu0
      %v1165 = vadd.f32 %v873, %v1164
      %v1166 = vpop.f32.mrb[0].mxu0
      %v1167 = vpop.f32.mrb[0].mxu0
      %v1168 = vadd.f32 %v876, %v1167
      %v1169 = vpop.f32.mrb[0].mxu0
      %1170 = vmatprep.mubr.bf16.mxu0 0
      %1171 = vmatmul.mubr.bf16.gmra.mrb[0].mxu0 %v1028
      %v1172 = vpop.f32.mrb[0].mxu0
      %v1173 = vadd.f32 %v881, %v1172
      %v1174 = vpop.f32.mrb[0].mxu0
      %v1175 = vpop.f32.mrb[0].mxu0
      %v1176 = vadd.f32 %v884, %v1175
      %v1177 = vpop.f32.mrb[0].mxu0
      %1178 = vmatprep.mubr.bf16.mxu0 0
      %1179 = vmatmul.mubr.bf16.gmra.mrb[0].mxu0 %v1031
      %v1180 = vpop.f32.mrb[0].mxu0
      %v1181 = vadd.f32 %v889, %v1180
      %v1182 = vpop.f32.mrb[0].mxu0
      %v1183 = vpop.f32.mrb[0].mxu0
      %v1184 = vadd.f32 %v892, %v1183
      %v1185 = vpop.f32.mrb[0].mxu0
      %1186 = vmatprep.mubr.bf16.mxu0 0
      %1187 = vmatmul.mubr.bf16.gmra.mrb[0].mxu0 %v1034
      %v1188 = vpop.f32.mrb[0].mxu0
      %v1189 = vadd.f32 %v897, %v1188
      %v1190 = vpop.f32.mrb[0].mxu0
      %v1191 = vpop.f32.mrb[0].mxu0
      %v1192 = vadd.f32 %v900, %v1191
      %v1193 = vpop.f32.mrb[0].mxu0
      %1194 = vmatprep.mubr.bf16.mxu0 0
      %1195 = vmatmul.mubr.bf16.gmra.mrb[0].mxu0 %v1037
      %v1196 = vpop.f32.mrb[0].mxu0
      %v1197 = vadd.f32 %v905, %v1196
      %v1198 = vpop.f32.mrb[0].mxu0
      %v1199 = vpop.f32.mrb[0].mxu0
      %v1200 = vadd.f32 %v908, %v1199
      %v1201 = vpop.f32.mrb[0].mxu0
      %1202 = vdwg.mxu0
      %vm1219 = vcmask 1042432
      %vm1220 = vcmask 1046532
      %vm1221 = vmor %vm1219, %vm1220
      %v1222 = vrot.slane %v199, 5
      %v1223 = vrot.slane %v1222, 4
      %v1224 = vrot.slane %v200, 5
      %v1225 = vsel %vm1221, %v1223, %v1224
      %v1226 = vrot.slane %v1224, 4
      %v1227 = vrot.slane %v201, 5
      %v1228 = vsel %vm1221, %v1226, %v1227
      %v1229 = vrot.slane %v202, 5
      %v1230 = vrot.slane %v1229, 4
      %v1231 = vrot.slane %v203, 5
      %v1232 = vsel %vm1221, %v1230, %v1231
      %v1233 = vrot.slane %v1231, 4
      %v1234 = vrot.slane %v204, 5
      %v1235 = vsel %vm1221, %v1233, %v1234
      %v1236 = vrot.slane %v205, 5
      %v1237 = vrot.slane %v1236, 4
      %v1238 = vrot.slane %v206, 5
      %v1239 = vsel %vm1221, %v1237, %v1238
      %v1240 = vrot.slane %v1238, 4
      %v1241 = vrot.slane %v207, 5
      %v1242 = vsel %vm1221, %v1240, %v1241
      %v1243 = vrot.slane %v208, 5
      %v1244 = vrot.slane %v1243, 4
      %v1245 = vrot.slane %v209, 5
      %v1246 = vsel %vm1221, %v1244, %v1245
      %v1247 = vrot.slane %v1245, 4
      %v1248 = vrot.slane %v210, 5
      %v1249 = vsel %vm1221, %v1247, %v1248
      %v1250 = vrot.slane %v211, 5
      %v1251 = vrot.slane %v1250, 4
      %v1252 = vrot.slane %v212, 5
      %v1253 = vsel %vm1221, %v1251, %v1252
      %v1254 = vrot.slane %v1252, 4
      %v1255 = vrot.slane %v213, 5
      %v1256 = vsel %vm1221, %v1254, %v1255
      %v1257 = vrot.slane %v214, 5
      %v1258 = vrot.slane %v1257, 4
      %v1259 = vrot.slane %v215, 5
      %v1260 = vsel %vm1221, %v1258, %v1259
      %v1261 = vrot.slane %v1259, 4
      %v1262 = vrot.slane %v216, 5
      %v1263 = vsel %vm1221, %v1261, %v1262
      %v1264 = vrot.slane %v217, 5
      %v1265 = vrot.slane %v1264, 4
      %v1266 = vrot.slane %v218, 5
      %v1267 = vsel %vm1221, %v1265, %v1266
      %v1268 = vrot.slane %v1266, 4
      %v1269 = vrot.slane %v219, 5
      %v1270 = vsel %vm1221, %v1268, %v1269
      %v1271 = vrot.slane %v220, 5
      %v1272 = vrot.slane %v1271, 4
      %v1273 = vrot.slane %v221, 5
      %v1274 = vsel %vm1221, %v1272, %v1273
      %v1275 = vrot.slane %v1273, 4
      %v1276 = vrot.slane %v222, 5
      %v1277 = vsel %vm1221, %v1275, %v1276
      %v1278 = vrot.slane %v223, 5
      %v1279 = vrot.slane %v1278, 4
      %v1280 = vrot.slane %v224, 5
      %v1281 = vsel %vm1221, %v1279, %v1280
      %v1282 = vrot.slane %v1280, 4
      %v1283 = vrot.slane %v225, 5
      %v1284 = vsel %vm1221, %v1282, %v1283
      %v1285 = vrot.slane %v226, 5
      %v1286 = vrot.slane %v1285, 4
      %v1287 = vrot.slane %v227, 5
      %v1288 = vsel %vm1221, %v1286, %v1287
      %v1289 = vrot.slane %v1287, 4
      %v1290 = vrot.slane %v228, 5
      %v1291 = vsel %vm1221, %v1289, %v1290
      %v1292 = vrot.slane %v229, 5
      %v1293 = vrot.slane %v1292, 4
      %v1294 = vrot.slane %v230, 5
      %v1295 = vsel %vm1221, %v1293, %v1294
      %v1296 = vrot.slane %v1294, 4
      %v1297 = vrot.slane %v231, 5
      %v1298 = vsel %vm1221, %v1296, %v1297
      %v1299 = vrot.slane %v232, 5
      %v1300 = vrot.slane %v1299, 4
      %v1301 = vrot.slane %v233, 5
      %v1302 = vsel %vm1221, %v1300, %v1301
      %v1303 = vrot.slane %v1301, 4
      %v1304 = vrot.slane %v234, 5
      %v1305 = vsel %vm1221, %v1303, %v1304
      %v1306 = vrot.slane %v235, 5
      %v1307 = vrot.slane %v1306, 4
      %v1308 = vrot.slane %v236, 5
      %v1309 = vsel %vm1221, %v1307, %v1308
      %v1310 = vrot.slane %v1308, 4
      %v1311 = vrot.slane %v237, 5
      %v1312 = vsel %vm1221, %v1310, %v1311
      %v1313 = vrot.slane %v238, 5
      %v1314 = vrot.slane %v1313, 4
      %v1315 = vrot.slane %v239, 5
      %v1316 = vsel %vm1221, %v1314, %v1315
      %v1317 = vrot.slane %v1315, 4
      %v1318 = vrot.slane %v240, 5
      %v1319 = vsel %vm1221, %v1317, %v1318
      %v1320 = vrot.slane %v241, 5
      %v1321 = vrot.slane %v1320, 4
      %v1322 = vrot.slane %v242, 5
      %v1323 = vsel %vm1221, %v1321, %v1322
      %v1324 = vrot.slane %v1322, 4
      %v1325 = vrot.slane %v243, 5
      %v1326 = vsel %vm1221, %v1324, %v1325
      %v1327 = vrot.slane %v244, 5
      %v1328 = vrot.slane %v1327, 4
      %v1329 = vrot.slane %v245, 5
      %v1330 = vsel %vm1221, %v1328, %v1329
      %v1331 = vrot.slane %v1329, 4
      %v1332 = vrot.slane %v246, 5
      %v1333 = vsel %vm1221, %v1331, %v1332
      %v1334 = vunpack.c.l.b16 %v1225
      %v1335 = vunpack.c.l.b16 %v1228
      %v1336 = vunpack.c.l.b16 %v1232
      %v1337 = vunpack.c.l.b16 %v1235
      %v1338 = vunpack.c.l.b16 %v1239
      %v1339 = vunpack.c.l.b16 %v1242
      %v1340 = vunpack.c.l.b16 %v1246
      %v1341 = vunpack.c.l.b16 %v1249
      %v1342 = vunpack.c.l.b16 %v1253
      %v1343 = vunpack.c.l.b16 %v1256
      %v1344 = vunpack.c.l.b16 %v1260
      %v1345 = vunpack.c.l.b16 %v1263
      %v1346 = vunpack.c.l.b16 %v1267
      %v1347 = vunpack.c.l.b16 %v1270
      %v1348 = vunpack.c.l.b16 %v1274
      %v1349 = vunpack.c.l.b16 %v1277
      %v1350 = vunpack.c.l.b16 %v1281
      %v1351 = vunpack.c.l.b16 %v1284
      %v1352 = vunpack.c.l.b16 %v1288
      %v1353 = vunpack.c.l.b16 %v1291
      %v1354 = vunpack.c.l.b16 %v1295
      %v1355 = vunpack.c.l.b16 %v1298
      %v1356 = vunpack.c.l.b16 %v1302
      %v1357 = vunpack.c.l.b16 %v1305
      %v1358 = vunpack.c.l.b16 %v1309
      %v1359 = vunpack.c.l.b16 %v1312
      %v1360 = vunpack.c.l.b16 %v1316
      %v1361 = vunpack.c.l.b16 %v1319
      %v1362 = vunpack.c.l.b16 %v1323
      %v1363 = vunpack.c.l.b16 %v1326
      %v1364 = vunpack.c.l.b16 %v1330
      %v1365 = vunpack.c.l.b16 %v1333
      %v1366 = vpack.c.b16 %v1335, %v1334
      %v1367 = vpack.c.b16 %v1337, %v1336
      %v1368 = vpack.c.b16 %v1339, %v1338
      %v1369 = vpack.c.b16 %v1341, %v1340
      %v1370 = vpack.c.b16 %v1343, %v1342
      %v1371 = vpack.c.b16 %v1345, %v1344
      %v1372 = vpack.c.b16 %v1347, %v1346
      %v1373 = vpack.c.b16 %v1349, %v1348
      %v1374 = vpack.c.b16 %v1351, %v1350
      %v1375 = vpack.c.b16 %v1353, %v1352
      %v1376 = vpack.c.b16 %v1355, %v1354
      %v1377 = vpack.c.b16 %v1357, %v1356
      %v1378 = vpack.c.b16 %v1359, %v1358
      %v1379 = vpack.c.b16 %v1361, %v1360
      %v1380 = vpack.c.b16 %v1363, %v1362
      %v1381 = vpack.c.b16 %v1365, %v1364
      %v1383 = vsel %vm697, %v1366, 0
      %v1386 = vsel %vm697, %v1367, 0
      %v1389 = vsel %vm697, %v1368, 0
      %v1392 = vsel %vm697, %v1369, 0
      %v1395 = vsel %vm697, %v1370, 0
      %v1398 = vsel %vm697, %v1371, 0
      %v1401 = vsel %vm697, %v1372, 0
      %v1404 = vsel %vm697, %v1373, 0
      %v1407 = vsel %vm697, %v1374, 0
      %v1410 = vsel %vm697, %v1375, 0
      %v1413 = vsel %vm697, %v1376, 0
      %v1416 = vsel %vm697, %v1377, 0
      %v1419 = vsel %vm697, %v1378, 0
      %v1422 = vsel %vm697, %v1379, 0
      %v1425 = vsel %vm697, %v1380, 0
      %v1428 = vsel %vm697, %v1381, 0
      %v1431 = vsel %vm746, %v255, 0
      %1433 = vmatprep.subr.bf16.mxu0 0
      %1434 = vmatpush1.bf16.msra.mxu0 %v1431
      %1435 = vmatprep.subr.bf16.mxu0 0
      %1436 = vmatpush1.bf16.msra.mxu0 0
      %1437 = vmatprep.subr.bf16.mxu0 0
      %1438 = vmatpush1.bf16.msra.mxu0 0
      %1439 = vmatprep.subr.bf16.mxu0 0
      %1440 = vmatpush1.bf16.msra.mxu0 0
      %1441 = vmatprep.subr.bf16.mxu0 0
      %1442 = vmatpush1.bf16.msra.mxu0 0
      %1443 = vmatprep.subr.bf16.mxu0 0
      %1444 = vmatpush1.bf16.msra.mxu0 0
      %1445 = vmatprep.subr.bf16.mxu0 0
      %1446 = vmatpush1.bf16.msra.mxu0 0
      %1447 = vmatprep.subr.bf16.mxu0 0
      %1448 = vmatpush1.bf16.msra.mxu0 0
      %1449 = vmatprep.subr.bf16.mxu0 0
      %1450 = vmatpush1.bf16.msra.mxu0 0
      %1451 = vmatprep.subr.bf16.mxu0 0
      %1452 = vmatpush1.bf16.msra.mxu0 0
      %1453 = vmatprep.subr.bf16.mxu0 0
      %1454 = vmatpush1.bf16.msra.mxu0 0
      %1455 = vmatprep.subr.bf16.mxu0 0
      %1456 = vmatpush1.bf16.msra.mxu0 0
      %1457 = vmatprep.subr.bf16.mxu0 0
      %1458 = vmatpush1.bf16.msra.mxu0 0
      %1459 = vmatprep.subr.bf16.mxu0 0
      %1460 = vmatpush1.bf16.msra.mxu0 0
      %1461 = vmatprep.subr.bf16.mxu0 0
      %1462 = vmatpush1.bf16.msra.mxu0 0
      %1463 = vmatprep.subr.bf16.mxu0 0
      %1464 = vmatpush1.bf16.msra.mxu0 0
      %1465 = vmatprep.mubr.bf16.mxu0 0
      %1466 = vmatmul.mubr.bf16.gmra.mrb[0].mxu0 %v1383
      %v1467 = vpop.f32.mrb[0].mxu0
      %v1468 = vadd.f32 0.0, %v1467
      %v1469 = vpop.f32.mrb[0].mxu0
      %v1470 = vpop.f32.mrb[0].mxu0
      %v1471 = vadd.f32 0.0, %v1470
      %v1472 = vpop.f32.mrb[0].mxu0
      %1473 = vmatprep.mubr.bf16.mxu0 0
      %1474 = vmatmul.mubr.bf16.gmra.mrb[0].mxu0 %v1386
      %v1475 = vpop.f32.mrb[0].mxu0
      %v1476 = vadd.f32 0.0, %v1475
      %v1477 = vpop.f32.mrb[0].mxu0
      %v1478 = vpop.f32.mrb[0].mxu0
      %v1479 = vadd.f32 0.0, %v1478
      %v1480 = vpop.f32.mrb[0].mxu0
      %1481 = vmatprep.mubr.bf16.mxu0 0
      %1482 = vmatmul.mubr.bf16.gmra.mrb[0].mxu0 %v1389
      %v1483 = vpop.f32.mrb[0].mxu0
      %v1484 = vadd.f32 0.0, %v1483
      %v1485 = vpop.f32.mrb[0].mxu0
      %v1486 = vpop.f32.mrb[0].mxu0
      %v1487 = vadd.f32 0.0, %v1486
      %v1488 = vpop.f32.mrb[0].mxu0
      %1489 = vmatprep.mubr.bf16.mxu0 0
      %1490 = vmatmul.mubr.bf16.gmra.mrb[0].mxu0 %v1392
      %v1491 = vpop.f32.mrb[0].mxu0
      %v1492 = vadd.f32 0.0, %v1491
      %v1493 = vpop.f32.mrb[0].mxu0
      %v1494 = vpop.f32.mrb[0].mxu0
      %v1495 = vadd.f32 0.0, %v1494
      %v1496 = vpop.f32.mrb[0].mxu0
      %1497 = vmatprep.mubr.bf16.mxu0 0
      %1498 = vmatmul.mubr.bf16.gmra.mrb[0].mxu0 %v1395
      %v1499 = vpop.f32.mrb[0].mxu0
      %v1500 = vadd.f32 0.0, %v1499
      %v1501 = vpop.f32.mrb[0].mxu0
      %v1502 = vpop.f32.mrb[0].mxu0
      %v1503 = vadd.f32 0.0, %v1502
      %v1504 = vpop.f32.mrb[0].mxu0
      %1505 = vmatprep.mubr.bf16.mxu0 0
      %1506 = vmatmul.mubr.bf16.gmra.mrb[0].mxu0 %v1398
      %v1507 = vpop.f32.mrb[0].mxu0
      %v1508 = vadd.f32 0.0, %v1507
      %v1509 = vpop.f32.mrb[0].mxu0
      %v1510 = vpop.f32.mrb[0].mxu0
      %v1511 = vadd.f32 0.0, %v1510
      %v1512 = vpop.f32.mrb[0].mxu0
      %1513 = vmatprep.mubr.bf16.mxu0 0
      %1514 = vmatmul.mubr.bf16.gmra.mrb[0].mxu0 %v1401
      %v1515 = vpop.f32.mrb[0].mxu0
      %v1516 = vadd.f32 0.0, %v1515
      %v1517 = vpop.f32.mrb[0].mxu0
      %v1518 = vpop.f32.mrb[0].mxu0
      %v1519 = vadd.f32 0.0, %v1518
      %v1520 = vpop.f32.mrb[0].mxu0
      %1521 = vmatprep.mubr.bf16.mxu0 0
      %1522 = vmatmul.mubr.bf16.gmra.mrb[0].mxu0 %v1404
      %v1523 = vpop.f32.mrb[0].mxu0
      %v1524 = vadd.f32 0.0, %v1523
      %v1525 = vpop.f32.mrb[0].mxu0
      %v1526 = vpop.f32.mrb[0].mxu0
      %v1527 = vadd.f32 0.0, %v1526
      %v1528 = vpop.f32.mrb[0].mxu0
      %1529 = vmatprep.mubr.bf16.mxu0 0
      %1530 = vmatmul.mubr.bf16.gmra.mrb[0].mxu0 %v1407
      %v1531 = vpop.f32.mrb[0].mxu0
      %v1532 = vadd.f32 0.0, %v1531
      %v1533 = vpop.f32.mrb[0].mxu0
      %v1534 = vpop.f32.mrb[0].mxu0
      %v1535 = vadd.f32 0.0, %v1534
      %v1536 = vpop.f32.mrb[0].mxu0
      %1537 = vmatprep.mubr.bf16.mxu0 0
      %1538 = vmatmul.mubr.bf16.gmra.mrb[0].mxu0 %v1410
      %v1539 = vpop.f32.mrb[0].mxu0
      %v1540 = vadd.f32 0.0, %v1539
      %v1541 = vpop.f32.mrb[0].mxu0
      %v1542 = vpop.f32.mrb[0].mxu0
      %v1543 = vadd.f32 0.0, %v1542
      %v1544 = vpop.f32.mrb[0].mxu0
      %1545 = vmatprep.mubr.bf16.mxu0 0
      %1546 = vmatmul.mubr.bf16.gmra.mrb[0].mxu0 %v1413
      %v1547 = vpop.f32.mrb[0].mxu0
      %v1548 = vadd.f32 0.0, %v1547
      %v1549 = vpop.f32.mrb[0].mxu0
      %v1550 = vpop.f32.mrb[0].mxu0
      %v1551 = vadd.f32 0.0, %v1550
      %v1552 = vpop.f32.mrb[0].mxu0
      %1553 = vmatprep.mubr.bf16.mxu0 0
      %1554 = vmatmul.mubr.bf16.gmra.mrb[0].mxu0 %v1416
      %v1555 = vpop.f32.mrb[0].mxu0
      %v1556 = vadd.f32 0.0, %v1555
      %v1557 = vpop.f32.mrb[0].mxu0
      %v1558 = vpop.f32.mrb[0].mxu0
      %v1559 = vadd.f32 0.0, %v1558
      %v1560 = vpop.f32.mrb[0].mxu0
      %1561 = vmatprep.mubr.bf16.mxu0 0
      %1562 = vmatmul.mubr.bf16.gmra.mrb[0].mxu0 %v1419
      %v1563 = vpop.f32.mrb[0].mxu0
      %v1564 = vadd.f32 0.0, %v1563
      %v1565 = vpop.f32.mrb[0].mxu0
      %v1566 = vpop.f32.mrb[0].mxu0
      %v1567 = vadd.f32 0.0, %v1566
      %v1568 = vpop.f32.mrb[0].mxu0
      %1569 = vmatprep.mubr.bf16.mxu0 0
      %1570 = vmatmul.mubr.bf16.gmra.mrb[0].mxu0 %v1422
      %v1571 = vpop.f32.mrb[0].mxu0
      %v1572 = vadd.f32 0.0, %v1571
      %v1573 = vpop.f32.mrb[0].mxu0
      %v1574 = vpop.f32.mrb[0].mxu0
      %v1575 = vadd.f32 0.0, %v1574
      %v1576 = vpop.f32.mrb[0].mxu0
      %1577 = vmatprep.mubr.bf16.mxu0 0
      %1578 = vmatmul.mubr.bf16.gmra.mrb[0].mxu0 %v1425
      %v1579 = vpop.f32.mrb[0].mxu0
      %v1580 = vadd.f32 0.0, %v1579
      %v1581 = vpop.f32.mrb[0].mxu0
      %v1582 = vpop.f32.mrb[0].mxu0
      %v1583 = vadd.f32 0.0, %v1582
      %v1584 = vpop.f32.mrb[0].mxu0
      %1585 = vmatprep.mubr.bf16.mxu0 0
      %1586 = vmatmul.mubr.bf16.gmra.mrb[0].mxu0 %v1428
      %v1587 = vpop.f32.mrb[0].mxu0
      %v1588 = vadd.f32 0.0, %v1587
      %v1589 = vpop.f32.mrb[0].mxu0
      %v1590 = vpop.f32.mrb[0].mxu0
      %v1591 = vadd.f32 0.0, %v1590
      %v1592 = vpop.f32.mrb[0].mxu0
      %1593 = vdwg.mxu0
      %v1594 = vadd.f32 %v1077, %v1468
      %v1595 = vadd.f32 %v1080, %v1471
      %v1596 = vadd.f32 %v1085, %v1476
      %v1597 = vadd.f32 %v1088, %v1479
      %v1598 = vadd.f32 %v1093, %v1484
      %v1599 = vadd.f32 %v1096, %v1487
      %v1600 = vadd.f32 %v1101, %v1492
      %v1601 = vadd.f32 %v1104, %v1495
      %v1602 = vadd.f32 %v1109, %v1500
      %v1603 = vadd.f32 %v1112, %v1503
      %v1604 = vadd.f32 %v1117, %v1508
      %v1605 = vadd.f32 %v1120, %v1511
      %v1606 = vadd.f32 %v1125, %v1516
      %v1607 = vadd.f32 %v1128, %v1519
      %v1608 = vadd.f32 %v1133, %v1524
      %v1609 = vadd.f32 %v1136, %v1527
      %v1610 = vadd.f32 %v1141, %v1532
      %v1611 = vadd.f32 %v1144, %v1535
      %v1612 = vadd.f32 %v1149, %v1540
      %v1613 = vadd.f32 %v1152, %v1543
      %v1614 = vadd.f32 %v1157, %v1548
      %v1615 = vadd.f32 %v1160, %v1551
      %v1616 = vadd.f32 %v1165, %v1556
      %v1617 = vadd.f32 %v1168, %v1559
      %v1618 = vadd.f32 %v1173, %v1564
      %v1619 = vadd.f32 %v1176, %v1567
      %v1620 = vadd.f32 %v1181, %v1572
      %v1621 = vadd.f32 %v1184, %v1575
      %v1622 = vadd.f32 %v1189, %v1580
      %v1623 = vadd.f32 %v1192, %v1583
      %v1624 = vadd.f32 %v1197, %v1588
      %v1625 = vadd.f32 %v1200, %v1591
      %v1628 = vunpack.c.l.b16 %v247
      %v1629 = vunpack.c.l.b16 %v248
      %v1630 = vpack.c.b16 %v1629, %v1628
      %v1632 = vsel %vm697, %v1630, 0
      %v1635 = vsel %vm746, %v256, 0
      %1637 = vmatprep.subr.bf16.mxu0 0
      %1638 = vmatpush1.bf16.msra.mxu0 %v1635
      %1639 = vmatprep.subr.bf16.mxu0 0
      %1640 = vmatpush1.bf16.msra.mxu0 0
      %1641 = vmatprep.subr.bf16.mxu0 0
      %1642 = vmatpush1.bf16.msra.mxu0 0
      %1643 = vmatprep.subr.bf16.mxu0 0
      %1644 = vmatpush1.bf16.msra.mxu0 0
      %1645 = vmatprep.subr.bf16.mxu0 0
      %1646 = vmatpush1.bf16.msra.mxu0 0
      %1647 = vmatprep.subr.bf16.mxu0 0
      %1648 = vmatpush1.bf16.msra.mxu0 0
      %1649 = vmatprep.subr.bf16.mxu0 0
      %1650 = vmatpush1.bf16.msra.mxu0 0
      %1651 = vmatprep.subr.bf16.mxu0 0
      %1652 = vmatpush1.bf16.msra.mxu0 0
      %1653 = vmatprep.subr.bf16.mxu0 0
      %1654 = vmatpush1.bf16.msra.mxu0 0
      %1655 = vmatprep.subr.bf16.mxu0 0
      %1656 = vmatpush1.bf16.msra.mxu0 0
      %1657 = vmatprep.subr.bf16.mxu0 0
      %1658 = vmatpush1.bf16.msra.mxu0 0
      %1659 = vmatprep.subr.bf16.mxu0 0
      %1660 = vmatpush1.bf16.msra.mxu0 0
      %1661 = vmatprep.subr.bf16.mxu0 0
      %1662 = vmatpush1.bf16.msra.mxu0 0
      %1663 = vmatprep.subr.bf16.mxu0 0
      %1664 = vmatpush1.bf16.msra.mxu0 0
      %1665 = vmatprep.subr.bf16.mxu0 0
      %1666 = vmatpush1.bf16.msra.mxu0 0
      %1667 = vmatprep.subr.bf16.mxu0 0
      %1668 = vmatpush1.bf16.msra.mxu0 0
      %1669 = vmatprep.mubr.bf16.mxu0 0
      %1670 = vmatmul.mubr.bf16.gmra.mrb[0].mxu0 %v995
      %v1671 = vpop.f32.mrb[0].mxu0
      %v1672 = vadd.f32 0.0, %v1671
      %v1673 = vpop.f32.mrb[0].mxu0
      %v1674 = vpop.f32.mrb[0].mxu0
      %v1675 = vadd.f32 0.0, %v1674
      %v1676 = vpop.f32.mrb[0].mxu0
      %1677 = vmatprep.mubr.bf16.mxu0 0
      %1678 = vmatmul.mubr.bf16.gmra.mrb[0].mxu0 %v998
      %v1679 = vpop.f32.mrb[0].mxu0
      %v1680 = vadd.f32 0.0, %v1679
      %v1681 = vpop.f32.mrb[0].mxu0
      %v1682 = vpop.f32.mrb[0].mxu0
      %v1683 = vadd.f32 0.0, %v1682
      %v1684 = vpop.f32.mrb[0].mxu0
      %1685 = vmatprep.mubr.bf16.mxu0 0
      %1686 = vmatmul.mubr.bf16.gmra.mrb[0].mxu0 %v1001
      %v1687 = vpop.f32.mrb[0].mxu0
      %v1688 = vadd.f32 0.0, %v1687
      %v1689 = vpop.f32.mrb[0].mxu0
      %v1690 = vpop.f32.mrb[0].mxu0
      %v1691 = vadd.f32 0.0, %v1690
      %v1692 = vpop.f32.mrb[0].mxu0
      %1693 = vmatprep.mubr.bf16.mxu0 0
      %1694 = vmatmul.mubr.bf16.gmra.mrb[0].mxu0 %v1004
      %v1695 = vpop.f32.mrb[0].mxu0
      %v1696 = vadd.f32 0.0, %v1695
      %v1697 = vpop.f32.mrb[0].mxu0
      %v1698 = vpop.f32.mrb[0].mxu0
      %v1699 = vadd.f32 0.0, %v1698
      %v1700 = vpop.f32.mrb[0].mxu0
      %1701 = vmatprep.mubr.bf16.mxu0 0
      %1702 = vmatmul.mubr.bf16.gmra.mrb[0].mxu0 %v1007
      %v1703 = vpop.f32.mrb[0].mxu0
      %v1704 = vadd.f32 0.0, %v1703
      %v1705 = vpop.f32.mrb[0].mxu0
      %v1706 = vpop.f32.mrb[0].mxu0
      %v1707 = vadd.f32 0.0, %v1706
      %v1708 = vpop.f32.mrb[0].mxu0
      %1709 = vmatprep.mubr.bf16.mxu0 0
      %1710 = vmatmul.mubr.bf16.gmra.mrb[0].mxu0 %v1010
      %v1711 = vpop.f32.mrb[0].mxu0
      %v1712 = vadd.f32 0.0, %v1711
      %v1713 = vpop.f32.mrb[0].mxu0
      %v1714 = vpop.f32.mrb[0].mxu0
      %v1715 = vadd.f32 0.0, %v1714
      %v1716 = vpop.f32.mrb[0].mxu0
      %1717 = vmatprep.mubr.bf16.mxu0 0
      %1718 = vmatmul.mubr.bf16.gmra.mrb[0].mxu0 %v1013
      %v1719 = vpop.f32.mrb[0].mxu0
      %v1720 = vadd.f32 0.0, %v1719
      %v1721 = vpop.f32.mrb[0].mxu0
      %v1722 = vpop.f32.mrb[0].mxu0
      %v1723 = vadd.f32 0.0, %v1722
      %v1724 = vpop.f32.mrb[0].mxu0
      %1725 = vmatprep.mubr.bf16.mxu0 0
      %1726 = vmatmul.mubr.bf16.gmra.mrb[0].mxu0 %v1016
      %v1727 = vpop.f32.mrb[0].mxu0
      %v1728 = vadd.f32 0.0, %v1727
      %v1729 = vpop.f32.mrb[0].mxu0
      %v1730 = vpop.f32.mrb[0].mxu0
      %v1731 = vadd.f32 0.0, %v1730
      %v1732 = vpop.f32.mrb[0].mxu0
      %1733 = vmatprep.mubr.bf16.mxu0 0
      %1734 = vmatmul.mubr.bf16.gmra.mrb[0].mxu0 %v1019
      %v1735 = vpop.f32.mrb[0].mxu0
      %v1736 = vadd.f32 0.0, %v1735
      %v1737 = vpop.f32.mrb[0].mxu0
      %v1738 = vpop.f32.mrb[0].mxu0
      %v1739 = vadd.f32 0.0, %v1738
      %v1740 = vpop.f32.mrb[0].mxu0
      %1741 = vmatprep.mubr.bf16.mxu0 0
      %1742 = vmatmul.mubr.bf16.gmra.mrb[0].mxu0 %v1022
      %v1743 = vpop.f32.mrb[0].mxu0
      %v1744 = vadd.f32 0.0, %v1743
      %v1745 = vpop.f32.mrb[0].mxu0
      %v1746 = vpop.f32.mrb[0].mxu0
      %v1747 = vadd.f32 0.0, %v1746
      %v1748 = vpop.f32.mrb[0].mxu0
      %1749 = vmatprep.mubr.bf16.mxu0 0
      %1750 = vmatmul.mubr.bf16.gmra.mrb[0].mxu0 %v1025
      %v1751 = vpop.f32.mrb[0].mxu0
      %v1752 = vadd.f32 0.0, %v1751
      %v1753 = vpop.f32.mrb[0].mxu0
      %v1754 = vpop.f32.mrb[0].mxu0
      %v1755 = vadd.f32 0.0, %v1754
      %v1756 = vpop.f32.mrb[0].mxu0
      %1757 = vmatprep.mubr.bf16.mxu0 0
      %1758 = vmatmul.mubr.bf16.gmra.mrb[0].mxu0 %v1028
      %v1759 = vpop.f32.mrb[0].mxu0
      %v1760 = vadd.f32 0.0, %v1759
      %v1761 = vpop.f32.mrb[0].mxu0
      %v1762 = vpop.f32.mrb[0].mxu0
      %v1763 = vadd.f32 0.0, %v1762
      %v1764 = vpop.f32.mrb[0].mxu0
      %1765 = vmatprep.mubr.bf16.mxu0 0
      %1766 = vmatmul.mubr.bf16.gmra.mrb[0].mxu0 %v1031
      %v1767 = vpop.f32.mrb[0].mxu0
      %v1768 = vadd.f32 0.0, %v1767
      %v1769 = vpop.f32.mrb[0].mxu0
      %v1770 = vpop.f32.mrb[0].mxu0
      %v1771 = vadd.f32 0.0, %v1770
      %v1772 = vpop.f32.mrb[0].mxu0
      %1773 = vmatprep.mubr.bf16.mxu0 0
      %1774 = vmatmul.mubr.bf16.gmra.mrb[0].mxu0 %v1034
      %v1775 = vpop.f32.mrb[0].mxu0
      %v1776 = vadd.f32 0.0, %v1775
      %v1777 = vpop.f32.mrb[0].mxu0
      %v1778 = vpop.f32.mrb[0].mxu0
      %v1779 = vadd.f32 0.0, %v1778
      %v1780 = vpop.f32.mrb[0].mxu0
      %1781 = vmatprep.mubr.bf16.mxu0 0
      %1782 = vmatmul.mubr.bf16.gmra.mrb[0].mxu0 %v1037
      %v1783 = vpop.f32.mrb[0].mxu0
      %v1784 = vadd.f32 0.0, %v1783
      %v1785 = vpop.f32.mrb[0].mxu0
      %v1786 = vpop.f32.mrb[0].mxu0
      %v1787 = vadd.f32 0.0, %v1786
      %v1788 = vpop.f32.mrb[0].mxu0
      %1789 = vmatprep.mubr.bf16.mxu0 0
      %1790 = vmatmul.mubr.bf16.gmra.mrb[0].mxu0 %v1632
      %v1791 = vpop.f32.mrb[0].mxu0
      %v1792 = vadd.f32 0.0, %v1791
      %v1793 = vpop.f32.mrb[0].mxu0
      %v1794 = vpop.f32.mrb[0].mxu0
      %v1795 = vadd.f32 0.0, %v1794
      %v1796 = vpop.f32.mrb[0].mxu0
      %1797 = vdwg.mxu0
      %v1798 = vadd.f32 %v1594, %v1672
      %v1799 = vadd.f32 %v1595, %v1675
      %v1800 = vadd.f32 %v1596, %v1680
      %v1801 = vadd.f32 %v1597, %v1683
      %v1802 = vadd.f32 %v1598, %v1688
      %v1803 = vadd.f32 %v1599, %v1691
      %v1804 = vadd.f32 %v1600, %v1696
      %v1805 = vadd.f32 %v1601, %v1699
      %v1806 = vadd.f32 %v1602, %v1704
      %v1807 = vadd.f32 %v1603, %v1707
      %v1808 = vadd.f32 %v1604, %v1712
      %v1809 = vadd.f32 %v1605, %v1715
      %v1810 = vadd.f32 %v1606, %v1720
      %v1811 = vadd.f32 %v1607, %v1723
      %v1812 = vadd.f32 %v1608, %v1728
      %v1813 = vadd.f32 %v1609, %v1731
      %v1814 = vadd.f32 %v1610, %v1736
      %v1815 = vadd.f32 %v1611, %v1739
      %v1816 = vadd.f32 %v1612, %v1744
      %v1817 = vadd.f32 %v1613, %v1747
      %v1818 = vadd.f32 %v1614, %v1752
      %v1819 = vadd.f32 %v1615, %v1755
      %v1820 = vadd.f32 %v1616, %v1760
      %v1821 = vadd.f32 %v1617, %v1763
      %v1822 = vadd.f32 %v1618, %v1768
      %v1823 = vadd.f32 %v1619, %v1771
      %v1824 = vadd.f32 %v1620, %v1776
      %v1825 = vadd.f32 %v1621, %v1779
      %v1826 = vadd.f32 %v1622, %v1784
      %v1827 = vadd.f32 %v1623, %v1787
      %v1828 = vadd.f32 %v1624, %v1792
      %v1829 = vadd.f32 %v1625, %v1795
      %v1831 = vshrl.u32 %v247, 16
      %v1833 = vrot.slane %v1831, 4
      %v1834 = vshll.u32 %v247, 16
      %v1836 = vrot.slane %v1834, 5
      %v1837 = vor.u32 %v1833, %v1836
      %v1838 = vrot.slane %v1837, 4
      %v1840 = vshll.u32 %v248, 16
      %v1842 = vrot.slane %v1840, 5
      %v1843 = vsel %vm264, %v1838, %v1842
      %v1844 = vshrl.u32 %v248, 16
      %v1846 = vrot.slane %v1844, 4
      %v1847 = vor.u32 %v1846, %v1842
      %v1848 = vrot.slane %v1847, 4
      %v1850 = vshll.u32 %v249, 16
      %v1852 = vrot.slane %v1850, 5
      %v1853 = vsel %vm264, %v1848, %v1852
      %v1854 = vunpack.c.l.b16 %v1843
      %v1855 = vunpack.c.l.b16 %v1853
      %v1856 = vpack.c.b16 %v1855, %v1854
      %v1858 = vsel %vm697, %v1856, 0
      %v1861 = vsel %vm746, %v257, 0
      %1863 = vmatprep.subr.bf16.mxu0 0
      %1864 = vmatpush1.bf16.msra.mxu0 %v1861
      %1865 = vmatprep.subr.bf16.mxu0 0
      %1866 = vmatpush1.bf16.msra.mxu0 0
      %1867 = vmatprep.subr.bf16.mxu0 0
      %1868 = vmatpush1.bf16.msra.mxu0 0
      %1869 = vmatprep.subr.bf16.mxu0 0
      %1870 = vmatpush1.bf16.msra.mxu0 0
      %1871 = vmatprep.subr.bf16.mxu0 0
      %1872 = vmatpush1.bf16.msra.mxu0 0
      %1873 = vmatprep.subr.bf16.mxu0 0
      %1874 = vmatpush1.bf16.msra.mxu0 0
      %1875 = vmatprep.subr.bf16.mxu0 0
      %1876 = vmatpush1.bf16.msra.mxu0 0
      %1877 = vmatprep.subr.bf16.mxu0 0
      %1878 = vmatpush1.bf16.msra.mxu0 0
      %1879 = vmatprep.subr.bf16.mxu0 0
      %1880 = vmatpush1.bf16.msra.mxu0 0
      %1881 = vmatprep.subr.bf16.mxu0 0
      %1882 = vmatpush1.bf16.msra.mxu0 0
      %1883 = vmatprep.subr.bf16.mxu0 0
      %1884 = vmatpush1.bf16.msra.mxu0 0
      %1885 = vmatprep.subr.bf16.mxu0 0
      %1886 = vmatpush1.bf16.msra.mxu0 0
      %1887 = vmatprep.subr.bf16.mxu0 0
      %1888 = vmatpush1.bf16.msra.mxu0 0
      %1889 = vmatprep.subr.bf16.mxu0 0
      %1890 = vmatpush1.bf16.msra.mxu0 0
      %1891 = vmatprep.subr.bf16.mxu0 0
      %1892 = vmatpush1.bf16.msra.mxu0 0
      %1893 = vmatprep.subr.bf16.mxu0 0
      %1894 = vmatpush1.bf16.msra.mxu0 0
      %1895 = vmatprep.mubr.bf16.mxu0 0
      %1896 = vmatmul.mubr.bf16.gmra.mrb[0].mxu0 %v702
      %v1897 = vpop.f32.mrb[0].mxu0
      %v1898 = vadd.f32 0.0, %v1897
      %v1899 = vpop.f32.mrb[0].mxu0
      %v1900 = vpop.f32.mrb[0].mxu0
      %v1901 = vadd.f32 0.0, %v1900
      %v1902 = vpop.f32.mrb[0].mxu0
      %1903 = vmatprep.mubr.bf16.mxu0 0
      %1904 = vmatmul.mubr.bf16.gmra.mrb[0].mxu0 %v705
      %v1905 = vpop.f32.mrb[0].mxu0
      %v1906 = vadd.f32 0.0, %v1905
      %v1907 = vpop.f32.mrb[0].mxu0
      %v1908 = vpop.f32.mrb[0].mxu0
      %v1909 = vadd.f32 0.0, %v1908
      %v1910 = vpop.f32.mrb[0].mxu0
      %1911 = vmatprep.mubr.bf16.mxu0 0
      %1912 = vmatmul.mubr.bf16.gmra.mrb[0].mxu0 %v708
      %v1913 = vpop.f32.mrb[0].mxu0
      %v1914 = vadd.f32 0.0, %v1913
      %v1915 = vpop.f32.mrb[0].mxu0
      %v1916 = vpop.f32.mrb[0].mxu0
      %v1917 = vadd.f32 0.0, %v1916
      %v1918 = vpop.f32.mrb[0].mxu0
      %1919 = vmatprep.mubr.bf16.mxu0 0
      %1920 = vmatmul.mubr.bf16.gmra.mrb[0].mxu0 %v711
      %v1921 = vpop.f32.mrb[0].mxu0
      %v1922 = vadd.f32 0.0, %v1921
      %v1923 = vpop.f32.mrb[0].mxu0
      %v1924 = vpop.f32.mrb[0].mxu0
      %v1925 = vadd.f32 0.0, %v1924
      %v1926 = vpop.f32.mrb[0].mxu0
      %1927 = vmatprep.mubr.bf16.mxu0 0
      %1928 = vmatmul.mubr.bf16.gmra.mrb[0].mxu0 %v714
      %v1929 = vpop.f32.mrb[0].mxu0
      %v1930 = vadd.f32 0.0, %v1929
      %v1931 = vpop.f32.mrb[0].mxu0
      %v1932 = vpop.f32.mrb[0].mxu0
      %v1933 = vadd.f32 0.0, %v1932
      %v1934 = vpop.f32.mrb[0].mxu0
      %1935 = vmatprep.mubr.bf16.mxu0 0
      %1936 = vmatmul.mubr.bf16.gmra.mrb[0].mxu0 %v717
      %v1937 = vpop.f32.mrb[0].mxu0
      %v1938 = vadd.f32 0.0, %v1937
      %v1939 = vpop.f32.mrb[0].mxu0
      %v1940 = vpop.f32.mrb[0].mxu0
      %v1941 = vadd.f32 0.0, %v1940
      %v1942 = vpop.f32.mrb[0].mxu0
      %1943 = vmatprep.mubr.bf16.mxu0 0
      %1944 = vmatmul.mubr.bf16.gmra.mrb[0].mxu0 %v720
      %v1945 = vpop.f32.mrb[0].mxu0
      %v1946 = vadd.f32 0.0, %v1945
      %v1947 = vpop.f32.mrb[0].mxu0
      %v1948 = vpop.f32.mrb[0].mxu0
      %v1949 = vadd.f32 0.0, %v1948
      %v1950 = vpop.f32.mrb[0].mxu0
      %1951 = vmatprep.mubr.bf16.mxu0 0
      %1952 = vmatmul.mubr.bf16.gmra.mrb[0].mxu0 %v723
      %v1953 = vpop.f32.mrb[0].mxu0
      %v1954 = vadd.f32 0.0, %v1953
      %v1955 = vpop.f32.mrb[0].mxu0
      %v1956 = vpop.f32.mrb[0].mxu0
      %v1957 = vadd.f32 0.0, %v1956
      %v1958 = vpop.f32.mrb[0].mxu0
      %1959 = vmatprep.mubr.bf16.mxu0 0
      %1960 = vmatmul.mubr.bf16.gmra.mrb[0].mxu0 %v726
      %v1961 = vpop.f32.mrb[0].mxu0
      %v1962 = vadd.f32 0.0, %v1961
      %v1963 = vpop.f32.mrb[0].mxu0
      %v1964 = vpop.f32.mrb[0].mxu0
      %v1965 = vadd.f32 0.0, %v1964
      %v1966 = vpop.f32.mrb[0].mxu0
      %1967 = vmatprep.mubr.bf16.mxu0 0
      %1968 = vmatmul.mubr.bf16.gmra.mrb[0].mxu0 %v729
      %v1969 = vpop.f32.mrb[0].mxu0
      %v1970 = vadd.f32 0.0, %v1969
      %v1971 = vpop.f32.mrb[0].mxu0
      %v1972 = vpop.f32.mrb[0].mxu0
      %v1973 = vadd.f32 0.0, %v1972
      %v1974 = vpop.f32.mrb[0].mxu0
      %1975 = vmatprep.mubr.bf16.mxu0 0
      %1976 = vmatmul.mubr.bf16.gmra.mrb[0].mxu0 %v732
      %v1977 = vpop.f32.mrb[0].mxu0
      %v1978 = vadd.f32 0.0, %v1977
      %v1979 = vpop.f32.mrb[0].mxu0
      %v1980 = vpop.f32.mrb[0].mxu0
      %v1981 = vadd.f32 0.0, %v1980
      %v1982 = vpop.f32.mrb[0].mxu0
      %1983 = vmatprep.mubr.bf16.mxu0 0
      %1984 = vmatmul.mubr.bf16.gmra.mrb[0].mxu0 %v735
      %v1985 = vpop.f32.mrb[0].mxu0
      %v1986 = vadd.f32 0.0, %v1985
      %v1987 = vpop.f32.mrb[0].mxu0
      %v1988 = vpop.f32.mrb[0].mxu0
      %v1989 = vadd.f32 0.0, %v1988
      %v1990 = vpop.f32.mrb[0].mxu0
      %1991 = vmatprep.mubr.bf16.mxu0 0
      %1992 = vmatmul.mubr.bf16.gmra.mrb[0].mxu0 %v738
      %v1993 = vpop.f32.mrb[0].mxu0
      %v1994 = vadd.f32 0.0, %v1993
      %v1995 = vpop.f32.mrb[0].mxu0
      %v1996 = vpop.f32.mrb[0].mxu0
      %v1997 = vadd.f32 0.0, %v1996
      %v1998 = vpop.f32.mrb[0].mxu0
      %1999 = vmatprep.mubr.bf16.mxu0 0
      %2000 = vmatmul.mubr.bf16.gmra.mrb[0].mxu0 %v741
      %v2001 = vpop.f32.mrb[0].mxu0
      %v2002 = vadd.f32 0.0, %v2001
      %v2003 = vpop.f32.mrb[0].mxu0
      %v2004 = vpop.f32.mrb[0].mxu0
      %v2005 = vadd.f32 0.0, %v2004
      %v2006 = vpop.f32.mrb[0].mxu0
      %2007 = vmatprep.mubr.bf16.mxu0 0
      %2008 = vmatmul.mubr.bf16.gmra.mrb[0].mxu0 %v744
      %v2009 = vpop.f32.mrb[0].mxu0
      %v2010 = vadd.f32 0.0, %v2009
      %v2011 = vpop.f32.mrb[0].mxu0
      %v2012 = vpop.f32.mrb[0].mxu0
      %v2013 = vadd.f32 0.0, %v2012
      %v2014 = vpop.f32.mrb[0].mxu0
      %2015 = vmatprep.mubr.bf16.mxu0 0
      %2016 = vmatmul.mubr.bf16.gmra.mrb[0].mxu0 %v1858
      %v2017 = vpop.f32.mrb[0].mxu0
      %v2018 = vadd.f32 0.0, %v2017
      %v2019 = vpop.f32.mrb[0].mxu0
      %v2020 = vpop.f32.mrb[0].mxu0
      %v2021 = vadd.f32 0.0, %v2020
      %v2022 = vpop.f32.mrb[0].mxu0
      %2023 = vdwg.mxu0
      %v2024 = vadd.f32 %v1798, %v1898
      %v2025 = vadd.f32 %v1799, %v1901
      %v2026 = vadd.f32 %v1800, %v1906
      %v2027 = vadd.f32 %v1801, %v1909
      %v2028 = vadd.f32 %v1802, %v1914
      %v2029 = vadd.f32 %v1803, %v1917
      %v2030 = vadd.f32 %v1804, %v1922
      %v2031 = vadd.f32 %v1805, %v1925
      %v2032 = vadd.f32 %v1806, %v1930
      %v2033 = vadd.f32 %v1807, %v1933
      %v2034 = vadd.f32 %v1808, %v1938
      %v2035 = vadd.f32 %v1809, %v1941
      %v2036 = vadd.f32 %v1810, %v1946
      %v2037 = vadd.f32 %v1811, %v1949
      %v2038 = vadd.f32 %v1812, %v1954
      %v2039 = vadd.f32 %v1813, %v1957
      %v2040 = vadd.f32 %v1814, %v1962
      %v2041 = vadd.f32 %v1815, %v1965
      %v2042 = vadd.f32 %v1816, %v1970
      %v2043 = vadd.f32 %v1817, %v1973
      %v2044 = vadd.f32 %v1818, %v1978
      %v2045 = vadd.f32 %v1819, %v1981
      %v2046 = vadd.f32 %v1820, %v1986
      %v2047 = vadd.f32 %v1821, %v1989
      %v2048 = vadd.f32 %v1822, %v1994
      %v2049 = vadd.f32 %v1823, %v1997
      %v2050 = vadd.f32 %v1824, %v2002
      %v2051 = vadd.f32 %v1825, %v2005
      %v2052 = vadd.f32 %v1826, %v2010
      %v2053 = vadd.f32 %v1827, %v2013
      %v2054 = vadd.f32 %v1828, %v2018
      %v2055 = vadd.f32 %v1829, %v2021
      %v2057 = vrot.slane %v247, 5
      %v2058 = vrot.slane %v2057, 4
      %v2059 = vrot.slane %v248, 5
      %v2060 = vsel %vm1221, %v2058, %v2059
      %v2061 = vrot.slane %v2059, 4
      %v2062 = vrot.slane %v249, 5
      %v2063 = vsel %vm1221, %v2061, %v2062
      %v2064 = vunpack.c.l.b16 %v2060
      %v2065 = vunpack.c.l.b16 %v2063
      %v2066 = vpack.c.b16 %v2065, %v2064
      %v2068 = vsel %vm697, %v2066, 0
      %v2071 = vsel %vm746, %v258, 0
      %2073 = vmatprep.subr.bf16.mxu0 0
      %2074 = vmatpush1.bf16.msra.mxu0 %v2071
      %2075 = vmatprep.subr.bf16.mxu0 0
      %2076 = vmatpush1.bf16.msra.mxu0 0
      %2077 = vmatprep.subr.bf16.mxu0 0
      %2078 = vmatpush1.bf16.msra.mxu0 0
      %2079 = vmatprep.subr.bf16.mxu0 0
      %2080 = vmatpush1.bf16.msra.mxu0 0
      %2081 = vmatprep.subr.bf16.mxu0 0
      %2082 = vmatpush1.bf16.msra.mxu0 0
      %2083 = vmatprep.subr.bf16.mxu0 0
      %2084 = vmatpush1.bf16.msra.mxu0 0
      %2085 = vmatprep.subr.bf16.mxu0 0
      %2086 = vmatpush1.bf16.msra.mxu0 0
      %2087 = vmatprep.subr.bf16.mxu0 0
      %2088 = vmatpush1.bf16.msra.mxu0 0
      %2089 = vmatprep.subr.bf16.mxu0 0
      %2090 = vmatpush1.bf16.msra.mxu0 0
      %2091 = vmatprep.subr.bf16.mxu0 0
      %2092 = vmatpush1.bf16.msra.mxu0 0
      %2093 = vmatprep.subr.bf16.mxu0 0
      %2094 = vmatpush1.bf16.msra.mxu0 0
      %2095 = vmatprep.subr.bf16.mxu0 0
      %2096 = vmatpush1.bf16.msra.mxu0 0
      %2097 = vmatprep.subr.bf16.mxu0 0
      %2098 = vmatpush1.bf16.msra.mxu0 0
      %2099 = vmatprep.subr.bf16.mxu0 0
      %2100 = vmatpush1.bf16.msra.mxu0 0
      %2101 = vmatprep.subr.bf16.mxu0 0
      %2102 = vmatpush1.bf16.msra.mxu0 0
      %2103 = vmatprep.subr.bf16.mxu0 0
      %2104 = vmatpush1.bf16.msra.mxu0 0
      %2105 = vmatprep.mubr.bf16.mxu0 0
      %2106 = vmatmul.mubr.bf16.gmra.mrb[0].mxu0 %v1386
      %v2107 = vpop.f32.mrb[0].mxu0
      %v2108 = vadd.f32 0.0, %v2107
      %v2109 = vpop.f32.mrb[0].mxu0
      %v2110 = vpop.f32.mrb[0].mxu0
      %v2111 = vadd.f32 0.0, %v2110
      %v2112 = vpop.f32.mrb[0].mxu0
      %2113 = vmatprep.mubr.bf16.mxu0 0
      %2114 = vmatmul.mubr.bf16.gmra.mrb[0].mxu0 %v1389
      %v2115 = vpop.f32.mrb[0].mxu0
      %v2116 = vadd.f32 0.0, %v2115
      %v2117 = vpop.f32.mrb[0].mxu0
      %v2118 = vpop.f32.mrb[0].mxu0
      %v2119 = vadd.f32 0.0, %v2118
      %v2120 = vpop.f32.mrb[0].mxu0
      %2121 = vmatprep.mubr.bf16.mxu0 0
      %2122 = vmatmul.mubr.bf16.gmra.mrb[0].mxu0 %v1392
      %v2123 = vpop.f32.mrb[0].mxu0
      %v2124 = vadd.f32 0.0, %v2123
      %v2125 = vpop.f32.mrb[0].mxu0
      %v2126 = vpop.f32.mrb[0].mxu0
      %v2127 = vadd.f32 0.0, %v2126
      %v2128 = vpop.f32.mrb[0].mxu0
      %2129 = vmatprep.mubr.bf16.mxu0 0
      %2130 = vmatmul.mubr.bf16.gmra.mrb[0].mxu0 %v1395
      %v2131 = vpop.f32.mrb[0].mxu0
      %v2132 = vadd.f32 0.0, %v2131
      %v2133 = vpop.f32.mrb[0].mxu0
      %v2134 = vpop.f32.mrb[0].mxu0
      %v2135 = vadd.f32 0.0, %v2134
      %v2136 = vpop.f32.mrb[0].mxu0
      %2137 = vmatprep.mubr.bf16.mxu0 0
      %2138 = vmatmul.mubr.bf16.gmra.mrb[0].mxu0 %v1398
      %v2139 = vpop.f32.mrb[0].mxu0
      %v2140 = vadd.f32 0.0, %v2139
      %v2141 = vpop.f32.mrb[0].mxu0
      %v2142 = vpop.f32.mrb[0].mxu0
      %v2143 = vadd.f32 0.0, %v2142
      %v2144 = vpop.f32.mrb[0].mxu0
      %2145 = vmatprep.mubr.bf16.mxu0 0
      %2146 = vmatmul.mubr.bf16.gmra.mrb[0].mxu0 %v1401
      %v2147 = vpop.f32.mrb[0].mxu0
      %v2148 = vadd.f32 0.0, %v2147
      %v2149 = vpop.f32.mrb[0].mxu0
      %v2150 = vpop.f32.mrb[0].mxu0
      %v2151 = vadd.f32 0.0, %v2150
      %v2152 = vpop.f32.mrb[0].mxu0
      %2153 = vmatprep.mubr.bf16.mxu0 0
      %2154 = vmatmul.mubr.bf16.gmra.mrb[0].mxu0 %v1404
      %v2155 = vpop.f32.mrb[0].mxu0
      %v2156 = vadd.f32 0.0, %v2155
      %v2157 = vpop.f32.mrb[0].mxu0
      %v2158 = vpop.f32.mrb[0].mxu0
      %v2159 = vadd.f32 0.0, %v2158
      %v2160 = vpop.f32.mrb[0].mxu0
      %2161 = vmatprep.mubr.bf16.mxu0 0
      %2162 = vmatmul.mubr.bf16.gmra.mrb[0].mxu0 %v1407
      %v2163 = vpop.f32.mrb[0].mxu0
      %v2164 = vadd.f32 0.0, %v2163
      %v2165 = vpop.f32.mrb[0].mxu0
      %v2166 = vpop.f32.mrb[0].mxu0
      %v2167 = vadd.f32 0.0, %v2166
      %v2168 = vpop.f32.mrb[0].mxu0
      %2169 = vmatprep.mubr.bf16.mxu0 0
      %2170 = vmatmul.mubr.bf16.gmra.mrb[0].mxu0 %v1410
      %v2171 = vpop.f32.mrb[0].mxu0
      %v2172 = vadd.f32 0.0, %v2171
      %v2173 = vpop.f32.mrb[0].mxu0
      %v2174 = vpop.f32.mrb[0].mxu0
      %v2175 = vadd.f32 0.0, %v2174
      %v2176 = vpop.f32.mrb[0].mxu0
      %2177 = vmatprep.mubr.bf16.mxu0 0
      %2178 = vmatmul.mubr.bf16.gmra.mrb[0].mxu0 %v1413
      %v2179 = vpop.f32.mrb[0].mxu0
      %v2180 = vadd.f32 0.0, %v2179
      %v2181 = vpop.f32.mrb[0].mxu0
      %v2182 = vpop.f32.mrb[0].mxu0
      %v2183 = vadd.f32 0.0, %v2182
      %v2184 = vpop.f32.mrb[0].mxu0
      %2185 = vmatprep.mubr.bf16.mxu0 0
      %2186 = vmatmul.mubr.bf16.gmra.mrb[0].mxu0 %v1416
      %v2187 = vpop.f32.mrb[0].mxu0
      %v2188 = vadd.f32 0.0, %v2187
      %v2189 = vpop.f32.mrb[0].mxu0
      %v2190 = vpop.f32.mrb[0].mxu0
      %v2191 = vadd.f32 0.0, %v2190
      %v2192 = vpop.f32.mrb[0].mxu0
      %2193 = vmatprep.mubr.bf16.mxu0 0
      %2194 = vmatmul.mubr.bf16.gmra.mrb[0].mxu0 %v1419
      %v2195 = vpop.f32.mrb[0].mxu0
      %v2196 = vadd.f32 0.0, %v2195
      %v2197 = vpop.f32.mrb[0].mxu0
      %v2198 = vpop.f32.mrb[0].mxu0
      %v2199 = vadd.f32 0.0, %v2198
      %v2200 = vpop.f32.mrb[0].mxu0
      %2201 = vmatprep.mubr.bf16.mxu0 0
      %2202 = vmatmul.mubr.bf16.gmra.mrb[0].mxu0 %v1422
      %v2203 = vpop.f32.mrb[0].mxu0
      %v2204 = vadd.f32 0.0, %v2203
      %v2205 = vpop.f32.mrb[0].mxu0
      %v2206 = vpop.f32.mrb[0].mxu0
      %v2207 = vadd.f32 0.0, %v2206
      %v2208 = vpop.f32.mrb[0].mxu0
      %2209 = vmatprep.mubr.bf16.mxu0 0
      %2210 = vmatmul.mubr.bf16.gmra.mrb[0].mxu0 %v1425
      %v2211 = vpop.f32.mrb[0].mxu0
      %v2212 = vadd.f32 0.0, %v2211
      %v2213 = vpop.f32.mrb[0].mxu0
      %v2214 = vpop.f32.mrb[0].mxu0
      %v2215 = vadd.f32 0.0, %v2214
      %v2216 = vpop.f32.mrb[0].mxu0
      %2217 = vmatprep.mubr.bf16.mxu0 0
      %2218 = vmatmul.mubr.bf16.gmra.mrb[0].mxu0 %v1428
      %v2219 = vpop.f32.mrb[0].mxu0
      %v2220 = vadd.f32 0.0, %v2219
      %v2221 = vpop.f32.mrb[0].mxu0
      %v2222 = vpop.f32.mrb[0].mxu0
      %v2223 = vadd.f32 0.0, %v2222
      %v2224 = vpop.f32.mrb[0].mxu0
      %2225 = vmatprep.mubr.bf16.mxu0 0
      %2226 = vmatmul.mubr.bf16.gmra.mrb[0].mxu0 %v2068
      %v2227 = vpop.f32.mrb[0].mxu0
      %v2228 = vadd.f32 0.0, %v2227
      %v2229 = vpop.f32.mrb[0].mxu0
      %v2230 = vpop.f32.mrb[0].mxu0
      %v2231 = vadd.f32 0.0, %v2230
      %v2232 = vpop.f32.mrb[0].mxu0
      %2233 = vdwg.mxu0
      %v2234 = vadd.f32 %v2024, %v2108
      %v2235 = vadd.f32 %v2025, %v2111
      %v2236 = vadd.f32 %v2026, %v2116
      %v2237 = vadd.f32 %v2027, %v2119
      %v2238 = vadd.f32 %v2028, %v2124
      %v2239 = vadd.f32 %v2029, %v2127
      %v2240 = vadd.f32 %v2030, %v2132
      %v2241 = vadd.f32 %v2031, %v2135
      %v2242 = vadd.f32 %v2032, %v2140
      %v2243 = vadd.f32 %v2033, %v2143
      %v2244 = vadd.f32 %v2034, %v2148
      %v2245 = vadd.f32 %v2035, %v2151
      %v2246 = vadd.f32 %v2036, %v2156
      %v2247 = vadd.f32 %v2037, %v2159
      %v2248 = vadd.f32 %v2038, %v2164
      %v2249 = vadd.f32 %v2039, %v2167
      %v2250 = vadd.f32 %v2040, %v2172
      %v2251 = vadd.f32 %v2041, %v2175
      %v2252 = vadd.f32 %v2042, %v2180
      %v2253 = vadd.f32 %v2043, %v2183
      %v2254 = vadd.f32 %v2044, %v2188
      %v2255 = vadd.f32 %v2045, %v2191
      %v2256 = vadd.f32 %v2046, %v2196
      %v2257 = vadd.f32 %v2047, %v2199
      %v2258 = vadd.f32 %v2048, %v2204
      %v2259 = vadd.f32 %v2049, %v2207
      %v2260 = vadd.f32 %v2050, %v2212
      %v2261 = vadd.f32 %v2051, %v2215
      %v2262 = vadd.f32 %v2052, %v2220
      %v2263 = vadd.f32 %v2053, %v2223
      %v2264 = vadd.f32 %v2054, %v2228
      %v2265 = vadd.f32 %v2055, %v2231
      %v2268 = vunpack.c.l.b16 %v250
      %v2269 = vunpack.c.l.b16 %v251
      %v2270 = vpack.c.b16 %v2269, %v2268
      %v2272 = vsel %vm697, %v2270, 0
      %v2275 = vsel %vm746, %v259, 0
      %2277 = vmatprep.subr.bf16.mxu0 0
      %2278 = vmatpush1.bf16.msra.mxu0 %v2275
      %2279 = vmatprep.subr.bf16.mxu0 0
      %2280 = vmatpush1.bf16.msra.mxu0 0
      %2281 = vmatprep.subr.bf16.mxu0 0
      %2282 = vmatpush1.bf16.msra.mxu0 0
      %2283 = vmatprep.subr.bf16.mxu0 0
      %2284 = vmatpush1.bf16.msra.mxu0 0
      %2285 = vmatprep.subr.bf16.mxu0 0
      %2286 = vmatpush1.bf16.msra.mxu0 0
      %2287 = vmatprep.subr.bf16.mxu0 0
      %2288 = vmatpush1.bf16.msra.mxu0 0
      %2289 = vmatprep.subr.bf16.mxu0 0
      %2290 = vmatpush1.bf16.msra.mxu0 0
      %2291 = vmatprep.subr.bf16.mxu0 0
      %2292 = vmatpush1.bf16.msra.mxu0 0
      %2293 = vmatprep.subr.bf16.mxu0 0
      %2294 = vmatpush1.bf16.msra.mxu0 0
      %2295 = vmatprep.subr.bf16.mxu0 0
      %2296 = vmatpush1.bf16.msra.mxu0 0
      %2297 = vmatprep.subr.bf16.mxu0 0
      %2298 = vmatpush1.bf16.msra.mxu0 0
      %2299 = vmatprep.subr.bf16.mxu0 0
      %2300 = vmatpush1.bf16.msra.mxu0 0
      %2301 = vmatprep.subr.bf16.mxu0 0
      %2302 = vmatpush1.bf16.msra.mxu0 0
      %2303 = vmatprep.subr.bf16.mxu0 0
      %2304 = vmatpush1.bf16.msra.mxu0 0
      %2305 = vmatprep.subr.bf16.mxu0 0
      %2306 = vmatpush1.bf16.msra.mxu0 0
      %2307 = vmatprep.subr.bf16.mxu0 0
      %2308 = vmatpush1.bf16.msra.mxu0 0
      %2309 = vmatprep.mubr.bf16.mxu0 0
      %2310 = vmatmul.mubr.bf16.gmra.mrb[0].mxu0 %v998
      %v2311 = vpop.f32.mrb[0].mxu0
      %v2312 = vadd.f32 0.0, %v2311
      %v2313 = vpop.f32.mrb[0].mxu0
      %v2314 = vpop.f32.mrb[0].mxu0
      %v2315 = vadd.f32 0.0, %v2314
      %v2316 = vpop.f32.mrb[0].mxu0
      %2317 = vmatprep.mubr.bf16.mxu0 0
      %2318 = vmatmul.mubr.bf16.gmra.mrb[0].mxu0 %v1001
      %v2319 = vpop.f32.mrb[0].mxu0
      %v2320 = vadd.f32 0.0, %v2319
      %v2321 = vpop.f32.mrb[0].mxu0
      %v2322 = vpop.f32.mrb[0].mxu0
      %v2323 = vadd.f32 0.0, %v2322
      %v2324 = vpop.f32.mrb[0].mxu0
      %2325 = vmatprep.mubr.bf16.mxu0 0
      %2326 = vmatmul.mubr.bf16.gmra.mrb[0].mxu0 %v1004
      %v2327 = vpop.f32.mrb[0].mxu0
      %v2328 = vadd.f32 0.0, %v2327
      %v2329 = vpop.f32.mrb[0].mxu0
      %v2330 = vpop.f32.mrb[0].mxu0
      %v2331 = vadd.f32 0.0, %v2330
      %v2332 = vpop.f32.mrb[0].mxu0
      %2333 = vmatprep.mubr.bf16.mxu0 0
      %2334 = vmatmul.mubr.bf16.gmra.mrb[0].mxu0 %v1007
      %v2335 = vpop.f32.mrb[0].mxu0
      %v2336 = vadd.f32 0.0, %v2335
      %v2337 = vpop.f32.mrb[0].mxu0
      %v2338 = vpop.f32.mrb[0].mxu0
      %v2339 = vadd.f32 0.0, %v2338
      %v2340 = vpop.f32.mrb[0].mxu0
      %2341 = vmatprep.mubr.bf16.mxu0 0
      %2342 = vmatmul.mubr.bf16.gmra.mrb[0].mxu0 %v1010
      %v2343 = vpop.f32.mrb[0].mxu0
      %v2344 = vadd.f32 0.0, %v2343
      %v2345 = vpop.f32.mrb[0].mxu0
      %v2346 = vpop.f32.mrb[0].mxu0
      %v2347 = vadd.f32 0.0, %v2346
      %v2348 = vpop.f32.mrb[0].mxu0
      %2349 = vmatprep.mubr.bf16.mxu0 0
      %2350 = vmatmul.mubr.bf16.gmra.mrb[0].mxu0 %v1013
      %v2351 = vpop.f32.mrb[0].mxu0
      %v2352 = vadd.f32 0.0, %v2351
      %v2353 = vpop.f32.mrb[0].mxu0
      %v2354 = vpop.f32.mrb[0].mxu0
      %v2355 = vadd.f32 0.0, %v2354
      %v2356 = vpop.f32.mrb[0].mxu0
      %2357 = vmatprep.mubr.bf16.mxu0 0
      %2358 = vmatmul.mubr.bf16.gmra.mrb[0].mxu0 %v1016
      %v2359 = vpop.f32.mrb[0].mxu0
      %v2360 = vadd.f32 0.0, %v2359
      %v2361 = vpop.f32.mrb[0].mxu0
      %v2362 = vpop.f32.mrb[0].mxu0
      %v2363 = vadd.f32 0.0, %v2362
      %v2364 = vpop.f32.mrb[0].mxu0
      %2365 = vmatprep.mubr.bf16.mxu0 0
      %2366 = vmatmul.mubr.bf16.gmra.mrb[0].mxu0 %v1019
      %v2367 = vpop.f32.mrb[0].mxu0
      %v2368 = vadd.f32 0.0, %v2367
      %v2369 = vpop.f32.mrb[0].mxu0
      %v2370 = vpop.f32.mrb[0].mxu0
      %v2371 = vadd.f32 0.0, %v2370
      %v2372 = vpop.f32.mrb[0].mxu0
      %2373 = vmatprep.mubr.bf16.mxu0 0
      %2374 = vmatmul.mubr.bf16.gmra.mrb[0].mxu0 %v1022
      %v2375 = vpop.f32.mrb[0].mxu0
      %v2376 = vadd.f32 0.0, %v2375
      %v2377 = vpop.f32.mrb[0].mxu0
      %v2378 = vpop.f32.mrb[0].mxu0
      %v2379 = vadd.f32 0.0, %v2378
      %v2380 = vpop.f32.mrb[0].mxu0
      %2381 = vmatprep.mubr.bf16.mxu0 0
      %2382 = vmatmul.mubr.bf16.gmra.mrb[0].mxu0 %v1025
      %v2383 = vpop.f32.mrb[0].mxu0
      %v2384 = vadd.f32 0.0, %v2383
      %v2385 = vpop.f32.mrb[0].mxu0
      %v2386 = vpop.f32.mrb[0].mxu0
      %v2387 = vadd.f32 0.0, %v2386
      %v2388 = vpop.f32.mrb[0].mxu0
      %2389 = vmatprep.mubr.bf16.mxu0 0
      %2390 = vmatmul.mubr.bf16.gmra.mrb[0].mxu0 %v1028
      %v2391 = vpop.f32.mrb[0].mxu0
      %v2392 = vadd.f32 0.0, %v2391
      %v2393 = vpop.f32.mrb[0].mxu0
      %v2394 = vpop.f32.mrb[0].mxu0
      %v2395 = vadd.f32 0.0, %v2394
      %v2396 = vpop.f32.mrb[0].mxu0
      %2397 = vmatprep.mubr.bf16.mxu0 0
      %2398 = vmatmul.mubr.bf16.gmra.mrb[0].mxu0 %v1031
      %v2399 = vpop.f32.mrb[0].mxu0
      %v2400 = vadd.f32 0.0, %v2399
      %v2401 = vpop.f32.mrb[0].mxu0
      %v2402 = vpop.f32.mrb[0].mxu0
      %v2403 = vadd.f32 0.0, %v2402
      %v2404 = vpop.f32.mrb[0].mxu0
      %2405 = vmatprep.mubr.bf16.mxu0 0
      %2406 = vmatmul.mubr.bf16.gmra.mrb[0].mxu0 %v1034
      %v2407 = vpop.f32.mrb[0].mxu0
      %v2408 = vadd.f32 0.0, %v2407
      %v2409 = vpop.f32.mrb[0].mxu0
      %v2410 = vpop.f32.mrb[0].mxu0
      %v2411 = vadd.f32 0.0, %v2410
      %v2412 = vpop.f32.mrb[0].mxu0
      %2413 = vmatprep.mubr.bf16.mxu0 0
      %2414 = vmatmul.mubr.bf16.gmra.mrb[0].mxu0 %v1037
      %v2415 = vpop.f32.mrb[0].mxu0
      %v2416 = vadd.f32 0.0, %v2415
      %v2417 = vpop.f32.mrb[0].mxu0
      %v2418 = vpop.f32.mrb[0].mxu0
      %v2419 = vadd.f32 0.0, %v2418
      %v2420 = vpop.f32.mrb[0].mxu0
      %2421 = vmatprep.mubr.bf16.mxu0 0
      %2422 = vmatmul.mubr.bf16.gmra.mrb[0].mxu0 %v1632
      %v2423 = vpop.f32.mrb[0].mxu0
      %v2424 = vadd.f32 0.0, %v2423
      %v2425 = vpop.f32.mrb[0].mxu0
      %v2426 = vpop.f32.mrb[0].mxu0
      %v2427 = vadd.f32 0.0, %v2426
      %v2428 = vpop.f32.mrb[0].mxu0
      %2429 = vmatprep.mubr.bf16.mxu0 0
      %2430 = vmatmul.mubr.bf16.gmra.mrb[0].mxu0 %v2272
      %v2431 = vpop.f32.mrb[0].mxu0
      %v2432 = vadd.f32 0.0, %v2431
      %v2433 = vpop.f32.mrb[0].mxu0
      %v2434 = vpop.f32.mrb[0].mxu0
      %v2435 = vadd.f32 0.0, %v2434
      %v2436 = vpop.f32.mrb[0].mxu0
      %2437 = vdwg.mxu0
      %v2438 = vadd.f32 %v2234, %v2312
      %v2439 = vadd.f32 %v2235, %v2315
      %v2440 = vadd.f32 %v2236, %v2320
      %v2441 = vadd.f32 %v2237, %v2323
      %v2442 = vadd.f32 %v2238, %v2328
      %v2443 = vadd.f32 %v2239, %v2331
      %v2444 = vadd.f32 %v2240, %v2336
      %v2445 = vadd.f32 %v2241, %v2339
      %v2446 = vadd.f32 %v2242, %v2344
      %v2447 = vadd.f32 %v2243, %v2347
      %v2448 = vadd.f32 %v2244, %v2352
      %v2449 = vadd.f32 %v2245, %v2355
      %v2450 = vadd.f32 %v2246, %v2360
      %v2451 = vadd.f32 %v2247, %v2363
      %v2452 = vadd.f32 %v2248, %v2368
      %v2453 = vadd.f32 %v2249, %v2371
      %v2454 = vadd.f32 %v2250, %v2376
      %v2455 = vadd.f32 %v2251, %v2379
      %v2456 = vadd.f32 %v2252, %v2384
      %v2457 = vadd.f32 %v2253, %v2387
      %v2458 = vadd.f32 %v2254, %v2392
      %v2459 = vadd.f32 %v2255, %v2395
      %v2460 = vadd.f32 %v2256, %v2400
      %v2461 = vadd.f32 %v2257, %v2403
      %v2462 = vadd.f32 %v2258, %v2408
      %v2463 = vadd.f32 %v2259, %v2411
      %v2464 = vadd.f32 %v2260, %v2416
      %v2465 = vadd.f32 %v2261, %v2419
      %v2466 = vadd.f32 %v2262, %v2424
      %v2467 = vadd.f32 %v2263, %v2427
      %v2468 = vadd.f32 %v2264, %v2432
      %v2469 = vadd.f32 %v2265, %v2435
      %v2471 = vshrl.u32 %v250, 16
      %v2473 = vrot.slane %v2471, 4
      %v2474 = vshll.u32 %v250, 16
      %v2476 = vrot.slane %v2474, 5
      %v2477 = vor.u32 %v2473, %v2476
      %v2478 = vrot.slane %v2477, 4
      %v2480 = vshll.u32 %v251, 16
      %v2482 = vrot.slane %v2480, 5
      %v2483 = vsel %vm264, %v2478, %v2482
      %v2484 = vshrl.u32 %v251, 16
      %v2486 = vrot.slane %v2484, 4
      %v2487 = vor.u32 %v2486, %v2482
      %v2488 = vrot.slane %v2487, 4
      %v2490 = vshll.u32 %v252, 16
      %v2492 = vrot.slane %v2490, 5
      %v2493 = vsel %vm264, %v2488, %v2492
      %v2494 = vunpack.c.l.b16 %v2483
      %v2495 = vunpack.c.l.b16 %v2493
      %v2496 = vpack.c.b16 %v2495, %v2494
      %v2498 = vsel %vm697, %v2496, 0
      %v2501 = vsel %vm746, %v260, 0
      %2503 = vmatprep.subr.bf16.mxu0 0
      %2504 = vmatpush1.bf16.msra.mxu0 %v2501
      %2505 = vmatprep.subr.bf16.mxu0 0
      %2506 = vmatpush1.bf16.msra.mxu0 0
      %2507 = vmatprep.subr.bf16.mxu0 0
      %2508 = vmatpush1.bf16.msra.mxu0 0
      %2509 = vmatprep.subr.bf16.mxu0 0
      %2510 = vmatpush1.bf16.msra.mxu0 0
      %2511 = vmatprep.subr.bf16.mxu0 0
      %2512 = vmatpush1.bf16.msra.mxu0 0
      %2513 = vmatprep.subr.bf16.mxu0 0
      %2514 = vmatpush1.bf16.msra.mxu0 0
      %2515 = vmatprep.subr.bf16.mxu0 0
      %2516 = vmatpush1.bf16.msra.mxu0 0
      %2517 = vmatprep.subr.bf16.mxu0 0
      %2518 = vmatpush1.bf16.msra.mxu0 0
      %2519 = vmatprep.subr.bf16.mxu0 0
      %2520 = vmatpush1.bf16.msra.mxu0 0
      %2521 = vmatprep.subr.bf16.mxu0 0
      %2522 = vmatpush1.bf16.msra.mxu0 0
      %2523 = vmatprep.subr.bf16.mxu0 0
      %2524 = vmatpush1.bf16.msra.mxu0 0
      %2525 = vmatprep.subr.bf16.mxu0 0
      %2526 = vmatpush1.bf16.msra.mxu0 0
      %2527 = vmatprep.subr.bf16.mxu0 0
      %2528 = vmatpush1.bf16.msra.mxu0 0
      %2529 = vmatprep.subr.bf16.mxu0 0
      %2530 = vmatpush1.bf16.msra.mxu0 0
      %2531 = vmatprep.subr.bf16.mxu0 0
      %2532 = vmatpush1.bf16.msra.mxu0 0
      %2533 = vmatprep.subr.bf16.mxu0 0
      %2534 = vmatpush1.bf16.msra.mxu0 0
      %2535 = vmatprep.mubr.bf16.mxu0 0
      %2536 = vmatmul.mubr.bf16.gmra.mrb[0].mxu0 %v705
      %v2537 = vpop.f32.mrb[0].mxu0
      %v2538 = vadd.f32 0.0, %v2537
      %v2539 = vpop.f32.mrb[0].mxu0
      %v2540 = vpop.f32.mrb[0].mxu0
      %v2541 = vadd.f32 0.0, %v2540
      %v2542 = vpop.f32.mrb[0].mxu0
      %2543 = vmatprep.mubr.bf16.mxu0 0
      %2544 = vmatmul.mubr.bf16.gmra.mrb[0].mxu0 %v708
      %v2545 = vpop.f32.mrb[0].mxu0
      %v2546 = vadd.f32 0.0, %v2545
      %v2547 = vpop.f32.mrb[0].mxu0
      %v2548 = vpop.f32.mrb[0].mxu0
      %v2549 = vadd.f32 0.0, %v2548
      %v2550 = vpop.f32.mrb[0].mxu0
      %2551 = vmatprep.mubr.bf16.mxu0 0
      %2552 = vmatmul.mubr.bf16.gmra.mrb[0].mxu0 %v711
      %v2553 = vpop.f32.mrb[0].mxu0
      %v2554 = vadd.f32 0.0, %v2553
      %v2555 = vpop.f32.mrb[0].mxu0
      %v2556 = vpop.f32.mrb[0].mxu0
      %v2557 = vadd.f32 0.0, %v2556
      %v2558 = vpop.f32.mrb[0].mxu0
      %2559 = vmatprep.mubr.bf16.mxu0 0
      %2560 = vmatmul.mubr.bf16.gmra.mrb[0].mxu0 %v714
      %v2561 = vpop.f32.mrb[0].mxu0
      %v2562 = vadd.f32 0.0, %v2561
      %v2563 = vpop.f32.mrb[0].mxu0
      %v2564 = vpop.f32.mrb[0].mxu0
      %v2565 = vadd.f32 0.0, %v2564
      %v2566 = vpop.f32.mrb[0].mxu0
      %2567 = vmatprep.mubr.bf16.mxu0 0
      %2568 = vmatmul.mubr.bf16.gmra.mrb[0].mxu0 %v717
      %v2569 = vpop.f32.mrb[0].mxu0
      %v2570 = vadd.f32 0.0, %v2569
      %v2571 = vpop.f32.mrb[0].mxu0
      %v2572 = vpop.f32.mrb[0].mxu0
      %v2573 = vadd.f32 0.0, %v2572
      %v2574 = vpop.f32.mrb[0].mxu0
      %2575 = vmatprep.mubr.bf16.mxu0 0
      %2576 = vmatmul.mubr.bf16.gmra.mrb[0].mxu0 %v720
      %v2577 = vpop.f32.mrb[0].mxu0
      %v2578 = vadd.f32 0.0, %v2577
      %v2579 = vpop.f32.mrb[0].mxu0
      %v2580 = vpop.f32.mrb[0].mxu0
      %v2581 = vadd.f32 0.0, %v2580
      %v2582 = vpop.f32.mrb[0].mxu0
      %2583 = vmatprep.mubr.bf16.mxu0 0
      %2584 = vmatmul.mubr.bf16.gmra.mrb[0].mxu0 %v723
      %v2585 = vpop.f32.mrb[0].mxu0
      %v2586 = vadd.f32 0.0, %v2585
      %v2587 = vpop.f32.mrb[0].mxu0
      %v2588 = vpop.f32.mrb[0].mxu0
      %v2589 = vadd.f32 0.0, %v2588
      %v2590 = vpop.f32.mrb[0].mxu0
      %2591 = vmatprep.mubr.bf16.mxu0 0
      %2592 = vmatmul.mubr.bf16.gmra.mrb[0].mxu0 %v726
      %v2593 = vpop.f32.mrb[0].mxu0
      %v2594 = vadd.f32 0.0, %v2593
      %v2595 = vpop.f32.mrb[0].mxu0
      %v2596 = vpop.f32.mrb[0].mxu0
      %v2597 = vadd.f32 0.0, %v2596
      %v2598 = vpop.f32.mrb[0].mxu0
      %2599 = vmatprep.mubr.bf16.mxu0 0
      %2600 = vmatmul.mubr.bf16.gmra.mrb[0].mxu0 %v729
      %v2601 = vpop.f32.mrb[0].mxu0
      %v2602 = vadd.f32 0.0, %v2601
      %v2603 = vpop.f32.mrb[0].mxu0
      %v2604 = vpop.f32.mrb[0].mxu0
      %v2605 = vadd.f32 0.0, %v2604
      %v2606 = vpop.f32.mrb[0].mxu0
      %2607 = vmatprep.mubr.bf16.mxu0 0
      %2608 = vmatmul.mubr.bf16.gmra.mrb[0].mxu0 %v732
      %v2609 = vpop.f32.mrb[0].mxu0
      %v2610 = vadd.f32 0.0, %v2609
      %v2611 = vpop.f32.mrb[0].mxu0
      %v2612 = vpop.f32.mrb[0].mxu0
      %v2613 = vadd.f32 0.0, %v2612
      %v2614 = vpop.f32.mrb[0].mxu0
      %2615 = vmatprep.mubr.bf16.mxu0 0
      %2616 = vmatmul.mubr.bf16.gmra.mrb[0].mxu0 %v735
      %v2617 = vpop.f32.mrb[0].mxu0
      %v2618 = vadd.f32 0.0, %v2617
      %v2619 = vpop.f32.mrb[0].mxu0
      %v2620 = vpop.f32.mrb[0].mxu0
      %v2621 = vadd.f32 0.0, %v2620
      %v2622 = vpop.f32.mrb[0].mxu0
      %2623 = vmatprep.mubr.bf16.mxu0 0
      %2624 = vmatmul.mubr.bf16.gmra.mrb[0].mxu0 %v738
      %v2625 = vpop.f32.mrb[0].mxu0
      %v2626 = vadd.f32 0.0, %v2625
      %v2627 = vpop.f32.mrb[0].mxu0
      %v2628 = vpop.f32.mrb[0].mxu0
      %v2629 = vadd.f32 0.0, %v2628
      %v2630 = vpop.f32.mrb[0].mxu0
      %2631 = vmatprep.mubr.bf16.mxu0 0
      %2632 = vmatmul.mubr.bf16.gmra.mrb[0].mxu0 %v741
      %v2633 = vpop.f32.mrb[0].mxu0
      %v2634 = vadd.f32 0.0, %v2633
      %v2635 = vpop.f32.mrb[0].mxu0
      %v2636 = vpop.f32.mrb[0].mxu0
      %v2637 = vadd.f32 0.0, %v2636
      %v2638 = vpop.f32.mrb[0].mxu0
      %2639 = vmatprep.mubr.bf16.mxu0 0
      %2640 = vmatmul.mubr.bf16.gmra.mrb[0].mxu0 %v744
      %v2641 = vpop.f32.mrb[0].mxu0
      %v2642 = vadd.f32 0.0, %v2641
      %v2643 = vpop.f32.mrb[0].mxu0
      %v2644 = vpop.f32.mrb[0].mxu0
      %v2645 = vadd.f32 0.0, %v2644
      %v2646 = vpop.f32.mrb[0].mxu0
      %2647 = vmatprep.mubr.bf16.mxu0 0
      %2648 = vmatmul.mubr.bf16.gmra.mrb[0].mxu0 %v1858
      %v2649 = vpop.f32.mrb[0].mxu0
      %v2650 = vadd.f32 0.0, %v2649
      %v2651 = vpop.f32.mrb[0].mxu0
      %v2652 = vpop.f32.mrb[0].mxu0
      %v2653 = vadd.f32 0.0, %v2652
      %v2654 = vpop.f32.mrb[0].mxu0
      %2655 = vmatprep.mubr.bf16.mxu0 0
      %2656 = vmatmul.mubr.bf16.gmra.mrb[0].mxu0 %v2498
      %v2657 = vpop.f32.mrb[0].mxu0
      %v2658 = vadd.f32 0.0, %v2657
      %v2659 = vpop.f32.mrb[0].mxu0
      %v2660 = vpop.f32.mrb[0].mxu0
      %v2661 = vadd.f32 0.0, %v2660
      %v2662 = vpop.f32.mrb[0].mxu0
      %2663 = vdwg.mxu0
      %v2664 = vadd.f32 %v2438, %v2538
      %v2665 = vadd.f32 %v2439, %v2541
      %v2666 = vadd.f32 %v2440, %v2546
      %v2667 = vadd.f32 %v2441, %v2549
      %v2668 = vadd.f32 %v2442, %v2554
      %v2669 = vadd.f32 %v2443, %v2557
      %v2670 = vadd.f32 %v2444, %v2562
      %v2671 = vadd.f32 %v2445, %v2565
      %v2672 = vadd.f32 %v2446, %v2570
      %v2673 = vadd.f32 %v2447, %v2573
      %v2674 = vadd.f32 %v2448, %v2578
      %v2675 = vadd.f32 %v2449, %v2581
      %v2676 = vadd.f32 %v2450, %v2586
      %v2677 = vadd.f32 %v2451, %v2589
      %v2678 = vadd.f32 %v2452, %v2594
      %v2679 = vadd.f32 %v2453, %v2597
      %v2680 = vadd.f32 %v2454, %v2602
      %v2681 = vadd.f32 %v2455, %v2605
      %v2682 = vadd.f32 %v2456, %v2610
      %v2683 = vadd.f32 %v2457, %v2613
      %v2684 = vadd.f32 %v2458, %v2618
      %v2685 = vadd.f32 %v2459, %v2621
      %v2686 = vadd.f32 %v2460, %v2626
      %v2687 = vadd.f32 %v2461, %v2629
      %v2688 = vadd.f32 %v2462, %v2634
      %v2689 = vadd.f32 %v2463, %v2637
      %v2690 = vadd.f32 %v2464, %v2642
      %v2691 = vadd.f32 %v2465, %v2645
      %v2692 = vadd.f32 %v2466, %v2650
      %v2693 = vadd.f32 %v2467, %v2653
      %v2694 = vadd.f32 %v2468, %v2658
      %v2695 = vadd.f32 %v2469, %v2661
      %v2697 = vrot.slane %v250, 5
      %v2698 = vrot.slane %v2697, 4
      %v2699 = vrot.slane %v251, 5
      %v2700 = vsel %vm1221, %v2698, %v2699
      %v2701 = vrot.slane %v2699, 4
      %v2702 = vrot.slane %v252, 5
      %v2703 = vsel %vm1221, %v2701, %v2702
      %v2704 = vunpack.c.l.b16 %v2700
      %v2705 = vunpack.c.l.b16 %v2703
      %v2706 = vpack.c.b16 %v2705, %v2704
      %v2708 = vsel %vm697, %v2706, 0
      %v2711 = vsel %vm746, %v261, 0
      %2713 = vmatprep.subr.bf16.mxu0 0
      %2714 = vmatpush1.bf16.msra.mxu0 %v2711
      %2715 = vmatprep.subr.bf16.mxu0 0
      %2716 = vmatpush1.bf16.msra.mxu0 0
      %2717 = vmatprep.subr.bf16.mxu0 0
      %2718 = vmatpush1.bf16.msra.mxu0 0
      %2719 = vmatprep.subr.bf16.mxu0 0
      %2720 = vmatpush1.bf16.msra.mxu0 0
      %2721 = vmatprep.subr.bf16.mxu0 0
      %2722 = vmatpush1.bf16.msra.mxu0 0
      %2723 = vmatprep.subr.bf16.mxu0 0
      %2724 = vmatpush1.bf16.msra.mxu0 0
      %2725 = vmatprep.subr.bf16.mxu0 0
      %2726 = vmatpush1.bf16.msra.mxu0 0
      %2727 = vmatprep.subr.bf16.mxu0 0
      %2728 = vmatpush1.bf16.msra.mxu0 0
      %2729 = vmatprep.subr.bf16.mxu0 0
      %2730 = vmatpush1.bf16.msra.mxu0 0
      %2731 = vmatprep.subr.bf16.mxu0 0
      %2732 = vmatpush1.bf16.msra.mxu0 0
      %2733 = vmatprep.subr.bf16.mxu0 0
      %2734 = vmatpush1.bf16.msra.mxu0 0
      %2735 = vmatprep.subr.bf16.mxu0 0
      %2736 = vmatpush1.bf16.msra.mxu0 0
      %2737 = vmatprep.subr.bf16.mxu0 0
      %2738 = vmatpush1.bf16.msra.mxu0 0
      %2739 = vmatprep.subr.bf16.mxu0 0
      %2740 = vmatpush1.bf16.msra.mxu0 0
      %2741 = vmatprep.subr.bf16.mxu0 0
      %2742 = vmatpush1.bf16.msra.mxu0 0
      %2743 = vmatprep.subr.bf16.mxu0 0
      %2744 = vmatpush1.bf16.msra.mxu0 0
      %2745 = vmatprep.mubr.bf16.mxu0 0
      %2746 = vmatmul.mubr.bf16.gmra.mrb[0].mxu0 %v1389
      %v2747 = vpop.f32.mrb[0].mxu0
      %v2748 = vadd.f32 0.0, %v2747
      %v2749 = vpop.f32.mrb[0].mxu0
      %v2750 = vpop.f32.mrb[0].mxu0
      %v2751 = vadd.f32 0.0, %v2750
      %v2752 = vpop.f32.mrb[0].mxu0
      %2753 = vmatprep.mubr.bf16.mxu0 0
      %2754 = vmatmul.mubr.bf16.gmra.mrb[0].mxu0 %v1392
      %v2755 = vpop.f32.mrb[0].mxu0
      %v2756 = vadd.f32 0.0, %v2755
      %v2757 = vpop.f32.mrb[0].mxu0
      %v2758 = vpop.f32.mrb[0].mxu0
      %v2759 = vadd.f32 0.0, %v2758
      %v2760 = vpop.f32.mrb[0].mxu0
      %2761 = vmatprep.mubr.bf16.mxu0 0
      %2762 = vmatmul.mubr.bf16.gmra.mrb[0].mxu0 %v1395
      %v2763 = vpop.f32.mrb[0].mxu0
      %v2764 = vadd.f32 0.0, %v2763
      %v2765 = vpop.f32.mrb[0].mxu0
      %v2766 = vpop.f32.mrb[0].mxu0
      %v2767 = vadd.f32 0.0, %v2766
      %v2768 = vpop.f32.mrb[0].mxu0
      %2769 = vmatprep.mubr.bf16.mxu0 0
      %2770 = vmatmul.mubr.bf16.gmra.mrb[0].mxu0 %v1398
      %v2771 = vpop.f32.mrb[0].mxu0
      %v2772 = vadd.f32 0.0, %v2771
      %v2773 = vpop.f32.mrb[0].mxu0
      %v2774 = vpop.f32.mrb[0].mxu0
      %v2775 = vadd.f32 0.0, %v2774
      %v2776 = vpop.f32.mrb[0].mxu0
      %2777 = vmatprep.mubr.bf16.mxu0 0
      %2778 = vmatmul.mubr.bf16.gmra.mrb[0].mxu0 %v1401
      %v2779 = vpop.f32.mrb[0].mxu0
      %v2780 = vadd.f32 0.0, %v2779
      %v2781 = vpop.f32.mrb[0].mxu0
      %v2782 = vpop.f32.mrb[0].mxu0
      %v2783 = vadd.f32 0.0, %v2782
      %v2784 = vpop.f32.mrb[0].mxu0
      %2785 = vmatprep.mubr.bf16.mxu0 0
      %2786 = vmatmul.mubr.bf16.gmra.mrb[0].mxu0 %v1404
      %v2787 = vpop.f32.mrb[0].mxu0
      %v2788 = vadd.f32 0.0, %v2787
      %v2789 = vpop.f32.mrb[0].mxu0
      %v2790 = vpop.f32.mrb[0].mxu0
      %v2791 = vadd.f32 0.0, %v2790
      %v2792 = vpop.f32.mrb[0].mxu0
      %2793 = vmatprep.mubr.bf16.mxu0 0
      %2794 = vmatmul.mubr.bf16.gmra.mrb[0].mxu0 %v1407
      %v2795 = vpop.f32.mrb[0].mxu0
      %v2796 = vadd.f32 0.0, %v2795
      %v2797 = vpop.f32.mrb[0].mxu0
      %v2798 = vpop.f32.mrb[0].mxu0
      %v2799 = vadd.f32 0.0, %v2798
      %v2800 = vpop.f32.mrb[0].mxu0
      %2801 = vmatprep.mubr.bf16.mxu0 0
      %2802 = vmatmul.mubr.bf16.gmra.mrb[0].mxu0 %v1410
      %v2803 = vpop.f32.mrb[0].mxu0
      %v2804 = vadd.f32 0.0, %v2803
      %v2805 = vpop.f32.mrb[0].mxu0
      %v2806 = vpop.f32.mrb[0].mxu0
      %v2807 = vadd.f32 0.0, %v2806
      %v2808 = vpop.f32.mrb[0].mxu0
      %2809 = vmatprep.mubr.bf16.mxu0 0
      %2810 = vmatmul.mubr.bf16.gmra.mrb[0].mxu0 %v1413
      %v2811 = vpop.f32.mrb[0].mxu0
      %v2812 = vadd.f32 0.0, %v2811
      %v2813 = vpop.f32.mrb[0].mxu0
      %v2814 = vpop.f32.mrb[0].mxu0
      %v2815 = vadd.f32 0.0, %v2814
      %v2816 = vpop.f32.mrb[0].mxu0
      %2817 = vmatprep.mubr.bf16.mxu0 0
      %2818 = vmatmul.mubr.bf16.gmra.mrb[0].mxu0 %v1416
      %v2819 = vpop.f32.mrb[0].mxu0
      %v2820 = vadd.f32 0.0, %v2819
      %v2821 = vpop.f32.mrb[0].mxu0
      %v2822 = vpop.f32.mrb[0].mxu0
      %v2823 = vadd.f32 0.0, %v2822
      %v2824 = vpop.f32.mrb[0].mxu0
      %2825 = vmatprep.mubr.bf16.mxu0 0
      %2826 = vmatmul.mubr.bf16.gmra.mrb[0].mxu0 %v1419
      %v2827 = vpop.f32.mrb[0].mxu0
      %v2828 = vadd.f32 0.0, %v2827
      %v2829 = vpop.f32.mrb[0].mxu0
      %v2830 = vpop.f32.mrb[0].mxu0
      %v2831 = vadd.f32 0.0, %v2830
      %v2832 = vpop.f32.mrb[0].mxu0
      %2833 = vmatprep.mubr.bf16.mxu0 0
      %2834 = vmatmul.mubr.bf16.gmra.mrb[0].mxu0 %v1422
      %v2835 = vpop.f32.mrb[0].mxu0
      %v2836 = vadd.f32 0.0, %v2835
      %v2837 = vpop.f32.mrb[0].mxu0
      %v2838 = vpop.f32.mrb[0].mxu0
      %v2839 = vadd.f32 0.0, %v2838
      %v2840 = vpop.f32.mrb[0].mxu0
      %2841 = vmatprep.mubr.bf16.mxu0 0
      %2842 = vmatmul.mubr.bf16.gmra.mrb[0].mxu0 %v1425
      %v2843 = vpop.f32.mrb[0].mxu0
      %v2844 = vadd.f32 0.0, %v2843
      %v2845 = vpop.f32.mrb[0].mxu0
      %v2846 = vpop.f32.mrb[0].mxu0
      %v2847 = vadd.f32 0.0, %v2846
      %v2848 = vpop.f32.mrb[0].mxu0
      %2849 = vmatprep.mubr.bf16.mxu0 0
      %2850 = vmatmul.mubr.bf16.gmra.mrb[0].mxu0 %v1428
      %v2851 = vpop.f32.mrb[0].mxu0
      %v2852 = vadd.f32 0.0, %v2851
      %v2853 = vpop.f32.mrb[0].mxu0
      %v2854 = vpop.f32.mrb[0].mxu0
      %v2855 = vadd.f32 0.0, %v2854
      %v2856 = vpop.f32.mrb[0].mxu0
      %2857 = vmatprep.mubr.bf16.mxu0 0
      %2858 = vmatmul.mubr.bf16.gmra.mrb[0].mxu0 %v2068
      %v2859 = vpop.f32.mrb[0].mxu0
      %v2860 = vadd.f32 0.0, %v2859
      %v2861 = vpop.f32.mrb[0].mxu0
      %v2862 = vpop.f32.mrb[0].mxu0
      %v2863 = vadd.f32 0.0, %v2862
      %v2864 = vpop.f32.mrb[0].mxu0
      %2865 = vmatprep.mubr.bf16.mxu0 0
      %2866 = vmatmul.mubr.bf16.gmra.mrb[0].mxu0 %v2708
      %v2867 = vpop.f32.mrb[0].mxu0
      %v2868 = vadd.f32 0.0, %v2867
      %v2869 = vpop.f32.mrb[0].mxu0
      %v2870 = vpop.f32.mrb[0].mxu0
      %v2871 = vadd.f32 0.0, %v2870
      %v2872 = vpop.f32.mrb[0].mxu0
      %2873 = vdwg.mxu0
      %v2874 = vadd.f32 %v2664, %v2748
      %v2875 = vadd.f32 %v2665, %v2751
      %v2876 = vadd.f32 %v2666, %v2756
      %v2877 = vadd.f32 %v2667, %v2759
      %v2878 = vadd.f32 %v2668, %v2764
      %v2879 = vadd.f32 %v2669, %v2767
      %v2880 = vadd.f32 %v2670, %v2772
      %v2881 = vadd.f32 %v2671, %v2775
      %v2882 = vadd.f32 %v2672, %v2780
      %v2883 = vadd.f32 %v2673, %v2783
      %v2884 = vadd.f32 %v2674, %v2788
      %v2885 = vadd.f32 %v2675, %v2791
      %v2886 = vadd.f32 %v2676, %v2796
      %v2887 = vadd.f32 %v2677, %v2799
      %v2888 = vadd.f32 %v2678, %v2804
      %v2889 = vadd.f32 %v2679, %v2807
      %v2890 = vadd.f32 %v2680, %v2812
      %v2891 = vadd.f32 %v2681, %v2815
      %v2892 = vadd.f32 %v2682, %v2820
      %v2893 = vadd.f32 %v2683, %v2823
      %v2894 = vadd.f32 %v2684, %v2828
      %v2895 = vadd.f32 %v2685, %v2831
      %v2896 = vadd.f32 %v2686, %v2836
      %v2897 = vadd.f32 %v2687, %v2839
      %v2898 = vadd.f32 %v2688, %v2844
      %v2899 = vadd.f32 %v2689, %v2847
      %v2900 = vadd.f32 %v2690, %v2852
      %v2901 = vadd.f32 %v2691, %v2855
      %v2902 = vadd.f32 %v2692, %v2860
      %v2903 = vadd.f32 %v2693, %v2863
      %v2904 = vadd.f32 %v2694, %v2868
      %v2905 = vadd.f32 %v2695, %v2871
      %v2906 = vld [vmem:[%s2] sm:$0x1]
      %v2908 = vlaneseq
      %v2909 = vshrl.u32 %v2908, 7
      %v2910 = vsub.s32 0, %v2909
      %v2911 = vrot.slane %v2906, %v2910
      %v2913 = vmul.f32 %v2874, %v2911
      %v2914 = vmul.f32 %v2875, %v2911
      %v2915 = vmul.f32 %v2876, %v2911
      %v2916 = vmul.f32 %v2877, %v2911
      %v2917 = vmul.f32 %v2878, %v2911
      %v2918 = vmul.f32 %v2879, %v2911
      %v2919 = vmul.f32 %v2880, %v2911
      %v2920 = vmul.f32 %v2881, %v2911
      %v2921 = vmul.f32 %v2882, %v2911
      %v2922 = vmul.f32 %v2883, %v2911
      %v2923 = vmul.f32 %v2884, %v2911
      %v2924 = vmul.f32 %v2885, %v2911
      %v2925 = vmul.f32 %v2886, %v2911
      %v2926 = vmul.f32 %v2887, %v2911
      %v2927 = vmul.f32 %v2888, %v2911
      %v2928 = vmul.f32 %v2889, %v2911
      %v2929 = vmul.f32 %v2890, %v2911
      %v2930 = vmul.f32 %v2891, %v2911
      %v2931 = vmul.f32 %v2892, %v2911
      %v2932 = vmul.f32 %v2893, %v2911
      %v2933 = vmul.f32 %v2894, %v2911
      %v2934 = vmul.f32 %v2895, %v2911
      %v2935 = vmul.f32 %v2896, %v2911
      %v2936 = vmul.f32 %v2897, %v2911
      %v2937 = vmul.f32 %v2898, %v2911
      %v2938 = vmul.f32 %v2899, %v2911
      %v2939 = vmul.f32 %v2900, %v2911
      %v2940 = vmul.f32 %v2901, %v2911
      %v2941 = vmul.f32 %v2902, %v2911
      %v2942 = vmul.f32 %v2903, %v2911
      %v2943 = vmul.f32 %v2904, %v2911
      %v2944 = vmul.f32 %v2905, %v2911
      %v2945 = vld [vmem:[%s3] sm:$0x1]
      %v2947 = vlaneseq
      %v2948 = vshrl.u32 %v2947, 7
      %v2949 = vsub.s32 0, %v2948
      %v2950 = vrot.slane %v2945, %v2949
      %v2952 = vadd.f32 %v2913, %v2950
      %v2953 = vadd.f32 %v2914, %v2950
      %v2954 = vadd.f32 %v2915, %v2950
      %v2955 = vadd.f32 %v2916, %v2950
      %v2956 = vadd.f32 %v2917, %v2950
      %v2957 = vadd.f32 %v2918, %v2950
      %v2958 = vadd.f32 %v2919, %v2950
      %v2959 = vadd.f32 %v2920, %v2950
      %v2960 = vadd.f32 %v2921, %v2950
      %v2961 = vadd.f32 %v2922, %v2950
      %v2962 = vadd.f32 %v2923, %v2950
      %v2963 = vadd.f32 %v2924, %v2950
      %v2964 = vadd.f32 %v2925, %v2950
      %v2965 = vadd.f32 %v2926, %v2950
      %v2966 = vadd.f32 %v2927, %v2950
      %v2967 = vadd.f32 %v2928, %v2950
      %v2968 = vadd.f32 %v2929, %v2950
      %v2969 = vadd.f32 %v2930, %v2950
      %v2970 = vadd.f32 %v2931, %v2950
      %v2971 = vadd.f32 %v2932, %v2950
      %v2972 = vadd.f32 %v2933, %v2950
      %v2973 = vadd.f32 %v2934, %v2950
      %v2974 = vadd.f32 %v2935, %v2950
      %v2975 = vadd.f32 %v2936, %v2950
      %v2976 = vadd.f32 %v2937, %v2950
      %v2977 = vadd.f32 %v2938, %v2950
      %v2978 = vadd.f32 %v2939, %v2950
      %v2979 = vadd.f32 %v2940, %v2950
      %v2980 = vadd.f32 %v2941, %v2950
      %v2981 = vadd.f32 %v2942, %v2950
      %v2982 = vadd.f32 %v2943, %v2950
      %v2983 = vadd.f32 %v2944, %v2950
      %v2984 = vmax.f32 %v2952, 0.0
      %v2985 = vmax.f32 %v2953, 0.0
      %v2986 = vmax.f32 %v2954, 0.0
      %v2987 = vmax.f32 %v2955, 0.0
      %v2988 = vmax.f32 %v2956, 0.0
      %v2989 = vmax.f32 %v2957, 0.0
      %v2990 = vmax.f32 %v2958, 0.0
      %v2991 = vmax.f32 %v2959, 0.0
      %v2992 = vmax.f32 %v2960, 0.0
      %v2993 = vmax.f32 %v2961, 0.0
      %v2994 = vmax.f32 %v2962, 0.0
      %v2995 = vmax.f32 %v2963, 0.0
      %v2996 = vmax.f32 %v2964, 0.0
      %v2997 = vmax.f32 %v2965, 0.0
      %v2998 = vmax.f32 %v2966, 0.0
      %v2999 = vmax.f32 %v2967, 0.0
      %v3000 = vmax.f32 %v2968, 0.0
      %v3001 = vmax.f32 %v2969, 0.0
      %v3002 = vmax.f32 %v2970, 0.0
      %v3003 = vmax.f32 %v2971, 0.0
      %v3004 = vmax.f32 %v2972, 0.0
      %v3005 = vmax.f32 %v2973, 0.0
      %v3006 = vmax.f32 %v2974, 0.0
      %v3007 = vmax.f32 %v2975, 0.0
      %v3008 = vmax.f32 %v2976, 0.0
      %v3009 = vmax.f32 %v2977, 0.0
      %v3010 = vmax.f32 %v2978, 0.0
      %v3011 = vmax.f32 %v2979, 0.0
      %v3012 = vmax.f32 %v2980, 0.0
      %v3013 = vmax.f32 %v2981, 0.0
      %v3014 = vmax.f32 %v2982, 0.0
      %v3015 = vmax.f32 %v2983, 0.0
      %v3016 = vpack.c.bf16 %v2985, %v2984
      %v3017 = vpack.c.bf16 %v2987, %v2986
      %v3018 = vpack.c.bf16 %v2989, %v2988
      %v3019 = vpack.c.bf16 %v2991, %v2990
      %v3020 = vpack.c.bf16 %v2993, %v2992
      %v3021 = vpack.c.bf16 %v2995, %v2994
      %v3022 = vpack.c.bf16 %v2997, %v2996
      %v3023 = vpack.c.bf16 %v2999, %v2998
      %v3024 = vpack.c.bf16 %v3001, %v3000
      %v3025 = vpack.c.bf16 %v3003, %v3002
      %v3026 = vpack.c.bf16 %v3005, %v3004
      %v3027 = vpack.c.bf16 %v3007, %v3006
      %v3028 = vpack.c.bf16 %v3009, %v3008
      %v3029 = vpack.c.bf16 %v3011, %v3010
      %v3030 = vpack.c.bf16 %v3013, %v3012
      %v3031 = vpack.c.bf16 %v3015, %v3014
      %v3048 = vunpack.c.l.b16 %v3016
      %v3049 = vunpack.c.h.b16 %v3016
      %v3050 = vunpack.c.l.b16 %v3017
      %v3051 = vunpack.c.h.b16 %v3017
      %v3052 = vunpack.c.l.b16 %v3018
      %v3053 = vunpack.c.h.b16 %v3018
      %v3054 = vunpack.c.l.b16 %v3019
      %v3055 = vunpack.c.h.b16 %v3019
      %v3056 = vunpack.c.l.b16 %v3020
      %v3057 = vunpack.c.h.b16 %v3020
      %v3058 = vunpack.c.l.b16 %v3021
      %v3059 = vunpack.c.h.b16 %v3021
      %v3060 = vunpack.c.l.b16 %v3022
      %v3061 = vunpack.c.h.b16 %v3022
      %v3062 = vunpack.c.l.b16 %v3023
      %v3063 = vunpack.c.h.b16 %v3023
      %v3064 = vunpack.c.l.b16 %v3024
      %v3065 = vunpack.c.h.b16 %v3024
      %v3066 = vunpack.c.l.b16 %v3025
      %v3067 = vunpack.c.h.b16 %v3025
      %v3068 = vunpack.c.l.b16 %v3026
      %v3069 = vunpack.c.h.b16 %v3026
      %v3070 = vunpack.c.l.b16 %v3027
      %v3071 = vunpack.c.h.b16 %v3027
      %v3072 = vunpack.c.l.b16 %v3028
      %v3073 = vunpack.c.h.b16 %v3028
      %v3074 = vunpack.c.l.b16 %v3029
      %v3075 = vunpack.c.h.b16 %v3029
      %v3076 = vunpack.c.l.b16 %v3030
      %v3077 = vunpack.c.h.b16 %v3030
      %v3078 = vunpack.c.l.b16 %v3031
      %v3079 = vunpack.c.h.b16 %v3031
      %v3080 = vpack.c.b16 %v3048, %v3048
      %v3081 = vpack.c.b16 %v3049, %v3049
      %v3082 = vpack.c.b16 %v3050, %v3050
      %v3083 = vpack.c.b16 %v3051, %v3051
      %v3084 = vpack.c.b16 %v3052, %v3052
      %v3085 = vpack.c.b16 %v3053, %v3053
      %v3086 = vpack.c.b16 %v3054, %v3054
      %v3087 = vpack.c.b16 %v3055, %v3055
      %v3088 = vpack.c.b16 %v3056, %v3056
      %v3089 = vpack.c.b16 %v3057, %v3057
      %v3090 = vpack.c.b16 %v3058, %v3058
      %v3091 = vpack.c.b16 %v3059, %v3059
      %v3092 = vpack.c.b16 %v3060, %v3060
      %v3093 = vpack.c.b16 %v3061, %v3061
      %v3094 = vpack.c.b16 %v3062, %v3062
      %v3095 = vpack.c.b16 %v3063, %v3063
      %v3096 = vpack.c.b16 %v3064, %v3064
      %v3097 = vpack.c.b16 %v3065, %v3065
      %v3098 = vpack.c.b16 %v3066, %v3066
      %v3099 = vpack.c.b16 %v3067, %v3067
      %v3100 = vpack.c.b16 %v3068, %v3068
      %v3101 = vpack.c.b16 %v3069, %v3069
      %v3102 = vpack.c.b16 %v3070, %v3070
      %v3103 = vpack.c.b16 %v3071, %v3071
      %v3104 = vpack.c.b16 %v3072, %v3072
      %v3105 = vpack.c.b16 %v3073, %v3073
      %v3106 = vpack.c.b16 %v3074, %v3074
      %v3107 = vpack.c.b16 %v3075, %v3075
      %v3108 = vpack.c.b16 %v3076, %v3076
      %v3109 = vpack.c.b16 %v3077, %v3077
      %v3110 = vpack.c.b16 %v3078, %v3078
      %v3111 = vpack.c.b16 %v3079, %v3079
      %vm3144 = vcmask 60416
      %3145 = vst.msk [vmem:[%s197] sm:$0xf] %vm3144, %v3080
      %3146 = vst.msk [vmem:[%s197 + $0x4] sm:$0xf] %vm3144, %v3081
      %3147 = vst.msk [vmem:[%s197 + $0x8] sm:$0xf] %vm3144, %v3082
      %3148 = vst.msk [vmem:[%s197 + $0xc] sm:$0xf] %vm3144, %v3083
      %3149 = vst.msk [vmem:[%s197 + $0x10] sm:$0xf] %vm3144, %v3084
      %3150 = vst.msk [vmem:[%s197 + $0x14] sm:$0xf] %vm3144, %v3085
      %3151 = vst.msk [vmem:[%s197 + $0x18] sm:$0xf] %vm3144, %v3086
      %3152 = vst.msk [vmem:[%s197 + $0x1c] sm:$0xf] %vm3144, %v3087
      %3153 = vst.msk [vmem:[%s197 + $0x20] sm:$0xf] %vm3144, %v3088
      %3154 = vst.msk [vmem:[%s197 + $0x24] sm:$0xf] %vm3144, %v3089
      %3155 = vst.msk [vmem:[%s197 + $0x28] sm:$0xf] %vm3144, %v3090
      %3156 = vst.msk [vmem:[%s197 + $0x2c] sm:$0xf] %vm3144, %v3091
      %3157 = vst.msk [vmem:[%s197 + $0x30] sm:$0xf] %vm3144, %v3092
      %3158 = vst.msk [vmem:[%s197 + $0x34] sm:$0xf] %vm3144, %v3093
      %3159 = vst.msk [vmem:[%s197 + $0x38] sm:$0xf] %vm3144, %v3094
      %3160 = vst.msk [vmem:[%s197 + $0x3c] sm:$0xf] %vm3144, %v3095
      %3161 = vst.msk [vmem:[%s197 + $0x40] sm:$0xf] %vm3144, %v3096
      %3162 = vst.msk [vmem:[%s197 + $0x44] sm:$0xf] %vm3144, %v3097
      %3163 = vst.msk [vmem:[%s197 + $0x48] sm:$0xf] %vm3144, %v3098
      %3164 = vst.msk [vmem:[%s197 + $0x4c] sm:$0xf] %vm3144, %v3099
      %3165 = vst.msk [vmem:[%s197 + $0x50] sm:$0xf] %vm3144, %v3100
      %3166 = vst.msk [vmem:[%s197 + $0x54] sm:$0xf] %vm3144, %v3101
      %3167 = vst.msk [vmem:[%s197 + $0x58] sm:$0xf] %vm3144, %v3102
      %3168 = vst.msk [vmem:[%s197 + $0x5c] sm:$0xf] %vm3144, %v3103
      %3169 = vst.msk [vmem:[%s197 + $0x60] sm:$0xf] %vm3144, %v3104
      %3170 = vst.msk [vmem:[%s197 + $0x64] sm:$0xf] %vm3144, %v3105
      %3171 = vst.msk [vmem:[%s197 + $0x68] sm:$0xf] %vm3144, %v3106
      %3172 = vst.msk [vmem:[%s197 + $0x6c] sm:$0xf] %vm3144, %v3107
      %3173 = vst.msk [vmem:[%s197 + $0x70] sm:$0xf] %vm3144, %v3108
      %3174 = vst.msk [vmem:[%s197 + $0x74] sm:$0xf] %vm3144, %v3109
      %3175 = vst.msk [vmem:[%s197 + $0x78] sm:$0xf] %vm3144, %v3110
      %3176 = vst.msk [vmem:[%s197 + $0x7c] sm:$0xf] %vm3144, %v3111
      %p3177 = scmp.lt.s32.totalorder %s15, 1
      %s3178 = scalar_select %p3177, %s15, 1
      %s3179 = smul.addr %s3178, 32
      %s3180 = smul.addr %s3179, 4
      %s3181 = scalar_lea.vmem %s4, %s3180
      // Predicated region
      $region37: #{_lambda_.5} parent=35 // pred_check
        %p3182 = pneg %p122
      $region38: #{_lambda_.5} parent=35 // pred_check_branch
        %3184 = sbr.rel (%p3182) target = $region40
      $region39: #{_lambda_.5} parent=35 // pred_region
        _
      $region40: #{_lambda_.5} parent=35 // pred_fallthru
        _
    $region36: #{_lambda_.5} parent=5 // pred_fallthru
      _
    %p3185 = scmp.le.s32.totalorder 2, %s10
    // Predicated region
    $region41: #{_lambda_.5} parent=5 // pred_check
      %p3186 = pneg %p3185
    $region42: #{_lambda_.5} parent=5 // pred_check_branch
      %3188 = sbr.rel (%p3186) target = $region44
    $region43: #{_lambda_.5} parent=5 // pred_region
      %s3189 = ssub.s32 %s10, 2
      // Predicated region
      $region45: #{_lambda_.5} parent=43 // pred_check
        %p3190 = pneg %p128
      $region46: #{_lambda_.5} parent=43 // pred_check_branch
        %3192 = sbr.rel (%p3190) target = $region48
      $region47: #{_lambda_.5} parent=43 // pred_region
        %p3193 = scmp.lt.s32.totalorder %s16, 1
        %s3194 = scalar_select %p3193, %s16, 1
        %s3195 = smul.addr %s3194, 32
        %s3196 = smul.addr %s3195, 4
        %s3197 = scalar_lea.vmem %s4, %s3196
      $region48: #{_lambda_.5} parent=43 // pred_fallthru
        _
    $region44: #{_lambda_.5} parent=5 // pred_fallthru
      _
  $region6: #{_lambda_.5} parent=0 // loop_footer
    %s14 = sadd.s32 1, %s10
  $region7: #{_lambda_.5} parent=0 // loop_footer_branch
    %9 = sbr.rel target = $region3
  $region8: #{_lambda_.5} parent=0 // loop_exit
    _

</llo_original>
